<compile_context>
chip_gen: v7x
topology: tpu7x:2x2x1
jax: 0.10.0
libtpu: 0.0.40
codegen_flags: <defaults>
</compile_context>

<pallas_src>
import jax
import jax.numpy as jnp
from jax.experimental import pallas as pl
from jax.experimental.pallas import tpu as pltpu

P = 20
D_MODEL = 2 * P          # 40
D_VOCAB = P + 1          # 21
D_MLP = 32
N_CTX = P + 1            # 21
NUM_HEADS = 1
ITERATIONS = 3           # cot iterations
SCALE = float(D_MODEL // NUM_HEADS) ** -0.5

# Lane-dense padded dims.
C_PAD = 128              # d_model 40  -> 128 lanes
M_PAD = 128              # d_mlp   32  -> 128 lanes
V_PAD = 128              # d_vocab 21  -> 128 lanes
EMB_ROWS = 32            # embedding table rows (vocab 21 -> 32)
POS_ROWS = 32            # positional table rows (n_ctx 21 -> 32)


def _pad_to(w, shape):
    out = jnp.zeros(shape, jnp.float32)
    return out.at[tuple(slice(0, d) for d in w.shape)].set(w.astype(jnp.float32))


def _next_pow2(n):
    m = 8
    while m < n:
        m *= 2
    return m


def _pack(raw):
    """Fused / lane-padded kernel operands (layout plumbing, host side)."""
    C = D_MODEL
    Cp, Mp, Vp = C_PAD, M_PAD, V_PAD
    W5, Wo = raw["W5"], raw["W_o"]
    wqkv = jnp.concatenate(
        [_pad_to(W5[i * C:(i + 1) * C].T, (Cp, Cp)) for i in range(5)], axis=1)
    wo2 = jnp.concatenate(
        [_pad_to(Wo[:, 0:C].T, (Cp, Cp)), _pad_to(Wo[:, C:2 * C].T, (Cp, Cp))],
        axis=0)
    return dict(
        we=_pad_to(raw["W_E"].T, (EMB_ROWS, Cp)),
        wqkv=wqkv,                                   # (Cp, 5*Cp)  [a|b|c|v1|v2]
        wo=wo2,                                      # (2*Cp, Cp)  [Wo1^T; Wo2^T]
        bo=_pad_to(raw["b_o"].reshape(1, -1), (1, Cp)),
        win=_pad_to(raw["W_in"].T, (Cp, Mp)),
        b_in=_pad_to(raw["b_in"].reshape(1, -1), (1, Mp)),
        wout=_pad_to(raw["W_out"].T, (Mp, Cp)),
        b_out=_pad_to(raw["b_out"].reshape(1, -1), (1, Cp)),
        wu=_pad_to(raw["W_U"], (Cp, Vp)),
    )


def cot_forward(tokens, raw_params, iterations=ITERATIONS):
    """Full COT forward in a single fused pallas_call (one grid step)."""
    B, S = tokens.shape
    assert 1 <= S <= N_CTX
    npad = _next_pow2(S + iterations)     # per-batch padded sequence length (pow2, >=8)
    assert npad <= POS_ROWS
    Bn = B * npad
    shift = npad.bit_length() - 1
    Cp, Mp, Vp = C_PAD, M_PAD, V_PAD
    f32 = jnp.float32

    pk = _pack(raw_params)
    # S-dependent small operands (tiny XLA ops outside the kernel).
    tok_pad = jnp.full((B, npad), -1, jnp.int32)
    tok_pad = tok_pad.at[:, :S].set(tokens.astype(jnp.int32)).reshape(Bn, 1)
    wpos = jnp.zeros((npad, Cp), f32).at[:S, :D_MODEL].set(raw_params["W_pos"][:S])

    def kernel(tok_ref, we_ref, wpos_ref, wqkv_ref, wo_ref, bo_ref,
               win_ref, bin_ref, wout_ref, bout_ref, wu_ref,
               logits_ref, x_scr, kv_scr):

        def nt(u, v):       # u @ v.T on the MXU, no materialized transpose
            return jax.lax.dot_general(u, v, (((1,), (1,)), ((), ())),
                                       preferred_element_type=f32)

        def mm(u, v):
            return jnp.dot(u, v, preferred_element_type=f32)

        # ---- embedding: one-hot matmul (no serialized scalar gathers) ----
        tok = tok_ref[...]                                             # (Bn, 1) int32
        vocab_iota = jax.lax.broadcasted_iota(jnp.int32, (Bn, EMB_ROWS), 1)
        onehot = (jnp.broadcast_to(tok, (Bn, EMB_ROWS)) == vocab_iota).astype(f32)
        pos_all = jnp.concatenate([wpos_ref[...]] * B, axis=0)         # (Bn, Cp)
        x0 = mm(onehot, we_ref[...]) + pos_all                         # (Bn, Cp)
        x_scr[...] = x0

        # ---- static-prefix b/c/v1/v2 projections, cached across iterations ----
        kv_scr[...] = mm(x0, wqkv_ref[:, Cp:5 * Cp])                   # (Bn, 4*Cp)

        # `cur` holds the one row per batch (position L-1) whose attention/MLP
        # output is consumed each iteration.
        cur = jnp.concatenate(
            [x0[b * npad + S - 1:b * npad + S, :] for b in range(B)], axis=0)  # (B, Cp)

        # compile-time batch / position planes for the block-diagonal masks
        colY = jax.lax.broadcasted_iota(jnp.int32, (Bn, Bn), 1)
        rowY = jax.lax.broadcasted_iota(jnp.int32, (Bn, Bn), 0)
        sameb_Y = (rowY >> shift) == (colY >> shift)
        posY = colY & (npad - 1)
        colq = jax.lax.broadcasted_iota(jnp.int32, (B, Bn), 1)
        rowq = jax.lax.broadcasted_iota(jnp.int32, (B, Bn), 0)
        sameb_q = rowq == (colq >> shift)
        posq = colq & (npad - 1)

        # ---- chain-of-thought iterations (unrolled; L static per iteration) ----
        for it in range(iterations):
            L = S + it

            # project only the current last rows against the fused
            # [Wa|Wb|Wc|Wv1|Wv2] weight and scatter b/c/v1/v2 into the cache.
            projq = mm(cur, wqkv_ref[...])                             # (B, 5*Cp)
            a_q = projq[:, 0:Cp]
            for b in range(B):
                r = b * npad + L - 1
                kv_scr[r:r + 1, :] = projq[b:b + 1, Cp:5 * Cp]

            b_all = kv_scr[:, 0 * Cp:1 * Cp]
            c_all = kv_scr[:, 1 * Cp:2 * Cp]
            v1_all = kv_scr[:, 2 * Cp:3 * Cp]
            v2_all = kv_scr[:, 3 * Cp:4 * Cp]

            mY = sameb_Y & (posY < L)
            mq = sameb_q & (posq < L)

            # TODO(synk): attn_drop = nn.Dropout(0.3) is stochastic in train mode;
            #             modeled here as eval-mode identity.
            # exp(scores*scale) with no max-subtraction matches the reference math.
            X_q = jnp.where(mq, jnp.exp(nt(a_q, b_all) * SCALE), 0.0)   # (B, Bn)
            ZT_q = jnp.exp(nt(a_q, c_all) * SCALE)                      # (B, Bn)
            Y = jnp.where(mY, jnp.exp(nt(b_all, c_all) * SCALE), 0.0)   # (Bn, Bn)

            YZt_q = nt(ZT_q, Y)                                         # (Y@Z)^T rows
            W1_q = X_q * YZt_q
            XY_q = mm(X_q, Y)                                           # (B, Bn)
            W2_q = XY_q * ZT_q                                          # masked via XY_q
            num1 = mm(W1_q, v1_all)                                     # (B, Cp)
            num2 = mm(W2_q, v2_all)                                     # (B, Cp)
            den = jnp.sum(W2_q, axis=-1, keepdims=True)                 # (B, 1) on XLU
            inv = pl.reciprocal(den, approx=True)                       # EUP

            attn = mm(jnp.concatenate([num1 * inv, num2 * inv], axis=-1),
                      wo_ref[...]) + bo_ref[...]                        # (B, Cp), K=256
            y_q = attn + cur                                            # residual (LN = identity)
            h_q = jnp.maximum(mm(y_q, win_ref[...]) + bin_ref[...], 0.0)
            y2_q = mm(h_q, wout_ref[...]) + bout_ref[...]               # (B, Cp)

            for b in range(B):
                r = b * npad + L
                x_scr[r:r + 1, :] = y2_q[b:b + 1, :]                    # append CoT token
            cur = y2_q

        # ---- unembed: one lane-dense (Bn, Vp) matmul + unmasked store ----
        logits_ref[...] = mm(x_scr[...], wu_ref[...])

    def full(shape):
        return pl.BlockSpec(shape, lambda i: (0,) * len(shape))

    logits_pad = pl.pallas_call(
        kernel,
        out_shape=jax.ShapeDtypeStruct((Bn, Vp), f32),
        grid=(1,),
        in_specs=[
            full((Bn, 1)),            # token ids (int32, -1 for padding rows)
            full((EMB_ROWS, Cp)),     # W_E^T
            full((npad, Cp)),         # W_pos rows < S, zero elsewhere
            full((Cp, 5 * Cp)),       # fused [Wa|Wb|Wc|Wv1|Wv2]^T
            full((2 * Cp, Cp)),       # fused [Wo1^T ; Wo2^T]
            full((1, Cp)),            # b_o
            full((Cp, Mp)),           # W_in^T
            full((1, Mp)),            # b_in
            full((Mp, Cp)),           # W_out^T
            full((1, Cp)),            # b_out
            full((Cp, Vp)),           # W_U
        ],
        out_specs=full((Bn, Vp)),
        scratch_shapes=[pltpu.VMEM((Bn, Cp), f32),       # residual stream x
                        pltpu.VMEM((Bn, 4 * Cp), f32)],  # cached b/c/v1/v2 projections
    )(tok_pad, pk["we"], wpos, pk["wqkv"], pk["wo"], pk["bo"],
      pk["win"], pk["b_in"], pk["wout"], pk["b_out"], pk["wu"])

    return logits_pad.reshape(B, npad, Vp)[:, :S + iterations, :D_VOCAB]


def cot_reference(tokens, p, iterations=ITERATIONS):
    """Pure-JAX reference mirroring the PyTorch forward (eval mode, use_ln=False)."""
    C = D_MODEL
    x = jnp.transpose(p["W_E"][:, tokens], (1, 2, 0))            # (B, S, C)
    x = x + p["W_pos"][:x.shape[1]]
    for _ in range(iterations):
        w = x @ p["W5"].T                                        # (B, N, 5C)
        a, b, c, v1, v2 = [w[..., i * C:(i + 1) * C] for i in range(5)]
        X = jnp.exp(jnp.einsum('bid,bjd->bij', a, b) * SCALE)
        Y = jnp.exp(jnp.einsum('bid,bjd->bij', b, c) * SCALE)
        Z = jnp.exp(jnp.einsum('bid,bjd->bij', c, a) * SCALE)    # Z[k,i]
        YZ = jnp.einsum('bjk,bki->bji', Y, Z)
        num1 = jnp.einsum('bij,bji,bjd->bid', X, YZ, v1)
        XY = jnp.einsum('bij,bjk->bik', X, Y)
        num2 = jnp.einsum('bik,bki,bkd->bid', XY, Z, v2)
        den = jnp.einsum('bik,bki->bi', XY, Z)[..., None]
        att = jnp.concatenate([num1 / den, num2 / den], axis=-1) @ p["W_o"].T + p["b_o"]
        y = att + x
        h = jax.nn.relu(y @ p["W_in"].T + p["b_in"])
        mlp_out = h @ p["W_out"].T + p["b_out"]
        x = jnp.concatenate([x, mlp_out[:, -1:, :]], axis=1)
    return x @ p["W_U"]


def init_params(key):
    C, V, M = D_MODEL, D_VOCAB, D_MLP
    ks = jax.random.split(key, 8)
    return dict(
        W_E=jax.random.normal(ks[0], (C, V), jnp.float32) / jnp.sqrt(float(C)),
        W_pos=jax.random.normal(ks[1], (N_CTX, C), jnp.float32) / jnp.sqrt(float(C)),
        W5=jax.random.normal(ks[2], (5 * C, C), jnp.float32) * 0.05,   # attn.w.weight
        W_o=jax.random.normal(ks[3], (C, 2 * C), jnp.float32) * 0.05,  # attn.o.weight
        b_o=jax.random.normal(ks[4], (C,), jnp.float32) * 0.01,        # attn.o.bias
        W_in=jax.random.normal(ks[5], (M, C), jnp.float32) / jnp.sqrt(float(C)),
        b_in=jnp.zeros((M,), jnp.float32),
        W_out=jax.random.normal(ks[6], (C, M), jnp.float32) / jnp.sqrt(float(C)),
        b_out=jnp.zeros((C,), jnp.float32),
        W_U=jax.random.normal(ks[7], (C, V), jnp.float32) / jnp.sqrt(float(V)),
    )


if __name__ == "__main__":
    key = jax.random.PRNGKey(0)
    pkey, tkey = jax.random.split(key)
    params = init_params(pkey)

    B, S = 2, 8                                     # batch=2, seq=8 (<= n_ctx=21)
    tokens = jax.random.randint(tkey, (B, S), 0, D_VOCAB)

    logits = cot_forward(tokens, params, iterations=ITERATIONS)
    jax.block_until_ready(logits)
    assert logits.shape == (B, S + ITERATIONS, D_VOCAB), logits.shape
    assert bool(jnp.all(jnp.isfinite(logits)))

    ref = cot_reference(tokens, params, iterations=ITERATIONS)
    err = float(jnp.max(jnp.abs(logits - ref)))
    assert err < 5e-2, f"max abs diff vs reference: {err}"
    print("KERNEL_OK")
</pallas_src>

<mosaic_0001>
module attributes {stable_mosaic.version = 11 : i64} {
  func.func @kernel(%arg0: i32, %arg1: memref<32x1xi32, #tpu.memory_space<vmem>>, %arg2: memref<32x128xf32, #tpu.memory_space<vmem>>, %arg3: memref<16x128xf32, #tpu.memory_space<vmem>>, %arg4: memref<128x640xf32, #tpu.memory_space<vmem>>, %arg5: memref<256x128xf32, #tpu.memory_space<vmem>>, %arg6: memref<1x128xf32, #tpu.memory_space<vmem>>, %arg7: memref<128x128xf32, #tpu.memory_space<vmem>>, %arg8: memref<1x128xf32, #tpu.memory_space<vmem>>, %arg9: memref<128x128xf32, #tpu.memory_space<vmem>>, %arg10: memref<1x128xf32, #tpu.memory_space<vmem>>, %arg11: memref<128x128xf32, #tpu.memory_space<vmem>>, %arg12: memref<32x128xf32, #tpu.memory_space<vmem>>, %arg13: memref<32x128xf32, #tpu.memory_space<vmem>>, %arg14: memref<32x512xf32, #tpu.memory_space<vmem>>) attributes {dimension_semantics = [#tpu.dimension_semantics<arbitrary>], iteration_bounds = array<i64: 1>, scalar_prefetch = 0 : i64, scratch_operands = 2 : i64, tpu.core_type = #tpu.core_type<tc>, window_params = [{pipeline_mode = #tpu.pipeline_mode<synchronous>, transform_indices = @transform_0, window_bounds = array<i64: 32, 1>}, {pipeline_mode = #tpu.pipeline_mode<synchronous>, transform_indices = @transform_1, window_bounds = array<i64: 32, 128>}, {pipeline_mode = #tpu.pipeline_mode<synchronous>, transform_indices = @transform_2, window_bounds = array<i64: 16, 128>}, {pipeline_mode = #tpu.pipeline_mode<synchronous>, transform_indices = @transform_3, window_bounds = array<i64: 128, 640>}, {pipeline_mode = #tpu.pipeline_mode<synchronous>, transform_indices = @transform_4, window_bounds = array<i64: 256, 128>}, {pipeline_mode = #tpu.pipeline_mode<synchronous>, transform_indices = @transform_5, window_bounds = array<i64: 1, 128>}, {pipeline_mode = #tpu.pipeline_mode<synchronous>, transform_indices = @transform_6, window_bounds = array<i64: 128, 128>}, {pipeline_mode = #tpu.pipeline_mode<synchronous>, transform_indices = @transform_7, window_bounds = array<i64: 1, 128>}, {pipeline_mode = #tpu.pipeline_mode<synchronous>, transform_indices = @transform_8, window_bounds = array<i64: 128, 128>}, {pipeline_mode = #tpu.pipeline_mode<synchronous>, transform_indices = @transform_9, window_bounds = array<i64: 1, 128>}, {pipeline_mode = #tpu.pipeline_mode<synchronous>, transform_indices = @transform_10, window_bounds = array<i64: 128, 128>}, {pipeline_mode = #tpu.pipeline_mode<synchronous>, transform_indices = @transform_11, window_bounds = array<i64: 32, 128>}]} {
    %c0 = arith.constant 0 : index
    %c0_0 = arith.constant 0 : index
    %0 = vector.load %arg1[%c0, %c0_0] : memref<32x1xi32, #tpu.memory_space<vmem>>, vector<32x1xi32>
    %1 = tpu.iota {dimensions = array<i32: 1>} : vector<32x32xi32>
    %2 = vector.shape_cast %0 : vector<32x1xi32> to vector<32x1xi32>
    %3 = vector.broadcast %2 : vector<32x1xi32> to vector<32x32xi32>
    %4 = arith.cmpi eq, %3, %1 : vector<32x32xi32>
    %5 = arith.extui %4 : vector<32x32xi1> to vector<32x32xi32>
    %6 = arith.sitofp %5 : vector<32x32xi32> to vector<32x32xf32>
    %c0_1 = arith.constant 0 : index
    %c0_2 = arith.constant 0 : index
    %7 = vector.load %arg3[%c0_1, %c0_2] : memref<16x128xf32, #tpu.memory_space<vmem>>, vector<16x128xf32>
    %8 = tpu.concatenate %7, %7 in 0 : vector<16x128xf32>, vector<16x128xf32> -> vector<32x128xf32>
    %c0_3 = arith.constant 0 : index
    %c0_4 = arith.constant 0 : index
    %9 = vector.load %arg2[%c0_3, %c0_4] : memref<32x128xf32, #tpu.memory_space<vmem>>, vector<32x128xf32>
    %cst = arith.constant dense<0.000000e+00> : vector<32x128xf32>
    %10 = tpu.matmul %6, %9, %cst {dimension_numbers = #tpu.dot_dimension_numbers<[1], [0], [0], [1], [0, 0, 1, 1], [], []>} : vector<32x32xf32>, vector<32x128xf32>, vector<32x128xf32> -> vector<32x128xf32>
    %11 = arith.addf %10, %8 : vector<32x128xf32>
    %c0_5 = arith.constant 0 : index
    %c0_6 = arith.constant 0 : index
    %12 = vector.load %arg13[%c0_5, %c0_6] : memref<32x128xf32, #tpu.memory_space<vmem>>, vector<32x128xf32>
    tpu.vector_store %arg13[%c0_5, %c0_6], %11 {strides = array<i32>} : memref<32x128xf32, #tpu.memory_space<vmem>>, vector<32x128xf32>,
    %c0_7 = arith.constant 0 : index
    %c128 = arith.constant 128 : index
    %13 = vector.load %arg4[%c0_7, %c128] : memref<128x640xf32, #tpu.memory_space<vmem>>, vector<128x512xf32>
    %cst_8 = arith.constant dense<0.000000e+00> : vector<32x512xf32>
    %14 = tpu.matmul %11, %13, %cst_8 {dimension_numbers = #tpu.dot_dimension_numbers<[1], [0], [0], [1], [0, 0, 1, 1], [], []>} : vector<32x128xf32>, vector<128x512xf32>, vector<32x512xf32> -> vector<32x512xf32>
    %c0_9 = arith.constant 0 : index
    %c0_10 = arith.constant 0 : index
    %15 = vector.load %arg14[%c0_9, %c0_10] : memref<32x512xf32, #tpu.memory_space<vmem>>, vector<32x512xf32>
    tpu.vector_store %arg14[%c0_9, %c0_10], %14 {strides = array<i32>} : memref<32x512xf32, #tpu.memory_space<vmem>>, vector<32x512xf32>,
    %16 = vector.extract_strided_slice %11 {offsets = [7, 0], sizes = [1, 128], strides = [1, 1]} : vector<32x128xf32> to vector<1x128xf32>
    %17 = vector.extract_strided_slice %11 {offsets = [23, 0], sizes = [1, 128], strides = [1, 1]} : vector<32x128xf32> to vector<1x128xf32>
    %18 = tpu.concatenate %16, %17 in 0 : vector<1x128xf32>, vector<1x128xf32> -> vector<2x128xf32>
    %19 = tpu.iota {dimensions = array<i32: 1>} : vector<32x32xi32>
    %20 = tpu.iota {dimensions = array<i32: 0>} : vector<32x32xi32>
    %c4_i32 = arith.constant 4 : i32
    %21 = vector.broadcast %c4_i32 : i32 to vector<32x32xi32>
    %22 = arith.shrsi %20, %21 : vector<32x32xi32>
    %c4_i32_11 = arith.constant 4 : i32
    %23 = vector.broadcast %c4_i32_11 : i32 to vector<32x32xi32>
    %24 = arith.shrsi %19, %23 : vector<32x32xi32>
    %25 = arith.cmpi eq, %22, %24 : vector<32x32xi32>
    %c15_i32 = arith.constant 15 : i32
    %26 = vector.broadcast %c15_i32 : i32 to vector<32x32xi32>
    %27 = arith.andi %19, %26 : vector<32x32xi32>
    %28 = tpu.iota {dimensions = array<i32: 1>} : vector<2x32xi32>
    %29 = tpu.iota {dimensions = array<i32: 0>} : vector<2x32xi32>
    %c4_i32_12 = arith.constant 4 : i32
    %30 = vector.broadcast %c4_i32_12 : i32 to vector<2x32xi32>
    %31 = arith.shrsi %28, %30 : vector<2x32xi32>
    %32 = arith.cmpi eq, %29, %31 : vector<2x32xi32>
    %c15_i32_13 = arith.constant 15 : i32
    %33 = vector.broadcast %c15_i32_13 : i32 to vector<2x32xi32>
    %34 = arith.andi %28, %33 : vector<2x32xi32>
    %c0_14 = arith.constant 0 : index
    %c0_15 = arith.constant 0 : index
    %35 = vector.load %arg4[%c0_14, %c0_15] : memref<128x640xf32, #tpu.memory_space<vmem>>, vector<128x640xf32>
    %cst_16 = arith.constant dense<0.000000e+00> : vector<2x640xf32>
    %36 = tpu.matmul %18, %35, %cst_16 {dimension_numbers = #tpu.dot_dimension_numbers<[1], [0], [0], [1], [0, 0, 1, 1], [], []>} : vector<2x128xf32>, vector<128x640xf32>, vector<2x640xf32> -> vector<2x640xf32>
    %37 = vector.extract_strided_slice %36 {offsets = [0, 0], sizes = [2, 128], strides = [1, 1]} : vector<2x640xf32> to vector<2x128xf32>
    %38 = vector.extract_strided_slice %36 {offsets = [0, 128], sizes = [1, 512], strides = [1, 1]} : vector<2x640xf32> to vector<1x512xf32>
    %c7 = arith.constant 7 : index
    %c0_17 = arith.constant 0 : index
    %39 = vector.load %arg14[%c7, %c0_17] : memref<32x512xf32, #tpu.memory_space<vmem>>, vector<1x512xf32>
    tpu.vector_store %arg14[%c7, %c0_17], %38 {strides = array<i32>} : memref<32x512xf32, #tpu.memory_space<vmem>>, vector<1x512xf32>,
    %40 = vector.extract_strided_slice %36 {offsets = [1, 128], sizes = [1, 512], strides = [1, 1]} : vector<2x640xf32> to vector<1x512xf32>
    %c23 = arith.constant 23 : index
    %c0_18 = arith.constant 0 : index
    %41 = vector.load %arg14[%c23, %c0_18] : memref<32x512xf32, #tpu.memory_space<vmem>>, vector<1x512xf32>
    tpu.vector_store %arg14[%c23, %c0_18], %40 {strides = array<i32>} : memref<32x512xf32, #tpu.memory_space<vmem>>, vector<1x512xf32>,
    %c0_19 = arith.constant 0 : index
    %c0_20 = arith.constant 0 : index
    %42 = vector.load %arg14[%c0_19, %c0_20] : memref<32x512xf32, #tpu.memory_space<vmem>>, vector<32x128xf32>
    %c0_21 = arith.constant 0 : index
    %c128_22 = arith.constant 128 : index
    %43 = vector.load %arg14[%c0_21, %c128_22] : memref<32x512xf32, #tpu.memory_space<vmem>>, vector<32x128xf32>
    %c0_23 = arith.constant 0 : index
    %c256 = arith.constant 256 : index
    %44 = vector.load %arg14[%c0_23, %c256] : memref<32x512xf32, #tpu.memory_space<vmem>>, vector<32x128xf32>
    %c0_24 = arith.constant 0 : index
    %c384 = arith.constant 384 : index
    %45 = vector.load %arg14[%c0_24, %c384] : memref<32x512xf32, #tpu.memory_space<vmem>>, vector<32x128xf32>
    %c8_i32 = arith.constant 8 : i32
    %46 = vector.broadcast %c8_i32 : i32 to vector<32x32xi32>
    %47 = arith.cmpi slt, %27, %46 : vector<32x32xi32>
    %48 = arith.andi %25, %47 : vector<32x32xi1>
    %c8_i32_25 = arith.constant 8 : i32
    %49 = vector.broadcast %c8_i32_25 : i32 to vector<2x32xi32>
    %50 = arith.cmpi slt, %34, %49 : vector<2x32xi32>
    %51 = arith.andi %32, %50 : vector<2x32xi1>
    %cst_26 = arith.constant dense<0.000000e+00> : vector<2x32xf32>
    %52 = tpu.matmul %37, %42, %cst_26 {dimension_numbers = #tpu.dot_dimension_numbers<[1], [1], [0], [0], [0, 0, 1, 0], [], []>} : vector<2x128xf32>, vector<32x128xf32>, vector<2x32xf32> -> vector<2x32xf32>
    %cst_27 = arith.constant 0.158113882 : f32
    %53 = vector.broadcast %cst_27 : f32 to vector<2x32xf32>
    %54 = arith.mulf %52, %53 : vector<2x32xf32>
    %55 = math.exp %54 : vector<2x32xf32>
    %cst_28 = arith.constant 0.000000e+00 : f32
    %56 = vector.broadcast %cst_28 : f32 to vector<2x32xf32>
    %57 = arith.select %51, %55, %56 : vector<2x32xi1>, vector<2x32xf32>
    %cst_29 = arith.constant dense<0.000000e+00> : vector<2x32xf32>
    %58 = tpu.matmul %37, %43, %cst_29 {dimension_numbers = #tpu.dot_dimension_numbers<[1], [1], [0], [0], [0, 0, 1, 0], [], []>} : vector<2x128xf32>, vector<32x128xf32>, vector<2x32xf32> -> vector<2x32xf32>
    %cst_30 = arith.constant 0.158113882 : f32
    %59 = vector.broadcast %cst_30 : f32 to vector<2x32xf32>
    %60 = arith.mulf %58, %59 : vector<2x32xf32>
    %61 = math.exp %60 : vector<2x32xf32>
    %cst_31 = arith.constant dense<0.000000e+00> : vector<32x32xf32>
    %62 = tpu.matmul %42, %43, %cst_31 {dimension_numbers = #tpu.dot_dimension_numbers<[1], [1], [0], [0], [0, 0, 1, 0], [], []>} : vector<32x128xf32>, vector<32x128xf32>, vector<32x32xf32> -> vector<32x32xf32>
    %cst_32 = arith.constant 0.158113882 : f32
    %63 = vector.broadcast %cst_32 : f32 to vector<32x32xf32>
    %64 = arith.mulf %62, %63 : vector<32x32xf32>
    %65 = math.exp %64 : vector<32x32xf32>
    %cst_33 = arith.constant 0.000000e+00 : f32
    %66 = vector.broadcast %cst_33 : f32 to vector<32x32xf32>
    %67 = arith.select %48, %65, %66 : vector<32x32xi1>, vector<32x32xf32>
    %cst_34 = arith.constant dense<0.000000e+00> : vector<2x32xf32>
    %68 = tpu.matmul %61, %67, %cst_34 {dimension_numbers = #tpu.dot_dimension_numbers<[1], [1], [0], [0], [0, 0, 1, 0], [], []>} : vector<2x32xf32>, vector<32x32xf32>, vector<2x32xf32> -> vector<2x32xf32>
    %69 = arith.mulf %57, %68 : vector<2x32xf32>
    %cst_35 = arith.constant dense<0.000000e+00> : vector<2x32xf32>
    %70 = tpu.matmul %57, %67, %cst_35 {dimension_numbers = #tpu.dot_dimension_numbers<[1], [0], [0], [1], [0, 0, 1, 1], [], []>} : vector<2x32xf32>, vector<32x32xf32>, vector<2x32xf32> -> vector<2x32xf32>
    %71 = arith.mulf %70, %61 : vector<2x32xf32>
    %cst_36 = arith.constant dense<0.000000e+00> : vector<2x128xf32>
    %72 = tpu.matmul %69, %44, %cst_36 {dimension_numbers = #tpu.dot_dimension_numbers<[1], [0], [0], [1], [0, 0, 1, 1], [], []>} : vector<2x32xf32>, vector<32x128xf32>, vector<2x128xf32> -> vector<2x128xf32>
    %cst_37 = arith.constant dense<0.000000e+00> : vector<2x128xf32>
    %73 = tpu.matmul %71, %45, %cst_37 {dimension_numbers = #tpu.dot_dimension_numbers<[1], [0], [0], [1], [0, 0, 1, 1], [], []>} : vector<2x32xf32>, vector<32x128xf32>, vector<2x128xf32> -> vector<2x128xf32>
    %cst_38 = arith.constant dense<0.000000e+00> : vector<2xf32>
    %74 = vector.multi_reduction <add>, %71, %cst_38 [1] : vector<2x32xf32> to vector<2xf32>
    %75 = vector.shape_cast %74 : vector<2xf32> to vector<2x1xf32>
    %76 = tpu.reciprocal %75 {approx = true} : vector<2x1xf32> -> vector<2x1xf32>
    %77 = vector.broadcast %76 : vector<2x1xf32> to vector<2x128xf32>
    %78 = arith.mulf %72, %77 : vector<2x128xf32>
    %79 = vector.broadcast %76 : vector<2x1xf32> to vector<2x128xf32>
    %80 = arith.mulf %73, %79 : vector<2x128xf32>
    %81 = tpu.concatenate %78, %80 in 1 : vector<2x128xf32>, vector<2x128xf32> -> vector<2x256xf32>
    %c0_39 = arith.constant 0 : index
    %c0_40 = arith.constant 0 : index
    %82 = vector.load %arg5[%c0_39, %c0_40] : memref<256x128xf32, #tpu.memory_space<vmem>>, vector<256x128xf32>
    %cst_41 = arith.constant dense<0.000000e+00> : vector<2x128xf32>
    %83 = tpu.matmul %81, %82, %cst_41 {dimension_numbers = #tpu.dot_dimension_numbers<[1], [0], [0], [1], [0, 0, 1, 1], [], []>} : vector<2x256xf32>, vector<256x128xf32>, vector<2x128xf32> -> vector<2x128xf32>
    %c0_42 = arith.constant 0 : index
    %c0_43 = arith.constant 0 : index
    %84 = vector.load %arg6[%c0_42, %c0_43] : memref<1x128xf32, #tpu.memory_space<vmem>>, vector<1x128xf32>
    %85 = vector.broadcast %84 : vector<1x128xf32> to vector<2x128xf32>
    %86 = arith.addf %83, %85 : vector<2x128xf32>
    %87 = arith.addf %86, %18 : vector<2x128xf32>
    %c0_44 = arith.constant 0 : index
    %c0_45 = arith.constant 0 : index
    %88 = vector.load %arg7[%c0_44, %c0_45] : memref<128x128xf32, #tpu.memory_space<vmem>>, vector<128x128xf32>
    %cst_46 = arith.constant dense<0.000000e+00> : vector<2x128xf32>
    %89 = tpu.matmul %87, %88, %cst_46 {dimension_numbers = #tpu.dot_dimension_numbers<[1], [0], [0], [1], [0, 0, 1, 1], [], []>} : vector<2x128xf32>, vector<128x128xf32>, vector<2x128xf32> -> vector<2x128xf32>
    %c0_47 = arith.constant 0 : index
    %c0_48 = arith.constant 0 : index
    %90 = vector.load %arg8[%c0_47, %c0_48] : memref<1x128xf32, #tpu.memory_space<vmem>>, vector<1x128xf32>
    %91 = vector.broadcast %90 : vector<1x128xf32> to vector<2x128xf32>
    %92 = arith.addf %89, %91 : vector<2x128xf32>
    %cst_49 = arith.constant 0.000000e+00 : f32
    %93 = vector.broadcast %cst_49 : f32 to vector<2x128xf32>
    %94 = arith.maximumf %92, %93 : vector<2x128xf32>
    %c0_50 = arith.constant 0 : index
    %c0_51 = arith.constant 0 : index
    %95 = vector.load %arg9[%c0_50, %c0_51] : memref<128x128xf32, #tpu.memory_space<vmem>>, vector<128x128xf32>
    %cst_52 = arith.constant dense<0.000000e+00> : vector<2x128xf32>
    %96 = tpu.matmul %94, %95, %cst_52 {dimension_numbers = #tpu.dot_dimension_numbers<[1], [0], [0], [1], [0, 0, 1, 1], [], []>} : vector<2x128xf32>, vector<128x128xf32>, vector<2x128xf32> -> vector<2x128xf32>
    %c0_53 = arith.constant 0 : index
    %c0_54 = arith.constant 0 : index
    %97 = vector.load %arg10[%c0_53, %c0_54] : memref<1x128xf32, #tpu.memory_space<vmem>>, vector<1x128xf32>
    %98 = vector.broadcast %97 : vector<1x128xf32> to vector<2x128xf32>
    %99 = arith.addf %96, %98 : vector<2x128xf32>
    %100 = vector.extract_strided_slice %99 {offsets = [0, 0], sizes = [1, 128], strides = [1, 1]} : vector<2x128xf32> to vector<1x128xf32>
    %c8 = arith.constant 8 : index
    %c0_55 = arith.constant 0 : index
    %101 = vector.load %arg13[%c8, %c0_55] : memref<32x128xf32, #tpu.memory_space<vmem>>, vector<1x128xf32>
    tpu.vector_store %arg13[%c8, %c0_55], %100 {strides = array<i32>} : memref<32x128xf32, #tpu.memory_space<vmem>>, vector<1x128xf32>,
    %102 = vector.extract_strided_slice %99 {offsets = [1, 0], sizes = [1, 128], strides = [1, 1]} : vector<2x128xf32> to vector<1x128xf32>
    %c24 = arith.constant 24 : index
    %c0_56 = arith.constant 0 : index
    %103 = vector.load %arg13[%c24, %c0_56] : memref<32x128xf32, #tpu.memory_space<vmem>>, vector<1x128xf32>
    tpu.vector_store %arg13[%c24, %c0_56], %102 {strides = array<i32>} : memref<32x128xf32, #tpu.memory_space<vmem>>, vector<1x128xf32>,
    %c0_57 = arith.constant 0 : index
    %c0_58 = arith.constant 0 : index
    %104 = vector.load %arg4[%c0_57, %c0_58] : memref<128x640xf32, #tpu.memory_space<vmem>>, vector<128x640xf32>
    %cst_59 = arith.constant dense<0.000000e+00> : vector<2x640xf32>
    %105 = tpu.matmul %99, %104, %cst_59 {dimension_numbers = #tpu.dot_dimension_numbers<[1], [0], [0], [1], [0, 0, 1, 1], [], []>} : vector<2x128xf32>, vector<128x640xf32>, vector<2x640xf32> -> vector<2x640xf32>
    %106 = vector.extract_strided_slice %105 {offsets = [0, 0], sizes = [2, 128], strides = [1, 1]} : vector<2x640xf32> to vector<2x128xf32>
    %107 = vector.extract_strided_slice %105 {offsets = [0, 128], sizes = [1, 512], strides = [1, 1]} : vector<2x640xf32> to vector<1x512xf32>
    %c8_60 = arith.constant 8 : index
    %c0_61 = arith.constant 0 : index
    %108 = vector.load %arg14[%c8_60, %c0_61] : memref<32x512xf32, #tpu.memory_space<vmem>>, vector<1x512xf32>
    tpu.vector_store %arg14[%c8_60, %c0_61], %107 {strides = array<i32>} : memref<32x512xf32, #tpu.memory_space<vmem>>, vector<1x512xf32>,
    %109 = vector.extract_strided_slice %105 {offsets = [1, 128], sizes = [1, 512], strides = [1, 1]} : vector<2x640xf32> to vector<1x512xf32>
    %c24_62 = arith.constant 24 : index
    %c0_63 = arith.constant 0 : index
    %110 = vector.load %arg14[%c24_62, %c0_63] : memref<32x512xf32, #tpu.memory_space<vmem>>, vector<1x512xf32>
    tpu.vector_store %arg14[%c24_62, %c0_63], %109 {strides = array<i32>} : memref<32x512xf32, #tpu.memory_space<vmem>>, vector<1x512xf32>,
    %c0_64 = arith.constant 0 : index
    %c0_65 = arith.constant 0 : index
    %111 = vector.load %arg14[%c0_64, %c0_65] : memref<32x512xf32, #tpu.memory_space<vmem>>, vector<32x128xf32>
    %c0_66 = arith.constant 0 : index
    %c128_67 = arith.constant 128 : index
    %112 = vector.load %arg14[%c0_66, %c128_67] : memref<32x512xf32, #tpu.memory_space<vmem>>, vector<32x128xf32>
    %c0_68 = arith.constant 0 : index
    %c256_69 = arith.constant 256 : index
    %113 = vector.load %arg14[%c0_68, %c256_69] : memref<32x512xf32, #tpu.memory_space<vmem>>, vector<32x128xf32>
    %c0_70 = arith.constant 0 : index
    %c384_71 = arith.constant 384 : index
    %114 = vector.load %arg14[%c0_70, %c384_71] : memref<32x512xf32, #tpu.memory_space<vmem>>, vector<32x128xf32>
    %c9_i32 = arith.constant 9 : i32
    %115 = vector.broadcast %c9_i32 : i32 to vector<32x32xi32>
    %116 = arith.cmpi slt, %27, %115 : vector<32x32xi32>
    %117 = arith.andi %25, %116 : vector<32x32xi1>
    %c9_i32_72 = arith.constant 9 : i32
    %118 = vector.broadcast %c9_i32_72 : i32 to vector<2x32xi32>
    %119 = arith.cmpi slt, %34, %118 : vector<2x32xi32>
    %120 = arith.andi %32, %119 : vector<2x32xi1>
    %cst_73 = arith.constant dense<0.000000e+00> : vector<2x32xf32>
    %121 = tpu.matmul %106, %111, %cst_73 {dimension_numbers = #tpu.dot_dimension_numbers<[1], [1], [0], [0], [0, 0, 1, 0], [], []>} : vector<2x128xf32>, vector<32x128xf32>, vector<2x32xf32> -> vector<2x32xf32>
    %cst_74 = arith.constant 0.158113882 : f32
    %122 = vector.broadcast %cst_74 : f32 to vector<2x32xf32>
    %123 = arith.mulf %121, %122 : vector<2x32xf32>
    %124 = math.exp %123 : vector<2x32xf32>
    %cst_75 = arith.constant 0.000000e+00 : f32
    %125 = vector.broadcast %cst_75 : f32 to vector<2x32xf32>
    %126 = arith.select %120, %124, %125 : vector<2x32xi1>, vector<2x32xf32>
    %cst_76 = arith.constant dense<0.000000e+00> : vector<2x32xf32>
    %127 = tpu.matmul %106, %112, %cst_76 {dimension_numbers = #tpu.dot_dimension_numbers<[1], [1], [0], [0], [0, 0, 1, 0], [], []>} : vector<2x128xf32>, vector<32x128xf32>, vector<2x32xf32> -> vector<2x32xf32>
    %cst_77 = arith.constant 0.158113882 : f32
    %128 = vector.broadcast %cst_77 : f32 to vector<2x32xf32>
    %129 = arith.mulf %127, %128 : vector<2x32xf32>
    %130 = math.exp %129 : vector<2x32xf32>
    %cst_78 = arith.constant dense<0.000000e+00> : vector<32x32xf32>
    %131 = tpu.matmul %111, %112, %cst_78 {dimension_numbers = #tpu.dot_dimension_numbers<[1], [1], [0], [0], [0, 0, 1, 0], [], []>} : vector<32x128xf32>, vector<32x128xf32>, vector<32x32xf32> -> vector<32x32xf32>
    %cst_79 = arith.constant 0.158113882 : f32
    %132 = vector.broadcast %cst_79 : f32 to vector<32x32xf32>
    %133 = arith.mulf %131, %132 : vector<32x32xf32>
    %134 = math.exp %133 : vector<32x32xf32>
    %cst_80 = arith.constant 0.000000e+00 : f32
    %135 = vector.broadcast %cst_80 : f32 to vector<32x32xf32>
    %136 = arith.select %117, %134, %135 : vector<32x32xi1>, vector<32x32xf32>
    %cst_81 = arith.constant dense<0.000000e+00> : vector<2x32xf32>
    %137 = tpu.matmul %130, %136, %cst_81 {dimension_numbers = #tpu.dot_dimension_numbers<[1], [1], [0], [0], [0, 0, 1, 0], [], []>} : vector<2x32xf32>, vector<32x32xf32>, vector<2x32xf32> -> vector<2x32xf32>
    %138 = arith.mulf %126, %137 : vector<2x32xf32>
    %cst_82 = arith.constant dense<0.000000e+00> : vector<2x32xf32>
    %139 = tpu.matmul %126, %136, %cst_82 {dimension_numbers = #tpu.dot_dimension_numbers<[1], [0], [0], [1], [0, 0, 1, 1], [], []>} : vector<2x32xf32>, vector<32x32xf32>, vector<2x32xf32> -> vector<2x32xf32>
    %140 = arith.mulf %139, %130 : vector<2x32xf32>
    %cst_83 = arith.constant dense<0.000000e+00> : vector<2x128xf32>
    %141 = tpu.matmul %138, %113, %cst_83 {dimension_numbers = #tpu.dot_dimension_numbers<[1], [0], [0], [1], [0, 0, 1, 1], [], []>} : vector<2x32xf32>, vector<32x128xf32>, vector<2x128xf32> -> vector<2x128xf32>
    %cst_84 = arith.constant dense<0.000000e+00> : vector<2x128xf32>
    %142 = tpu.matmul %140, %114, %cst_84 {dimension_numbers = #tpu.dot_dimension_numbers<[1], [0], [0], [1], [0, 0, 1, 1], [], []>} : vector<2x32xf32>, vector<32x128xf32>, vector<2x128xf32> -> vector<2x128xf32>
    %cst_85 = arith.constant dense<0.000000e+00> : vector<2xf32>
    %143 = vector.multi_reduction <add>, %140, %cst_85 [1] : vector<2x32xf32> to vector<2xf32>
    %144 = vector.shape_cast %143 : vector<2xf32> to vector<2x1xf32>
    %145 = tpu.reciprocal %144 {approx = true} : vector<2x1xf32> -> vector<2x1xf32>
    %146 = vector.broadcast %145 : vector<2x1xf32> to vector<2x128xf32>
    %147 = arith.mulf %141, %146 : vector<2x128xf32>
    %148 = vector.broadcast %145 : vector<2x1xf32> to vector<2x128xf32>
    %149 = arith.mulf %142, %148 : vector<2x128xf32>
    %150 = tpu.concatenate %147, %149 in 1 : vector<2x128xf32>, vector<2x128xf32> -> vector<2x256xf32>
    %c0_86 = arith.constant 0 : index
    %c0_87 = arith.constant 0 : index
    %151 = vector.load %arg5[%c0_86, %c0_87] : memref<256x128xf32, #tpu.memory_space<vmem>>, vector<256x128xf32>
    %cst_88 = arith.constant dense<0.000000e+00> : vector<2x128xf32>
    %152 = tpu.matmul %150, %151, %cst_88 {dimension_numbers = #tpu.dot_dimension_numbers<[1], [0], [0], [1], [0, 0, 1, 1], [], []>} : vector<2x256xf32>, vector<256x128xf32>, vector<2x128xf32> -> vector<2x128xf32>
    %c0_89 = arith.constant 0 : index
    %c0_90 = arith.constant 0 : index
    %153 = vector.load %arg6[%c0_89, %c0_90] : memref<1x128xf32, #tpu.memory_space<vmem>>, vector<1x128xf32>
    %154 = vector.broadcast %153 : vector<1x128xf32> to vector<2x128xf32>
    %155 = arith.addf %152, %154 : vector<2x128xf32>
    %156 = arith.addf %155, %99 : vector<2x128xf32>
    %c0_91 = arith.constant 0 : index
    %c0_92 = arith.constant 0 : index
    %157 = vector.load %arg7[%c0_91, %c0_92] : memref<128x128xf32, #tpu.memory_space<vmem>>, vector<128x128xf32>
    %cst_93 = arith.constant dense<0.000000e+00> : vector<2x128xf32>
    %158 = tpu.matmul %156, %157, %cst_93 {dimension_numbers = #tpu.dot_dimension_numbers<[1], [0], [0], [1], [0, 0, 1, 1], [], []>} : vector<2x128xf32>, vector<128x128xf32>, vector<2x128xf32> -> vector<2x128xf32>
    %c0_94 = arith.constant 0 : index
    %c0_95 = arith.constant 0 : index
    %159 = vector.load %arg8[%c0_94, %c0_95] : memref<1x128xf32, #tpu.memory_space<vmem>>, vector<1x128xf32>
    %160 = vector.broadcast %159 : vector<1x128xf32> to vector<2x128xf32>
    %161 = arith.addf %158, %160 : vector<2x128xf32>
    %cst_96 = arith.constant 0.000000e+00 : f32
    %162 = vector.broadcast %cst_96 : f32 to vector<2x128xf32>
    %163 = arith.maximumf %161, %162 : vector<2x128xf32>
    %c0_97 = arith.constant 0 : index
    %c0_98 = arith.constant 0 : index
    %164 = vector.load %arg9[%c0_97, %c0_98] : memref<128x128xf32, #tpu.memory_space<vmem>>, vector<128x128xf32>
    %cst_99 = arith.constant dense<0.000000e+00> : vector<2x128xf32>
    %165 = tpu.matmul %163, %164, %cst_99 {dimension_numbers = #tpu.dot_dimension_numbers<[1], [0], [0], [1], [0, 0, 1, 1], [], []>} : vector<2x128xf32>, vector<128x128xf32>, vector<2x128xf32> -> vector<2x128xf32>
    %c0_100 = arith.constant 0 : index
    %c0_101 = arith.constant 0 : index
    %166 = vector.load %arg10[%c0_100, %c0_101] : memref<1x128xf32, #tpu.memory_space<vmem>>, vector<1x128xf32>
    %167 = vector.broadcast %166 : vector<1x128xf32> to vector<2x128xf32>
    %168 = arith.addf %165, %167 : vector<2x128xf32>
    %169 = vector.extract_strided_slice %168 {offsets = [0, 0], sizes = [1, 128], strides = [1, 1]} : vector<2x128xf32> to vector<1x128xf32>
    %c9 = arith.constant 9 : index
    %c0_102 = arith.constant 0 : index
    %170 = vector.load %arg13[%c9, %c0_102] : memref<32x128xf32, #tpu.memory_space<vmem>>, vector<1x128xf32>
    tpu.vector_store %arg13[%c9, %c0_102], %169 {strides = array<i32>} : memref<32x128xf32, #tpu.memory_space<vmem>>, vector<1x128xf32>,
    %171 = vector.extract_strided_slice %168 {offsets = [1, 0], sizes = [1, 128], strides = [1, 1]} : vector<2x128xf32> to vector<1x128xf32>
    %c25 = arith.constant 25 : index
    %c0_103 = arith.constant 0 : index
    %172 = vector.load %arg13[%c25, %c0_103] : memref<32x128xf32, #tpu.memory_space<vmem>>, vector<1x128xf32>
    tpu.vector_store %arg13[%c25, %c0_103], %171 {strides = array<i32>} : memref<32x128xf32, #tpu.memory_space<vmem>>, vector<1x128xf32>,
    %c0_104 = arith.constant 0 : index
    %c0_105 = arith.constant 0 : index
    %173 = vector.load %arg4[%c0_104, %c0_105] : memref<128x640xf32, #tpu.memory_space<vmem>>, vector<128x640xf32>
    %cst_106 = arith.constant dense<0.000000e+00> : vector<2x640xf32>
    %174 = tpu.matmul %168, %173, %cst_106 {dimension_numbers = #tpu.dot_dimension_numbers<[1], [0], [0], [1], [0, 0, 1, 1], [], []>} : vector<2x128xf32>, vector<128x640xf32>, vector<2x640xf32> -> vector<2x640xf32>
    %175 = vector.extract_strided_slice %174 {offsets = [0, 0], sizes = [2, 128], strides = [1, 1]} : vector<2x640xf32> to vector<2x128xf32>
    %176 = vector.extract_strided_slice %174 {offsets = [0, 128], sizes = [1, 512], strides = [1, 1]} : vector<2x640xf32> to vector<1x512xf32>
    %c9_107 = arith.constant 9 : index
    %c0_108 = arith.constant 0 : index
    %177 = vector.load %arg14[%c9_107, %c0_108] : memref<32x512xf32, #tpu.memory_space<vmem>>, vector<1x512xf32>
    tpu.vector_store %arg14[%c9_107, %c0_108], %176 {strides = array<i32>} : memref<32x512xf32, #tpu.memory_space<vmem>>, vector<1x512xf32>,
    %178 = vector.extract_strided_slice %174 {offsets = [1, 128], sizes = [1, 512], strides = [1, 1]} : vector<2x640xf32> to vector<1x512xf32>
    %c25_109 = arith.constant 25 : index
    %c0_110 = arith.constant 0 : index
    %179 = vector.load %arg14[%c25_109, %c0_110] : memref<32x512xf32, #tpu.memory_space<vmem>>, vector<1x512xf32>
    tpu.vector_store %arg14[%c25_109, %c0_110], %178 {strides = array<i32>} : memref<32x512xf32, #tpu.memory_space<vmem>>, vector<1x512xf32>,
    %c0_111 = arith.constant 0 : index
    %c0_112 = arith.constant 0 : index
    %180 = vector.load %arg14[%c0_111, %c0_112] : memref<32x512xf32, #tpu.memory_space<vmem>>, vector<32x128xf32>
    %c0_113 = arith.constant 0 : index
    %c128_114 = arith.constant 128 : index
    %181 = vector.load %arg14[%c0_113, %c128_114] : memref<32x512xf32, #tpu.memory_space<vmem>>, vector<32x128xf32>
    %c0_115 = arith.constant 0 : index
    %c256_116 = arith.constant 256 : index
    %182 = vector.load %arg14[%c0_115, %c256_116] : memref<32x512xf32, #tpu.memory_space<vmem>>, vector<32x128xf32>
    %c0_117 = arith.constant 0 : index
    %c384_118 = arith.constant 384 : index
    %183 = vector.load %arg14[%c0_117, %c384_118] : memref<32x512xf32, #tpu.memory_space<vmem>>, vector<32x128xf32>
    %c10_i32 = arith.constant 10 : i32
    %184 = vector.broadcast %c10_i32 : i32 to vector<32x32xi32>
    %185 = arith.cmpi slt, %27, %184 : vector<32x32xi32>
    %186 = arith.andi %25, %185 : vector<32x32xi1>
    %c10_i32_119 = arith.constant 10 : i32
    %187 = vector.broadcast %c10_i32_119 : i32 to vector<2x32xi32>
    %188 = arith.cmpi slt, %34, %187 : vector<2x32xi32>
    %189 = arith.andi %32, %188 : vector<2x32xi1>
    %cst_120 = arith.constant dense<0.000000e+00> : vector<2x32xf32>
    %190 = tpu.matmul %175, %180, %cst_120 {dimension_numbers = #tpu.dot_dimension_numbers<[1], [1], [0], [0], [0, 0, 1, 0], [], []>} : vector<2x128xf32>, vector<32x128xf32>, vector<2x32xf32> -> vector<2x32xf32>
    %cst_121 = arith.constant 0.158113882 : f32
    %191 = vector.broadcast %cst_121 : f32 to vector<2x32xf32>
    %192 = arith.mulf %190, %191 : vector<2x32xf32>
    %193 = math.exp %192 : vector<2x32xf32>
    %cst_122 = arith.constant 0.000000e+00 : f32
    %194 = vector.broadcast %cst_122 : f32 to vector<2x32xf32>
    %195 = arith.select %189, %193, %194 : vector<2x32xi1>, vector<2x32xf32>
    %cst_123 = arith.constant dense<0.000000e+00> : vector<2x32xf32>
    %196 = tpu.matmul %175, %181, %cst_123 {dimension_numbers = #tpu.dot_dimension_numbers<[1], [1], [0], [0], [0, 0, 1, 0], [], []>} : vector<2x128xf32>, vector<32x128xf32>, vector<2x32xf32> -> vector<2x32xf32>
    %cst_124 = arith.constant 0.158113882 : f32
    %197 = vector.broadcast %cst_124 : f32 to vector<2x32xf32>
    %198 = arith.mulf %196, %197 : vector<2x32xf32>
    %199 = math.exp %198 : vector<2x32xf32>
    %cst_125 = arith.constant dense<0.000000e+00> : vector<32x32xf32>
    %200 = tpu.matmul %180, %181, %cst_125 {dimension_numbers = #tpu.dot_dimension_numbers<[1], [1], [0], [0], [0, 0, 1, 0], [], []>} : vector<32x128xf32>, vector<32x128xf32>, vector<32x32xf32> -> vector<32x32xf32>
    %cst_126 = arith.constant 0.158113882 : f32
    %201 = vector.broadcast %cst_126 : f32 to vector<32x32xf32>
    %202 = arith.mulf %200, %201 : vector<32x32xf32>
    %203 = math.exp %202 : vector<32x32xf32>
    %cst_127 = arith.constant 0.000000e+00 : f32
    %204 = vector.broadcast %cst_127 : f32 to vector<32x32xf32>
    %205 = arith.select %186, %203, %204 : vector<32x32xi1>, vector<32x32xf32>
    %cst_128 = arith.constant dense<0.000000e+00> : vector<2x32xf32>
    %206 = tpu.matmul %199, %205, %cst_128 {dimension_numbers = #tpu.dot_dimension_numbers<[1], [1], [0], [0], [0, 0, 1, 0], [], []>} : vector<2x32xf32>, vector<32x32xf32>, vector<2x32xf32> -> vector<2x32xf32>
    %207 = arith.mulf %195, %206 : vector<2x32xf32>
    %cst_129 = arith.constant dense<0.000000e+00> : vector<2x32xf32>
    %208 = tpu.matmul %195, %205, %cst_129 {dimension_numbers = #tpu.dot_dimension_numbers<[1], [0], [0], [1], [0, 0, 1, 1], [], []>} : vector<2x32xf32>, vector<32x32xf32>, vector<2x32xf32> -> vector<2x32xf32>
    %209 = arith.mulf %208, %199 : vector<2x32xf32>
    %cst_130 = arith.constant dense<0.000000e+00> : vector<2x128xf32>
    %210 = tpu.matmul %207, %182, %cst_130 {dimension_numbers = #tpu.dot_dimension_numbers<[1], [0], [0], [1], [0, 0, 1, 1], [], []>} : vector<2x32xf32>, vector<32x128xf32>, vector<2x128xf32> -> vector<2x128xf32>
    %cst_131 = arith.constant dense<0.000000e+00> : vector<2x128xf32>
    %211 = tpu.matmul %209, %183, %cst_131 {dimension_numbers = #tpu.dot_dimension_numbers<[1], [0], [0], [1], [0, 0, 1, 1], [], []>} : vector<2x32xf32>, vector<32x128xf32>, vector<2x128xf32> -> vector<2x128xf32>
    %cst_132 = arith.constant dense<0.000000e+00> : vector<2xf32>
    %212 = vector.multi_reduction <add>, %209, %cst_132 [1] : vector<2x32xf32> to vector<2xf32>
    %213 = vector.shape_cast %212 : vector<2xf32> to vector<2x1xf32>
    %214 = tpu.reciprocal %213 {approx = true} : vector<2x1xf32> -> vector<2x1xf32>
    %215 = vector.broadcast %214 : vector<2x1xf32> to vector<2x128xf32>
    %216 = arith.mulf %210, %215 : vector<2x128xf32>
    %217 = vector.broadcast %214 : vector<2x1xf32> to vector<2x128xf32>
    %218 = arith.mulf %211, %217 : vector<2x128xf32>
    %219 = tpu.concatenate %216, %218 in 1 : vector<2x128xf32>, vector<2x128xf32> -> vector<2x256xf32>
    %c0_133 = arith.constant 0 : index
    %c0_134 = arith.constant 0 : index
    %220 = vector.load %arg5[%c0_133, %c0_134] : memref<256x128xf32, #tpu.memory_space<vmem>>, vector<256x128xf32>
    %cst_135 = arith.constant dense<0.000000e+00> : vector<2x128xf32>
    %221 = tpu.matmul %219, %220, %cst_135 {dimension_numbers = #tpu.dot_dimension_numbers<[1], [0], [0], [1], [0, 0, 1, 1], [], []>} : vector<2x256xf32>, vector<256x128xf32>, vector<2x128xf32> -> vector<2x128xf32>
    %c0_136 = arith.constant 0 : index
    %c0_137 = arith.constant 0 : index
    %222 = vector.load %arg6[%c0_136, %c0_137] : memref<1x128xf32, #tpu.memory_space<vmem>>, vector<1x128xf32>
    %223 = vector.broadcast %222 : vector<1x128xf32> to vector<2x128xf32>
    %224 = arith.addf %221, %223 : vector<2x128xf32>
    %225 = arith.addf %224, %168 : vector<2x128xf32>
    %c0_138 = arith.constant 0 : index
    %c0_139 = arith.constant 0 : index
    %226 = vector.load %arg7[%c0_138, %c0_139] : memref<128x128xf32, #tpu.memory_space<vmem>>, vector<128x128xf32>
    %cst_140 = arith.constant dense<0.000000e+00> : vector<2x128xf32>
    %227 = tpu.matmul %225, %226, %cst_140 {dimension_numbers = #tpu.dot_dimension_numbers<[1], [0], [0], [1], [0, 0, 1, 1], [], []>} : vector<2x128xf32>, vector<128x128xf32>, vector<2x128xf32> -> vector<2x128xf32>
    %c0_141 = arith.constant 0 : index
    %c0_142 = arith.constant 0 : index
    %228 = vector.load %arg8[%c0_141, %c0_142] : memref<1x128xf32, #tpu.memory_space<vmem>>, vector<1x128xf32>
    %229 = vector.broadcast %228 : vector<1x128xf32> to vector<2x128xf32>
    %230 = arith.addf %227, %229 : vector<2x128xf32>
    %cst_143 = arith.constant 0.000000e+00 : f32
    %231 = vector.broadcast %cst_143 : f32 to vector<2x128xf32>
    %232 = arith.maximumf %230, %231 : vector<2x128xf32>
    %c0_144 = arith.constant 0 : index
    %c0_145 = arith.constant 0 : index
    %233 = vector.load %arg9[%c0_144, %c0_145] : memref<128x128xf32, #tpu.memory_space<vmem>>, vector<128x128xf32>
    %cst_146 = arith.constant dense<0.000000e+00> : vector<2x128xf32>
    %234 = tpu.matmul %232, %233, %cst_146 {dimension_numbers = #tpu.dot_dimension_numbers<[1], [0], [0], [1], [0, 0, 1, 1], [], []>} : vector<2x128xf32>, vector<128x128xf32>, vector<2x128xf32> -> vector<2x128xf32>
    %c0_147 = arith.constant 0 : index
    %c0_148 = arith.constant 0 : index
    %235 = vector.load %arg10[%c0_147, %c0_148] : memref<1x128xf32, #tpu.memory_space<vmem>>, vector<1x128xf32>
    %236 = vector.broadcast %235 : vector<1x128xf32> to vector<2x128xf32>
    %237 = arith.addf %234, %236 : vector<2x128xf32>
    %238 = vector.extract_strided_slice %237 {offsets = [0, 0], sizes = [1, 128], strides = [1, 1]} : vector<2x128xf32> to vector<1x128xf32>
    %c10 = arith.constant 10 : index
    %c0_149 = arith.constant 0 : index
    %239 = vector.load %arg13[%c10, %c0_149] : memref<32x128xf32, #tpu.memory_space<vmem>>, vector<1x128xf32>
    tpu.vector_store %arg13[%c10, %c0_149], %238 {strides = array<i32>} : memref<32x128xf32, #tpu.memory_space<vmem>>, vector<1x128xf32>,
    %240 = vector.extract_strided_slice %237 {offsets = [1, 0], sizes = [1, 128], strides = [1, 1]} : vector<2x128xf32> to vector<1x128xf32>
    %c26 = arith.constant 26 : index
    %c0_150 = arith.constant 0 : index
    %241 = vector.load %arg13[%c26, %c0_150] : memref<32x128xf32, #tpu.memory_space<vmem>>, vector<1x128xf32>
    tpu.vector_store %arg13[%c26, %c0_150], %240 {strides = array<i32>} : memref<32x128xf32, #tpu.memory_space<vmem>>, vector<1x128xf32>,
    %c0_151 = arith.constant 0 : index
    %c0_152 = arith.constant 0 : index
    %242 = vector.load %arg13[%c0_151, %c0_152] : memref<32x128xf32, #tpu.memory_space<vmem>>, vector<32x128xf32>
    %c0_153 = arith.constant 0 : index
    %c0_154 = arith.constant 0 : index
    %243 = vector.load %arg11[%c0_153, %c0_154] : memref<128x128xf32, #tpu.memory_space<vmem>>, vector<128x128xf32>
    %cst_155 = arith.constant dense<0.000000e+00> : vector<32x128xf32>
    %244 = tpu.matmul %242, %243, %cst_155 {dimension_numbers = #tpu.dot_dimension_numbers<[1], [0], [0], [1], [0, 0, 1, 1], [], []>} : vector<32x128xf32>, vector<128x128xf32>, vector<32x128xf32> -> vector<32x128xf32>
    %c0_156 = arith.constant 0 : index
    %c0_157 = arith.constant 0 : index
    %245 = vector.load %arg12[%c0_156, %c0_157] : memref<32x128xf32, #tpu.memory_space<vmem>>, vector<32x128xf32>
    tpu.vector_store %arg12[%c0_156, %c0_157], %244 {strides = array<i32>} : memref<32x128xf32, #tpu.memory_space<vmem>>, vector<32x128xf32>,
    return
  }
  func.func @transform_0(%arg0: i32) -> (i32, i32) {
    %c0_i32 = arith.constant 0 : i32
    %c0_i32_0 = arith.constant 0 : i32
    %c0_i32_1 = arith.constant 0 : i32
    return %c0_i32, %c0_i32_0 : i32, i32
  }
  func.func @transform_1(%arg0: i32) -> (i32, i32) {
    %c0_i32 = arith.constant 0 : i32
    %c0_i32_0 = arith.constant 0 : i32
    %c0_i32_1 = arith.constant 0 : i32
    return %c0_i32, %c0_i32_0 : i32, i32
  }
  func.func @transform_2(%arg0: i32) -> (i32, i32) {
    %c0_i32 = arith.constant 0 : i32
    %c0_i32_0 = arith.constant 0 : i32
    %c0_i32_1 = arith.constant 0 : i32
    return %c0_i32, %c0_i32_0 : i32, i32
  }
  func.func @transform_3(%arg0: i32) -> (i32, i32) {
    %c0_i32 = arith.constant 0 : i32
    %c0_i32_0 = arith.constant 0 : i32
    %c0_i32_1 = arith.constant 0 : i32
    return %c0_i32, %c0_i32_0 : i32, i32
  }
  func.func @transform_4(%arg0: i32) -> (i32, i32) {
    %c0_i32 = arith.constant 0 : i32
    %c0_i32_0 = arith.constant 0 : i32
    %c0_i32_1 = arith.constant 0 : i32
    return %c0_i32, %c0_i32_0 : i32, i32
  }
  func.func @transform_5(%arg0: i32) -> (i32, i32) {
    %c0_i32 = arith.constant 0 : i32
    %c0_i32_0 = arith.constant 0 : i32
    %c0_i32_1 = arith.constant 0 : i32
    return %c0_i32, %c0_i32_0 : i32, i32
  }
  func.func @transform_6(%arg0: i32) -> (i32, i32) {
    %c0_i32 = arith.constant 0 : i32
    %c0_i32_0 = arith.constant 0 : i32
    %c0_i32_1 = arith.constant 0 : i32
    return %c0_i32, %c0_i32_0 : i32, i32
  }
  func.func @transform_7(%arg0: i32) -> (i32, i32) {
    %c0_i32 = arith.constant 0 : i32
    %c0_i32_0 = arith.constant 0 : i32
    %c0_i32_1 = arith.constant 0 : i32
    return %c0_i32, %c0_i32_0 : i32, i32
  }
  func.func @transform_8(%arg0: i32) -> (i32, i32) {
    %c0_i32 = arith.constant 0 : i32
    %c0_i32_0 = arith.constant 0 : i32
    %c0_i32_1 = arith.constant 0 : i32
    return %c0_i32, %c0_i32_0 : i32, i32
  }
  func.func @transform_9(%arg0: i32) -> (i32, i32) {
    %c0_i32 = arith.constant 0 : i32
    %c0_i32_0 = arith.constant 0 : i32
    %c0_i32_1 = arith.constant 0 : i32
    return %c0_i32, %c0_i32_0 : i32, i32
  }
  func.func @transform_10(%arg0: i32) -> (i32, i32) {
    %c0_i32 = arith.constant 0 : i32
    %c0_i32_0 = arith.constant 0 : i32
    %c0_i32_1 = arith.constant 0 : i32
    return %c0_i32, %c0_i32_0 : i32, i32
  }
  func.func @transform_11(%arg0: i32) -> (i32, i32) {
    %c0_i32 = arith.constant 0 : i32
    %c0_i32_0 = arith.constant 0 : i32
    %c0_i32_1 = arith.constant 0 : i32
    return %c0_i32, %c0_i32_0 : i32, i32
  }
}

</mosaic_0001>

<llo_original>
// kernel: tpu_custom_call.1
$region0: #{tpu_custom_call.1}
  #allocation0 [shape = 'u32[]', space=smem, size = 0x4, offset = 0x4, fixed_abs, tag = 'smem constant byte address 0x4 - core index']
  #allocation1 [shape = 'u32[144,128]{1,0:T(1,128)}', space=vmem, size = 0x12000, scoped, tag = 'internal scratch']
  #allocation2 [shape = 'f32[32,128]{1,0:T(8,128)}', space=vmem, size = 0x4000, scoped, tag = 'scratch operand']
  #allocation3 [shape = 'f32[32,512]{1,0:T(8,128)}', space=vmem, size = 0x10000, scoped, tag = 'scratch operand']
  %s0 = inlined_call_operand.vmem [shape: s32[32,1], index: 0, kind: input, shape index: {}]
  %s1 = inlined_call_operand.vmem [shape: f32[32,128], index: 1, kind: input, shape index: {}]
  %s2 = inlined_call_operand.hbm [shape: f32[16,128], index: 2, kind: input, shape index: {}]
  %s3 = inlined_call_operand.hbm [shape: f32[128,640], index: 3, kind: input, shape index: {}]
  %s4 = inlined_call_operand.hbm [shape: f32[256,128], index: 4, kind: input, shape index: {}]
  %s5 = inlined_call_operand.vmem [shape: f32[1,128], index: 5, kind: input, shape index: {}]
  %s6 = inlined_call_operand.hbm [shape: f32[128,128], index: 6, kind: input, shape index: {}]
  %s7 = inlined_call_operand.vmem [shape: f32[1,128], index: 7, kind: input, shape index: {}]
  %s8 = inlined_call_operand.hbm [shape: f32[128,128], index: 8, kind: input, shape index: {}]
  %s9 = inlined_call_operand.vmem [shape: f32[1,128], index: 9, kind: input, shape index: {}]
  %s10 = inlined_call_operand.hbm [shape: f32[128,128], index: 10, kind: input, shape index: {}]
  %s11 = inlined_call_operand.hbm [shape: f32[32,128], index: 11, kind: output, shape index: {}]
  %s12 = sld [smem:[#allocation0]]
  $region78: #{tpu_custom_call.1} parent=0
    _
  %s14 = ssub.s32 1, %s12
  %s15 = scalar_select 0, %s14, %s12
  $region1: #{tpu_custom_call.1} parent=0
    #allocation4 [shape = 'u8[8192]{0}', space=vmem, size = 0x2000, scoped, tag = 'input window, operand 2, single buffered']
    #allocation5 [shape = 's32[1]{0}', space=sflag, size = 0x4, scoped, tag = 'scoped memory for tpu_custom_call.1']
    #allocation6 [shape = 's32[1]{0}', space=sflag, size = 0x4, scoped, tag = 'scoped memory for tpu_custom_call.1']
    #allocation7 [shape = 'u8[327680]{0}', space=vmem, size = 0x50000, scoped, tag = 'input window, operand 3, single buffered']
    #allocation8 [shape = 's32[1]{0}', space=sflag, size = 0x4, scoped, tag = 'scoped memory for tpu_custom_call.1']
    #allocation9 [shape = 'u8[131072]{0}', space=vmem, size = 0x20000, scoped, tag = 'input window, operand 4, single buffered']
    #allocation10 [shape = 'u8[65536]{0}', space=vmem, size = 0x10000, scoped, tag = 'input window, operand 6, single buffered']
    #allocation11 [shape = 's32[1]{0}', space=sflag, size = 0x4, scoped, tag = 'scoped memory for tpu_custom_call.1']
    #allocation12 [shape = 'u8[65536]{0}', space=vmem, size = 0x10000, scoped, tag = 'input window, operand 8, single buffered']
    #allocation13 [shape = 'u8[65536]{0}', space=vmem, size = 0x10000, scoped, tag = 'input window, operand 10, single buffered']
    #allocation14 [shape = 's32[1]{0}', space=sflag, size = 0x4, scoped, tag = 'scoped memory for tpu_custom_call.1']
    #allocation15 [shape = 'u8[16384]{0}', space=vmem, size = 0x4000, scoped, tag = 'output window, operand 0, single buffered']
    %16 = vsyncpa [#allocation5], 0
    %17 = vsyncpa [#allocation8], 0
    %18 = vsyncpa [#allocation11], 0
    %19 = vsyncpa [#allocation14], 0
    %20 = vsyncpa [#allocation6], 0
    // Predicated region
    $region2: #{tpu_custom_call.1} parent=1 // pred_check
      _
    $region3: #{tpu_custom_call.1} parent=1 // pred_check_branch
      %22 = sbr.rel (0) target = $region5
    $region4: #{tpu_custom_call.1} parent=1 // pred_region
      _
    $region5: #{tpu_custom_call.1} parent=1 // pred_fallthru
      _
    // Predicated region
    $region6: #{tpu_custom_call.1} parent=1 // pred_check
      _
    $region7: #{tpu_custom_call.1} parent=1 // pred_check_branch
      %24 = sbr.rel (0) target = $region9
    $region8: #{tpu_custom_call.1} parent=1 // pred_region
      _
    $region9: #{tpu_custom_call.1} parent=1 // pred_fallthru
      _
    // Predicated region
    $region10: #{tpu_custom_call.1} parent=1 // pred_check
      _
    $region11: #{tpu_custom_call.1} parent=1 // pred_check_branch
      %26 = sbr.rel (0) target = $region13
    $region12: #{tpu_custom_call.1} parent=1 // pred_region
      %s28 = ssub.s32 256, 256
      %29 = vsyncadd [#allocation5], %s28
      %s30 = sshll.u32 [#allocation4], 4
      %s31 = int_to_ptr.vmem [resolvable:$true] %s30
      %36 = dma.hbm_to_vmem [thread:$0]  %s2, 256, %s31, [#allocation5], 128, 128, 8
    $region13: #{tpu_custom_call.1} parent=1 // pred_fallthru
      _
    // Predicated region
    $region14: #{tpu_custom_call.1} parent=1 // pred_check
      _
    $region15: #{tpu_custom_call.1} parent=1 // pred_check_branch
      %38 = sbr.rel (0) target = $region17
    $region16: #{tpu_custom_call.1} parent=1 // pred_region
      %s40 = ssub.s32 10240, 10240
      %41 = vsyncadd [#allocation8], %s40
      %s42 = sshll.u32 [#allocation7], 4
      %s43 = int_to_ptr.vmem [resolvable:$true] %s42
      %48 = dma.hbm_to_vmem [thread:$0]  %s3, 10240, %s43, [#allocation8], 640, 640, 40
    $region17: #{tpu_custom_call.1} parent=1 // pred_fallthru
      _
    // Predicated region
    $region18: #{tpu_custom_call.1} parent=1 // pred_check
      _
    $region19: #{tpu_custom_call.1} parent=1 // pred_check_branch
      %50 = sbr.rel (0) target = $region21
    $region20: #{tpu_custom_call.1} parent=1 // pred_region
      %s52 = ssub.s32 4096, 4096
      %53 = vsyncadd [#allocation8], %s52
      %s54 = sshll.u32 [#allocation9], 4
      %s55 = int_to_ptr.vmem [resolvable:$true] %s54
      %60 = dma.hbm_to_vmem [thread:$0]  %s4, 4096, %s55, [#allocation8], 128, 128, 8
    $region21: #{tpu_custom_call.1} parent=1 // pred_fallthru
      _
    // Predicated region
    $region22: #{tpu_custom_call.1} parent=1 // pred_check
      _
    $region23: #{tpu_custom_call.1} parent=1 // pred_check_branch
      %62 = sbr.rel (0) target = $region25
    $region24: #{tpu_custom_call.1} parent=1 // pred_region
      _
    $region25: #{tpu_custom_call.1} parent=1 // pred_fallthru
      _
    // Predicated region
    $region26: #{tpu_custom_call.1} parent=1 // pred_check
      _
    $region27: #{tpu_custom_call.1} parent=1 // pred_check_branch
      %64 = sbr.rel (0) target = $region29
    $region28: #{tpu_custom_call.1} parent=1 // pred_region
      %s66 = ssub.s32 2048, 2048
      %67 = vsyncadd [#allocation11], %s66
      %s68 = sshll.u32 [#allocation10], 4
      %s69 = int_to_ptr.vmem [resolvable:$true] %s68
      %74 = dma.hbm_to_vmem [thread:$0]  %s6, 2048, %s69, [#allocation11], 128, 128, 8
    $region29: #{tpu_custom_call.1} parent=1 // pred_fallthru
      _
    // Predicated region
    $region30: #{tpu_custom_call.1} parent=1 // pred_check
      _
    $region31: #{tpu_custom_call.1} parent=1 // pred_check_branch
      %76 = sbr.rel (0) target = $region33
    $region32: #{tpu_custom_call.1} parent=1 // pred_region
      _
    $region33: #{tpu_custom_call.1} parent=1 // pred_fallthru
      _
    // Predicated region
    $region34: #{tpu_custom_call.1} parent=1 // pred_check
      _
    $region35: #{tpu_custom_call.1} parent=1 // pred_check_branch
      %78 = sbr.rel (0) target = $region37
    $region36: #{tpu_custom_call.1} parent=1 // pred_region
      %s80 = ssub.s32 2048, 2048
      %81 = vsyncadd [#allocation11], %s80
      %s82 = sshll.u32 [#allocation12], 4
      %s83 = int_to_ptr.vmem [resolvable:$true] %s82
      %88 = dma.hbm_to_vmem [thread:$0]  %s8, 2048, %s83, [#allocation11], 128, 128, 8
    $region37: #{tpu_custom_call.1} parent=1 // pred_fallthru
      _
    // Predicated region
    $region38: #{tpu_custom_call.1} parent=1 // pred_check
      _
    $region39: #{tpu_custom_call.1} parent=1 // pred_check_branch
      %90 = sbr.rel (0) target = $region41
    $region40: #{tpu_custom_call.1} parent=1 // pred_region
      _
    $region41: #{tpu_custom_call.1} parent=1 // pred_fallthru
      _
    // Predicated region
    $region42: #{tpu_custom_call.1} parent=1 // pred_check
      _
    $region43: #{tpu_custom_call.1} parent=1 // pred_check_branch
      %92 = sbr.rel (0) target = $region45
    $region44: #{tpu_custom_call.1} parent=1 // pred_region
      %s94 = ssub.s32 2048, 2048
      %95 = vsyncadd [#allocation14], %s94
      %s96 = sshll.u32 [#allocation13], 4
      %s97 = int_to_ptr.vmem [resolvable:$true] %s96
      %102 = dma.hbm_to_vmem [thread:$0]  %s10, 2048, %s97, [#allocation14], 128, 128, 8
    $region45: #{tpu_custom_call.1} parent=1 // pred_fallthru
      _
    // Predicated region
    $region46: #{tpu_custom_call.1} parent=1 // pred_check
      _
    $region47: #{tpu_custom_call.1} parent=1 // pred_check_branch
      %104 = sbr.rel (0) target = $region49
    $region48: #{tpu_custom_call.1} parent=1 // pred_region
      %105 = dma.done [#allocation5], 256
    $region49: #{tpu_custom_call.1} parent=1 // pred_fallthru
      _
    // Predicated region
    $region50: #{tpu_custom_call.1} parent=1 // pred_check
      _
    $region51: #{tpu_custom_call.1} parent=1 // pred_check_branch
      %107 = sbr.rel (0) target = $region53
    $region52: #{tpu_custom_call.1} parent=1 // pred_region
      %108 = dma.done [#allocation8], 10240
    $region53: #{tpu_custom_call.1} parent=1 // pred_fallthru
      _
    // Predicated region
    $region54: #{tpu_custom_call.1} parent=1 // pred_check
      _
    $region55: #{tpu_custom_call.1} parent=1 // pred_check_branch
      %110 = sbr.rel (0) target = $region57
    $region56: #{tpu_custom_call.1} parent=1 // pred_region
      %111 = dma.done [#allocation8], 4096
    $region57: #{tpu_custom_call.1} parent=1 // pred_fallthru
      _
    // Predicated region
    $region58: #{tpu_custom_call.1} parent=1 // pred_check
      _
    $region59: #{tpu_custom_call.1} parent=1 // pred_check_branch
      %113 = sbr.rel (0) target = $region61
    $region60: #{tpu_custom_call.1} parent=1 // pred_region
      %114 = dma.done [#allocation11], 2048
    $region61: #{tpu_custom_call.1} parent=1 // pred_fallthru
      _
    // Predicated region
    $region62: #{tpu_custom_call.1} parent=1 // pred_check
      _
    $region63: #{tpu_custom_call.1} parent=1 // pred_check_branch
      %116 = sbr.rel (0) target = $region65
    $region64: #{tpu_custom_call.1} parent=1 // pred_region
      %117 = dma.done [#allocation11], 2048
    $region65: #{tpu_custom_call.1} parent=1 // pred_fallthru
      _
    // Predicated region
    $region66: #{tpu_custom_call.1} parent=1 // pred_check
      _
    $region67: #{tpu_custom_call.1} parent=1 // pred_check_branch
      %119 = sbr.rel (0) target = $region69
    $region68: #{tpu_custom_call.1} parent=1 // pred_region
      %120 = dma.done [#allocation14], 2048
    $region69: #{tpu_custom_call.1} parent=1 // pred_fallthru
      _
    %v121 = vld [vmem:[%s0] sm:$0xff]
    %v122 = vld [vmem:[%s0 + $0x8] sm:$0xff]
    %v123 = vld [vmem:[%s0 + $0x10] sm:$0xff]
    %v124 = vld [vmem:[%s0 + $0x18] sm:$0xff]
    %v125 = vlaneseq
    %v126 = vand.u32 %v125, 127
    %127 = vset.pattern.permute.xlu0 0
    %128 = vperm.xlu0 %127, %v121
    %v129 = vpop.permute.xlu0 %128
    %130 = vset.pattern.permute.xlu0 0
    %131 = vperm.xlu0 %130, %v122
    %v132 = vpop.permute.xlu0 %131
    %133 = vset.pattern.permute.xlu0 0
    %134 = vperm.xlu0 %133, %v123
    %v135 = vpop.permute.xlu0 %134
    %136 = vset.pattern.permute.xlu0 0
    %137 = vperm.xlu0 %136, %v124
    %v138 = vpop.permute.xlu0 %137
    %vm139 = vcmp.eq.s32.totalorder %v129, %v126
    %vm140 = vcmp.eq.s32.totalorder %v132, %v126
    %vm141 = vcmp.eq.s32.totalorder %v135, %v126
    %vm142 = vcmp.eq.s32.totalorder %v138, %v126
    %v143 = vsel %vm139, 1, 0
    %v144 = vsel %vm140, 1, 0
    %v145 = vsel %vm141, 1, 0
    %v146 = vsel %vm142, 1, 0
    %v147 = vcvt.s32.f32 %v143
    %v148 = vcvt.s32.f32 %v144
    %v149 = vcvt.s32.f32 %v145
    %v150 = vcvt.s32.f32 %v146
    %v151 = vld [vmem:[#allocation4] sm:$0xff]
    %v152 = vld [vmem:[#allocation4 + $0x8] sm:$0xff]
    %v153 = vld [vmem:[%s1] sm:$0xff]
    %v154 = vld [vmem:[%s1 + $0x8] sm:$0xff]
    %v155 = vld [vmem:[%s1 + $0x10] sm:$0xff]
    %v156 = vld [vmem:[%s1 + $0x18] sm:$0xff]
    %vm157 = vcmask 261120
    %v159 = vsel %vm157, %v147, 0
    %v162 = vsel %vm157, %v148, 0
    %v165 = vsel %vm157, %v149, 0
    %v168 = vsel %vm157, %v150, 0
    %170 = vmatprep.subr.mxu0 0.0
    %171 = vmatpush1.msra.mxu0 %v153
    %172 = vmatprep.subr.mxu0 0.0
    %173 = vmatpush1.msra.mxu0 %v154
    %174 = vmatprep.subr.mxu0 0.0
    %175 = vmatpush1.msra.mxu0 %v155
    %176 = vmatprep.subr.mxu0 0.0
    %177 = vmatpush1.msra.mxu0 %v156
    %178 = vmatprep.subr.mxu0 0.0
    %179 = vmatpush1.msra.mxu0 0.0
    %180 = vmatprep.subr.mxu0 0.0
    %181 = vmatpush1.msra.mxu0 0.0
    %182 = vmatprep.subr.mxu0 0.0
    %183 = vmatpush1.msra.mxu0 0.0
    %184 = vmatprep.subr.mxu0 0.0
    %185 = vmatpush1.msra.mxu0 0.0
    %186 = vmatprep.subr.mxu0 0.0
    %187 = vmatpush1.msra.mxu0 0.0
    %188 = vmatprep.subr.mxu0 0.0
    %189 = vmatpush1.msra.mxu0 0.0
    %190 = vmatprep.subr.mxu0 0.0
    %191 = vmatpush1.msra.mxu0 0.0
    %192 = vmatprep.subr.mxu0 0.0
    %193 = vmatpush1.msra.mxu0 0.0
    %194 = vmatprep.subr.mxu0 0.0
    %195 = vmatpush1.msra.mxu0 0.0
    %196 = vmatprep.subr.mxu0 0.0
    %197 = vmatpush1.msra.mxu0 0.0
    %198 = vmatprep.subr.mxu0 0.0
    %199 = vmatpush1.msra.mxu0 0.0
    %200 = vmatprep.subr.mxu0 0.0
    %201 = vmatpush1.msra.mxu0 0.0
    %202 = vmatprep.subr.mxu0 0.0
    %203 = vmatpush1.msra.mxu0 0.0
    %204 = vmatprep.subr.mxu0 0.0
    %205 = vmatpush1.msra.mxu0 0.0
    %206 = vmatprep.subr.mxu0 0.0
    %207 = vmatpush1.msra.mxu0 0.0
    %208 = vmatprep.subr.mxu0 0.0
    %209 = vmatpush1.msra.mxu0 0.0
    %210 = vmatprep.subr.mxu0 0.0
    %211 = vmatpush1.msra.mxu0 0.0
    %212 = vmatprep.subr.mxu0 0.0
    %213 = vmatpush1.msra.mxu0 0.0
    %214 = vmatprep.subr.mxu0 0.0
    %215 = vmatpush1.msra.mxu0 0.0
    %216 = vmatprep.subr.mxu0 0.0
    %217 = vmatpush1.msra.mxu0 0.0
    %218 = vmatprep.subr.mxu0 0.0
    %219 = vmatpush1.msra.mxu0 0.0
    %220 = vmatprep.subr.mxu0 0.0
    %221 = vmatpush1.msra.mxu0 0.0
    %222 = vmatprep.subr.mxu0 0.0
    %223 = vmatpush1.msra.mxu0 0.0
    %224 = vmatprep.subr.mxu0 0.0
    %225 = vmatpush1.msra.mxu0 0.0
    %226 = vmatprep.subr.mxu0 0.0
    %227 = vmatpush1.msra.mxu0 0.0
    %228 = vmatprep.subr.mxu0 0.0
    %229 = vmatpush1.msra.mxu0 0.0
    %230 = vmatprep.subr.mxu0 0.0
    %231 = vmatpush1.msra.mxu0 0.0
    %232 = vmatprep.subr.mxu0 0.0
    %233 = vmatpush1.msra.mxu0 0.0
    %234 = vmatprep.mubr.f32.mxu0 0.0
    %235 = vmatmul.mubr.f32.gmra.mrb[0].mxu0 %v159
    %v236 = vpop.f32.mrb[0].mxu0
    %v237 = vadd.f32 %v151, %v236
    %v238 = vpop.f32.mrb[0].mxu0
    %239 = vmatprep.mubr.f32.mxu0 0.0
    %240 = vmatmul.mubr.f32.gmra.mrb[0].mxu0 %v162
    %v241 = vpop.f32.mrb[0].mxu0
    %v242 = vadd.f32 %v152, %v241
    %v243 = vpop.f32.mrb[0].mxu0
    %244 = vmatprep.mubr.f32.mxu0 0.0
    %245 = vmatmul.mubr.f32.gmra.mrb[0].mxu0 %v165
    %v246 = vpop.f32.mrb[0].mxu0
    %v247 = vadd.f32 %v151, %v246
    %v248 = vpop.f32.mrb[0].mxu0
    %249 = vmatprep.mubr.f32.mxu0 0.0
    %250 = vmatmul.mubr.f32.gmra.mrb[0].mxu0 %v168
    %v251 = vpop.f32.mrb[0].mxu0
    %v252 = vadd.f32 %v152, %v251
    %v253 = vpop.f32.mrb[0].mxu0
    %254 = vdwg.mxu0
    %255 = vst [vmem:[#allocation2] sm:$0xff] %v237
    %256 = vst [vmem:[#allocation2 + $0x8] sm:$0xff] %v242
    %257 = vst [vmem:[#allocation2 + $0x10] sm:$0xff] %v247
    %258 = vst [vmem:[#allocation2 + $0x18] sm:$0xff] %v252
    %v259 = vld [vmem:[#allocation7 + $0x8] sm:$0xff]
    %v260 = vld [vmem:[#allocation7 + $0x10] sm:$0xff]
    %v261 = vld [vmem:[#allocation7 + $0x18] sm:$0xff]
    %v262 = vld [vmem:[#allocation7 + $0x20] sm:$0xff]
    %v263 = vld [vmem:[#allocation7 + $0x30] sm:$0xff]
    %v264 = vld [vmem:[#allocation7 + $0x38] sm:$0xff]
    %v265 = vld [vmem:[#allocation7 + $0x40] sm:$0xff]
    %v266 = vld [vmem:[#allocation7 + $0x48] sm:$0xff]
    %v267 = vld [vmem:[#allocation7 + $0x58] sm:$0xff]
    %v268 = vld [vmem:[#allocation7 + $0x60] sm:$0xff]
    %v269 = vld [vmem:[#allocation7 + $0x68] sm:$0xff]
    %v270 = vld [vmem:[#allocation7 + $0x70] sm:$0xff]
    %v271 = vld [vmem:[#allocation7 + $0x80] sm:$0xff]
    %v272 = vld [vmem:[#allocation7 + $0x88] sm:$0xff]
    %v273 = vld [vmem:[#allocation7 + $0x90] sm:$0xff]
    %v274 = vld [vmem:[#allocation7 + $0x98] sm:$0xff]
    %v275 = vld [vmem:[#allocation7 + $0xa8] sm:$0xff]
    %v276 = vld [vmem:[#allocation7 + $0xb0] sm:$0xff]
    %v277 = vld [vmem:[#allocation7 + $0xb8] sm:$0xff]
    %v278 = vld [vmem:[#allocation7 + $0xc0] sm:$0xff]
    %v279 = vld [vmem:[#allocation7 + $0xd0] sm:$0xff]
    %v280 = vld [vmem:[#allocation7 + $0xd8] sm:$0xff]
    %v281 = vld [vmem:[#allocation7 + $0xe0] sm:$0xff]
    %v282 = vld [vmem:[#allocation7 + $0xe8] sm:$0xff]
    %v283 = vld [vmem:[#allocation7 + $0xf8] sm:$0xff]
    %v284 = vld [vmem:[#allocation7 + $0x100] sm:$0xff]
    %v285 = vld [vmem:[#allocation7 + $0x108] sm:$0xff]
    %v286 = vld [vmem:[#allocation7 + $0x110] sm:$0xff]
    %v287 = vld [vmem:[#allocation7 + $0x120] sm:$0xff]
    %v288 = vld [vmem:[#allocation7 + $0x128] sm:$0xff]
    %v289 = vld [vmem:[#allocation7 + $0x130] sm:$0xff]
    %v290 = vld [vmem:[#allocation7 + $0x138] sm:$0xff]
    %v291 = vld [vmem:[#allocation7 + $0x148] sm:$0xff]
    %v292 = vld [vmem:[#allocation7 + $0x150] sm:$0xff]
    %v293 = vld [vmem:[#allocation7 + $0x158] sm:$0xff]
    %v294 = vld [vmem:[#allocation7 + $0x160] sm:$0xff]
    %v295 = vld [vmem:[#allocation7 + $0x170] sm:$0xff]
    %v296 = vld [vmem:[#allocation7 + $0x178] sm:$0xff]
    %v297 = vld [vmem:[#allocation7 + $0x180] sm:$0xff]
    %v298 = vld [vmem:[#allocation7 + $0x188] sm:$0xff]
    %v299 = vld [vmem:[#allocation7 + $0x198] sm:$0xff]
    %v300 = vld [vmem:[#allocation7 + $0x1a0] sm:$0xff]
    %v301 = vld [vmem:[#allocation7 + $0x1a8] sm:$0xff]
    %v302 = vld [vmem:[#allocation7 + $0x1b0] sm:$0xff]
    %v303 = vld [vmem:[#allocation7 + $0x1c0] sm:$0xff]
    %v304 = vld [vmem:[#allocation7 + $0x1c8] sm:$0xff]
    %v305 = vld [vmem:[#allocation7 + $0x1d0] sm:$0xff]
    %v306 = vld [vmem:[#allocation7 + $0x1d8] sm:$0xff]
    %v307 = vld [vmem:[#allocation7 + $0x1e8] sm:$0xff]
    %v308 = vld [vmem:[#allocation7 + $0x1f0] sm:$0xff]
    %v309 = vld [vmem:[#allocation7 + $0x1f8] sm:$0xff]
    %v310 = vld [vmem:[#allocation7 + $0x200] sm:$0xff]
    %v311 = vld [vmem:[#allocation7 + $0x210] sm:$0xff]
    %v312 = vld [vmem:[#allocation7 + $0x218] sm:$0xff]
    %v313 = vld [vmem:[#allocation7 + $0x220] sm:$0xff]
    %v314 = vld [vmem:[#allocation7 + $0x228] sm:$0xff]
    %v315 = vld [vmem:[#allocation7 + $0x238] sm:$0xff]
    %v316 = vld [vmem:[#allocation7 + $0x240] sm:$0xff]
    %v317 = vld [vmem:[#allocation7 + $0x248] sm:$0xff]
    %v318 = vld [vmem:[#allocation7 + $0x250] sm:$0xff]
    %v319 = vld [vmem:[#allocation7 + $0x260] sm:$0xff]
    %v320 = vld [vmem:[#allocation7 + $0x268] sm:$0xff]
    %v321 = vld [vmem:[#allocation7 + $0x270] sm:$0xff]
    %v322 = vld [vmem:[#allocation7 + $0x278] sm:$0xff]
    %323 = vmatprep.subr.mxu0 %v260
    %324 = vmatpush1.msra.mxu0 %v259
    %325 = vmatprep.subr.mxu0 %v264
    %326 = vmatpush1.msra.mxu0 %v263
    %327 = vmatprep.subr.mxu0 %v268
    %328 = vmatpush1.msra.mxu0 %v267
    %329 = vmatprep.subr.mxu0 %v272
    %330 = vmatpush1.msra.mxu0 %v271
    %331 = vmatprep.subr.mxu0 %v276
    %332 = vmatpush1.msra.mxu0 %v275
    %333 = vmatprep.subr.mxu0 %v280
    %334 = vmatpush1.msra.mxu0 %v279
    %335 = vmatprep.subr.mxu0 %v284
    %336 = vmatpush1.msra.mxu0 %v283
    %337 = vmatprep.subr.mxu0 %v288
    %338 = vmatpush1.msra.mxu0 %v287
    %339 = vmatprep.subr.mxu0 %v292
    %340 = vmatpush1.msra.mxu0 %v291
    %341 = vmatprep.subr.mxu0 %v296
    %342 = vmatpush1.msra.mxu0 %v295
    %343 = vmatprep.subr.mxu0 %v300
    %344 = vmatpush1.msra.mxu0 %v299
    %345 = vmatprep.subr.mxu0 %v304
    %346 = vmatpush1.msra.mxu0 %v303
    %347 = vmatprep.subr.mxu0 %v308
    %348 = vmatpush1.msra.mxu0 %v307
    %349 = vmatprep.subr.mxu0 %v312
    %350 = vmatpush1.msra.mxu0 %v311
    %351 = vmatprep.subr.mxu0 %v316
    %352 = vmatpush1.msra.mxu0 %v315
    %353 = vmatprep.subr.mxu0 %v320
    %354 = vmatpush1.msra.mxu0 %v319
    %355 = vmatprep.subr.mxu0 0.0
    %356 = vmatpush1.msra.mxu0 0.0
    %357 = vmatprep.subr.mxu0 0.0
    %358 = vmatpush1.msra.mxu0 0.0
    %359 = vmatprep.subr.mxu0 0.0
    %360 = vmatpush1.msra.mxu0 0.0
    %361 = vmatprep.subr.mxu0 0.0
    %362 = vmatpush1.msra.mxu0 0.0
    %363 = vmatprep.subr.mxu0 0.0
    %364 = vmatpush1.msra.mxu0 0.0
    %365 = vmatprep.subr.mxu0 0.0
    %366 = vmatpush1.msra.mxu0 0.0
    %367 = vmatprep.subr.mxu0 0.0
    %368 = vmatpush1.msra.mxu0 0.0
    %369 = vmatprep.subr.mxu0 0.0
    %370 = vmatpush1.msra.mxu0 0.0
    %371 = vmatprep.subr.mxu0 0.0
    %372 = vmatpush1.msra.mxu0 0.0
    %373 = vmatprep.subr.mxu0 0.0
    %374 = vmatpush1.msra.mxu0 0.0
    %375 = vmatprep.subr.mxu0 0.0
    %376 = vmatpush1.msra.mxu0 0.0
    %377 = vmatprep.subr.mxu0 0.0
    %378 = vmatpush1.msra.mxu0 0.0
    %379 = vmatprep.subr.mxu0 0.0
    %380 = vmatpush1.msra.mxu0 0.0
    %381 = vmatprep.subr.mxu0 0.0
    %382 = vmatpush1.msra.mxu0 0.0
    %383 = vmatprep.subr.mxu0 0.0
    %384 = vmatpush1.msra.mxu0 0.0
    %385 = vmatprep.subr.mxu0 0.0
    %386 = vmatpush1.msra.mxu0 0.0
    %387 = vmatprep.mubr.f32.mxu0 0.0
    %388 = vmatmul.mubr.f32.gmra.mrb[0].mxu0 %v237
    %v389 = vpop.f32.mrb[0].mxu0
    %v390 = vadd.f32 0.0, %v389
    %v391 = vpop.f32.mrb[0].mxu0
    %v392 = vadd.f32 0.0, %v391
    %393 = vmatprep.mubr.f32.mxu0 0.0
    %394 = vmatmul.mubr.f32.gmra.mrb[0].mxu0 %v242
    %v395 = vpop.f32.mrb[0].mxu0
    %v396 = vadd.f32 0.0, %v395
    %v397 = vpop.f32.mrb[0].mxu0
    %v398 = vadd.f32 0.0, %v397
    %399 = vmatprep.mubr.f32.mxu0 0.0
    %400 = vmatmul.mubr.f32.gmra.mrb[0].mxu0 %v247
    %v401 = vpop.f32.mrb[0].mxu0
    %v402 = vadd.f32 0.0, %v401
    %v403 = vpop.f32.mrb[0].mxu0
    %v404 = vadd.f32 0.0, %v403
    %405 = vmatprep.mubr.f32.mxu0 0.0
    %406 = vmatmul.mubr.f32.gmra.mrb[0].mxu0 %v252
    %v407 = vpop.f32.mrb[0].mxu0
    %v408 = vadd.f32 0.0, %v407
    %v409 = vpop.f32.mrb[0].mxu0
    %v410 = vadd.f32 0.0, %v409
    %411 = vdwg.mxu0
    %412 = vmatprep.subr.mxu0 %v262
    %413 = vmatpush1.msra.mxu0 %v261
    %414 = vmatprep.subr.mxu0 %v266
    %415 = vmatpush1.msra.mxu0 %v265
    %416 = vmatprep.subr.mxu0 %v270
    %417 = vmatpush1.msra.mxu0 %v269
    %418 = vmatprep.subr.mxu0 %v274
    %419 = vmatpush1.msra.mxu0 %v273
    %420 = vmatprep.subr.mxu0 %v278
    %421 = vmatpush1.msra.mxu0 %v277
    %422 = vmatprep.subr.mxu0 %v282
    %423 = vmatpush1.msra.mxu0 %v281
    %424 = vmatprep.subr.mxu0 %v286
    %425 = vmatpush1.msra.mxu0 %v285
    %426 = vmatprep.subr.mxu0 %v290
    %427 = vmatpush1.msra.mxu0 %v289
    %428 = vmatprep.subr.mxu0 %v294
    %429 = vmatpush1.msra.mxu0 %v293
    %430 = vmatprep.subr.mxu0 %v298
    %431 = vmatpush1.msra.mxu0 %v297
    %432 = vmatprep.subr.mxu0 %v302
    %433 = vmatpush1.msra.mxu0 %v301
    %434 = vmatprep.subr.mxu0 %v306
    %435 = vmatpush1.msra.mxu0 %v305
    %436 = vmatprep.subr.mxu0 %v310
    %437 = vmatpush1.msra.mxu0 %v309
    %438 = vmatprep.subr.mxu0 %v314
    %439 = vmatpush1.msra.mxu0 %v313
    %440 = vmatprep.subr.mxu0 %v318
    %441 = vmatpush1.msra.mxu0 %v317
    %442 = vmatprep.subr.mxu0 %v322
    %443 = vmatpush1.msra.mxu0 %v321
    %444 = vmatprep.subr.mxu0 0.0
    %445 = vmatpush1.msra.mxu0 0.0
    %446 = vmatprep.subr.mxu0 0.0
    %447 = vmatpush1.msra.mxu0 0.0
    %448 = vmatprep.subr.mxu0 0.0
    %449 = vmatpush1.msra.mxu0 0.0
    %450 = vmatprep.subr.mxu0 0.0
    %451 = vmatpush1.msra.mxu0 0.0
    %452 = vmatprep.subr.mxu0 0.0
    %453 = vmatpush1.msra.mxu0 0.0
    %454 = vmatprep.subr.mxu0 0.0
    %455 = vmatpush1.msra.mxu0 0.0
    %456 = vmatprep.subr.mxu0 0.0
    %457 = vmatpush1.msra.mxu0 0.0
    %458 = vmatprep.subr.mxu0 0.0
    %459 = vmatpush1.msra.mxu0 0.0
    %460 = vmatprep.subr.mxu0 0.0
    %461 = vmatpush1.msra.mxu0 0.0
    %462 = vmatprep.subr.mxu0 0.0
    %463 = vmatpush1.msra.mxu0 0.0
    %464 = vmatprep.subr.mxu0 0.0
    %465 = vmatpush1.msra.mxu0 0.0
    %466 = vmatprep.subr.mxu0 0.0
    %467 = vmatpush1.msra.mxu0 0.0
    %468 = vmatprep.subr.mxu0 0.0
    %469 = vmatpush1.msra.mxu0 0.0
    %470 = vmatprep.subr.mxu0 0.0
    %471 = vmatpush1.msra.mxu0 0.0
    %472 = vmatprep.subr.mxu0 0.0
    %473 = vmatpush1.msra.mxu0 0.0
    %474 = vmatprep.subr.mxu0 0.0
    %475 = vmatpush1.msra.mxu0 0.0
    %476 = vmatprep.mubr.f32.mxu0 0.0
    %477 = vmatmul.mubr.f32.gmra.mrb[0].mxu0 %v237
    %v478 = vpop.f32.mrb[0].mxu0
    %v479 = vadd.f32 0.0, %v478
    %v480 = vpop.f32.mrb[0].mxu0
    %v481 = vadd.f32 0.0, %v480
    %482 = vmatprep.mubr.f32.mxu0 0.0
    %483 = vmatmul.mubr.f32.gmra.mrb[0].mxu0 %v242
    %v484 = vpop.f32.mrb[0].mxu0
    %v485 = vadd.f32 0.0, %v484
    %v486 = vpop.f32.mrb[0].mxu0
    %v487 = vadd.f32 0.0, %v486
    %488 = vmatprep.mubr.f32.mxu0 0.0
    %489 = vmatmul.mubr.f32.gmra.mrb[0].mxu0 %v247
    %v490 = vpop.f32.mrb[0].mxu0
    %v491 = vadd.f32 0.0, %v490
    %v492 = vpop.f32.mrb[0].mxu0
    %v493 = vadd.f32 0.0, %v492
    %494 = vmatprep.mubr.f32.mxu0 0.0
    %495 = vmatmul.mubr.f32.gmra.mrb[0].mxu0 %v252
    %v496 = vpop.f32.mrb[0].mxu0
    %v497 = vadd.f32 0.0, %v496
    %v498 = vpop.f32.mrb[0].mxu0
    %v499 = vadd.f32 0.0, %v498
    %500 = vdwg.mxu0
    %501 = vst [vmem:[#allocation3] sm:$0xff] %v390
    %502 = vst [vmem:[#allocation3 + $0x8] sm:$0xff] %v392
    %503 = vst [vmem:[#allocation3 + $0x10] sm:$0xff] %v479
    %504 = vst [vmem:[#allocation3 + $0x18] sm:$0xff] %v481
    %505 = vst [vmem:[#allocation3 + $0x20] sm:$0xff] %v396
    %506 = vst [vmem:[#allocation3 + $0x28] sm:$0xff] %v398
    %507 = vst [vmem:[#allocation3 + $0x30] sm:$0xff] %v485
    %508 = vst [vmem:[#allocation3 + $0x38] sm:$0xff] %v487
    %509 = vst [vmem:[#allocation3 + $0x40] sm:$0xff] %v402
    %510 = vst [vmem:[#allocation3 + $0x48] sm:$0xff] %v404
    %511 = vst [vmem:[#allocation3 + $0x50] sm:$0xff] %v491
    %512 = vst [vmem:[#allocation3 + $0x58] sm:$0xff] %v493
    %513 = vst [vmem:[#allocation3 + $0x60] sm:$0xff] %v408
    %514 = vst [vmem:[#allocation3 + $0x68] sm:$0xff] %v410
    %515 = vst [vmem:[#allocation3 + $0x70] sm:$0xff] %v497
    %516 = vst [vmem:[#allocation3 + $0x78] sm:$0xff] %v499
    %v518 = vrot.slane %v237, 7
    %v521 = vrot.slane %v247, 6
    %vm523 = vcmask 1040384
    %v524 = vsel %vm523, %v518, %v521
    %v525 = vlaneseq
    %v526 = vshrl.u32 %v525, 7
    %v527 = vadd.s32 %v526, 8
    %v528 = vadd.s32 %v526, 16
    %v529 = vadd.s32 %v526, 24
    %v530 = vshra.s32 %v526, 4
    %v531 = vshra.s32 %v527, 4
    %v532 = vshra.s32 %v528, 4
    %v533 = vshra.s32 %v529, 4
    %v534 = vshra.s32 %v126, 4
    %vm535 = vcmp.eq.s32.totalorder %v530, %v534
    %vm536 = vcmp.eq.s32.totalorder %v531, %v534
    %vm537 = vcmp.eq.s32.totalorder %v532, %v534
    %vm538 = vcmp.eq.s32.totalorder %v533, %v534
    %v539 = vand.u32 %v126, 15
    %vm540 = vcmp.eq.s32.totalorder %v526, %v534
    %v541 = vld [vmem:[#allocation7] sm:$0xff]
    %v542 = vld [vmem:[#allocation7 + $0x8] sm:$0xff]
    %v543 = vld [vmem:[#allocation7 + $0x10] sm:$0xff]
    %v544 = vld [vmem:[#allocation7 + $0x18] sm:$0xff]
    %v545 = vld [vmem:[#allocation7 + $0x20] sm:$0xff]
    %v546 = vld [vmem:[#allocation7 + $0x28] sm:$0xff]
    %v547 = vld [vmem:[#allocation7 + $0x30] sm:$0xff]
    %v548 = vld [vmem:[#allocation7 + $0x38] sm:$0xff]
    %v549 = vld [vmem:[#allocation7 + $0x40] sm:$0xff]
    %v550 = vld [vmem:[#allocation7 + $0x48] sm:$0xff]
    %v551 = vld [vmem:[#allocation7 + $0x50] sm:$0xff]
    %v552 = vld [vmem:[#allocation7 + $0x58] sm:$0xff]
    %v553 = vld [vmem:[#allocation7 + $0x60] sm:$0xff]
    %v554 = vld [vmem:[#allocation7 + $0x68] sm:$0xff]
    %v555 = vld [vmem:[#allocation7 + $0x70] sm:$0xff]
    %v556 = vld [vmem:[#allocation7 + $0x78] sm:$0xff]
    %v557 = vld [vmem:[#allocation7 + $0x80] sm:$0xff]
    %v558 = vld [vmem:[#allocation7 + $0x88] sm:$0xff]
    %v559 = vld [vmem:[#allocation7 + $0x90] sm:$0xff]
    %v560 = vld [vmem:[#allocation7 + $0x98] sm:$0xff]
    %v561 = vld [vmem:[#allocation7 + $0xa0] sm:$0xff]
    %v562 = vld [vmem:[#allocation7 + $0xa8] sm:$0xff]
    %v563 = vld [vmem:[#allocation7 + $0xb0] sm:$0xff]
    %v564 = vld [vmem:[#allocation7 + $0xb8] sm:$0xff]
    %v565 = vld [vmem:[#allocation7 + $0xc0] sm:$0xff]
    %v566 = vld [vmem:[#allocation7 + $0xc8] sm:$0xff]
    %v567 = vld [vmem:[#allocation7 + $0xd0] sm:$0xff]
    %v568 = vld [vmem:[#allocation7 + $0xd8] sm:$0xff]
    %v569 = vld [vmem:[#allocation7 + $0xe0] sm:$0xff]
    %v570 = vld [vmem:[#allocation7 + $0xe8] sm:$0xff]
    %v571 = vld [vmem:[#allocation7 + $0xf0] sm:$0xff]
    %v572 = vld [vmem:[#allocation7 + $0xf8] sm:$0xff]
    %v573 = vld [vmem:[#allocation7 + $0x100] sm:$0xff]
    %v574 = vld [vmem:[#allocation7 + $0x108] sm:$0xff]
    %v575 = vld [vmem:[#allocation7 + $0x110] sm:$0xff]
    %v576 = vld [vmem:[#allocation7 + $0x118] sm:$0xff]
    %v577 = vld [vmem:[#allocation7 + $0x120] sm:$0xff]
    %v578 = vld [vmem:[#allocation7 + $0x128] sm:$0xff]
    %v579 = vld [vmem:[#allocation7 + $0x130] sm:$0xff]
    %v580 = vld [vmem:[#allocation7 + $0x138] sm:$0xff]
    %v581 = vld [vmem:[#allocation7 + $0x140] sm:$0xff]
    %v582 = vld [vmem:[#allocation7 + $0x148] sm:$0xff]
    %v583 = vld [vmem:[#allocation7 + $0x150] sm:$0xff]
    %v584 = vld [vmem:[#allocation7 + $0x158] sm:$0xff]
    %v585 = vld [vmem:[#allocation7 + $0x160] sm:$0xff]
    %v586 = vld [vmem:[#allocation7 + $0x168] sm:$0xff]
    %v587 = vld [vmem:[#allocation7 + $0x170] sm:$0xff]
    %v588 = vld [vmem:[#allocation7 + $0x178] sm:$0xff]
    %v589 = vld [vmem:[#allocation7 + $0x180] sm:$0xff]
    %v590 = vld [vmem:[#allocation7 + $0x188] sm:$0xff]
    %v591 = vld [vmem:[#allocation7 + $0x190] sm:$0xff]
    %v592 = vld [vmem:[#allocation7 + $0x198] sm:$0xff]
    %v593 = vld [vmem:[#allocation7 + $0x1a0] sm:$0xff]
    %v594 = vld [vmem:[#allocation7 + $0x1a8] sm:$0xff]
    %v595 = vld [vmem:[#allocation7 + $0x1b0] sm:$0xff]
    %v596 = vld [vmem:[#allocation7 + $0x1b8] sm:$0xff]
    %v597 = vld [vmem:[#allocation7 + $0x1c0] sm:$0xff]
    %v598 = vld [vmem:[#allocation7 + $0x1c8] sm:$0xff]
    %v599 = vld [vmem:[#allocation7 + $0x1d0] sm:$0xff]
    %v600 = vld [vmem:[#allocation7 + $0x1d8] sm:$0xff]
    %v601 = vld [vmem:[#allocation7 + $0x1e0] sm:$0xff]
    %v602 = vld [vmem:[#allocation7 + $0x1e8] sm:$0xff]
    %v603 = vld [vmem:[#allocation7 + $0x1f0] sm:$0xff]
    %v604 = vld [vmem:[#allocation7 + $0x1f8] sm:$0xff]
    %v605 = vld [vmem:[#allocation7 + $0x200] sm:$0xff]
    %v606 = vld [vmem:[#allocation7 + $0x208] sm:$0xff]
    %v607 = vld [vmem:[#allocation7 + $0x210] sm:$0xff]
    %v608 = vld [vmem:[#allocation7 + $0x218] sm:$0xff]
    %v609 = vld [vmem:[#allocation7 + $0x220] sm:$0xff]
    %v610 = vld [vmem:[#allocation7 + $0x228] sm:$0xff]
    %v611 = vld [vmem:[#allocation7 + $0x230] sm:$0xff]
    %v612 = vld [vmem:[#allocation7 + $0x238] sm:$0xff]
    %v613 = vld [vmem:[#allocation7 + $0x240] sm:$0xff]
    %v614 = vld [vmem:[#allocation7 + $0x248] sm:$0xff]
    %v615 = vld [vmem:[#allocation7 + $0x250] sm:$0xff]
    %v616 = vld [vmem:[#allocation7 + $0x258] sm:$0xff]
    %v617 = vld [vmem:[#allocation7 + $0x260] sm:$0xff]
    %v618 = vld [vmem:[#allocation7 + $0x268] sm:$0xff]
    %v619 = vld [vmem:[#allocation7 + $0x270] sm:$0xff]
    %v620 = vld [vmem:[#allocation7 + $0x278] sm:$0xff]
    %621 = vmatprep.subr.mxu0 %v542
    %622 = vmatpush1.msra.mxu0 %v541
    %623 = vmatprep.subr.mxu0 %v547
    %624 = vmatpush1.msra.mxu0 %v546
    %625 = vmatprep.subr.mxu0 %v552
    %626 = vmatpush1.msra.mxu0 %v551
    %627 = vmatprep.subr.mxu0 %v557
    %628 = vmatpush1.msra.mxu0 %v556
    %629 = vmatprep.subr.mxu0 %v562
    %630 = vmatpush1.msra.mxu0 %v561
    %631 = vmatprep.subr.mxu0 %v567
    %632 = vmatpush1.msra.mxu0 %v566
    %633 = vmatprep.subr.mxu0 %v572
    %634 = vmatpush1.msra.mxu0 %v571
    %635 = vmatprep.subr.mxu0 %v577
    %636 = vmatpush1.msra.mxu0 %v576
    %637 = vmatprep.subr.mxu0 %v582
    %638 = vmatpush1.msra.mxu0 %v581
    %639 = vmatprep.subr.mxu0 %v587
    %640 = vmatpush1.msra.mxu0 %v586
    %641 = vmatprep.subr.mxu0 %v592
    %642 = vmatpush1.msra.mxu0 %v591
    %643 = vmatprep.subr.mxu0 %v597
    %644 = vmatpush1.msra.mxu0 %v596
    %645 = vmatprep.subr.mxu0 %v602
    %646 = vmatpush1.msra.mxu0 %v601
    %647 = vmatprep.subr.mxu0 %v607
    %648 = vmatpush1.msra.mxu0 %v606
    %649 = vmatprep.subr.mxu0 %v612
    %650 = vmatpush1.msra.mxu0 %v611
    %651 = vmatprep.subr.mxu0 %v617
    %652 = vmatpush1.msra.mxu0 %v616
    %653 = vmatprep.subr.mxu0 0.0
    %654 = vmatpush1.msra.mxu0 0.0
    %655 = vmatprep.subr.mxu0 0.0
    %656 = vmatpush1.msra.mxu0 0.0
    %657 = vmatprep.subr.mxu0 0.0
    %658 = vmatpush1.msra.mxu0 0.0
    %659 = vmatprep.subr.mxu0 0.0
    %660 = vmatpush1.msra.mxu0 0.0
    %661 = vmatprep.subr.mxu0 0.0
    %662 = vmatpush1.msra.mxu0 0.0
    %663 = vmatprep.subr.mxu0 0.0
    %664 = vmatpush1.msra.mxu0 0.0
    %665 = vmatprep.subr.mxu0 0.0
    %666 = vmatpush1.msra.mxu0 0.0
    %667 = vmatprep.subr.mxu0 0.0
    %668 = vmatpush1.msra.mxu0 0.0
    %669 = vmatprep.subr.mxu0 0.0
    %670 = vmatpush1.msra.mxu0 0.0
    %671 = vmatprep.subr.mxu0 0.0
    %672 = vmatpush1.msra.mxu0 0.0
    %673 = vmatprep.subr.mxu0 0.0
    %674 = vmatpush1.msra.mxu0 0.0
    %675 = vmatprep.subr.mxu0 0.0
    %676 = vmatpush1.msra.mxu0 0.0
    %677 = vmatprep.subr.mxu0 0.0
    %678 = vmatpush1.msra.mxu0 0.0
    %679 = vmatprep.subr.mxu0 0.0
    %680 = vmatpush1.msra.mxu0 0.0
    %681 = vmatprep.subr.mxu0 0.0
    %682 = vmatpush1.msra.mxu0 0.0
    %683 = vmatprep.subr.mxu0 0.0
    %684 = vmatpush1.msra.mxu0 0.0
    %685 = vmatprep.mubr.f32.mxu0 0.0
    %686 = vmatmul.mubr.f32.gmra.mrb[0].mxu0 %v524
    %v687 = vpop.f32.mrb[0].mxu0
    %v688 = vadd.f32 0.0, %v687
    %v689 = vpop.f32.mrb[0].mxu0
    %v690 = vadd.f32 0.0, %v689
    %691 = vdwg.mxu0
    %692 = vmatprep.subr.mxu0 %v544
    %693 = vmatpush1.msra.mxu0 %v543
    %694 = vmatprep.subr.mxu0 %v549
    %695 = vmatpush1.msra.mxu0 %v548
    %696 = vmatprep.subr.mxu0 %v554
    %697 = vmatpush1.msra.mxu0 %v553
    %698 = vmatprep.subr.mxu0 %v559
    %699 = vmatpush1.msra.mxu0 %v558
    %700 = vmatprep.subr.mxu0 %v564
    %701 = vmatpush1.msra.mxu0 %v563
    %702 = vmatprep.subr.mxu0 %v569
    %703 = vmatpush1.msra.mxu0 %v568
    %704 = vmatprep.subr.mxu0 %v574
    %705 = vmatpush1.msra.mxu0 %v573
    %706 = vmatprep.subr.mxu0 %v579
    %707 = vmatpush1.msra.mxu0 %v578
    %708 = vmatprep.subr.mxu0 %v584
    %709 = vmatpush1.msra.mxu0 %v583
    %710 = vmatprep.subr.mxu0 %v589
    %711 = vmatpush1.msra.mxu0 %v588
    %712 = vmatprep.subr.mxu0 %v594
    %713 = vmatpush1.msra.mxu0 %v593
    %714 = vmatprep.subr.mxu0 %v599
    %715 = vmatpush1.msra.mxu0 %v598
    %716 = vmatprep.subr.mxu0 %v604
    %717 = vmatpush1.msra.mxu0 %v603
    %718 = vmatprep.subr.mxu0 %v609
    %719 = vmatpush1.msra.mxu0 %v608
    %720 = vmatprep.subr.mxu0 %v614
    %721 = vmatpush1.msra.mxu0 %v613
    %722 = vmatprep.subr.mxu0 %v619
    %723 = vmatpush1.msra.mxu0 %v618
    %724 = vmatprep.subr.mxu0 0.0
    %725 = vmatpush1.msra.mxu0 0.0
    %726 = vmatprep.subr.mxu0 0.0
    %727 = vmatpush1.msra.mxu0 0.0
    %728 = vmatprep.subr.mxu0 0.0
    %729 = vmatpush1.msra.mxu0 0.0
    %730 = vmatprep.subr.mxu0 0.0
    %731 = vmatpush1.msra.mxu0 0.0
    %732 = vmatprep.subr.mxu0 0.0
    %733 = vmatpush1.msra.mxu0 0.0
    %734 = vmatprep.subr.mxu0 0.0
    %735 = vmatpush1.msra.mxu0 0.0
    %736 = vmatprep.subr.mxu0 0.0
    %737 = vmatpush1.msra.mxu0 0.0
    %738 = vmatprep.subr.mxu0 0.0
    %739 = vmatpush1.msra.mxu0 0.0
    %740 = vmatprep.subr.mxu0 0.0
    %741 = vmatpush1.msra.mxu0 0.0
    %742 = vmatprep.subr.mxu0 0.0
    %743 = vmatpush1.msra.mxu0 0.0
    %744 = vmatprep.subr.mxu0 0.0
    %745 = vmatpush1.msra.mxu0 0.0
    %746 = vmatprep.subr.mxu0 0.0
    %747 = vmatpush1.msra.mxu0 0.0
    %748 = vmatprep.subr.mxu0 0.0
    %749 = vmatpush1.msra.mxu0 0.0
    %750 = vmatprep.subr.mxu0 0.0
    %751 = vmatpush1.msra.mxu0 0.0
    %752 = vmatprep.subr.mxu0 0.0
    %753 = vmatpush1.msra.mxu0 0.0
    %754 = vmatprep.subr.mxu0 0.0
    %755 = vmatpush1.msra.mxu0 0.0
    %756 = vmatprep.mubr.f32.mxu0 0.0
    %757 = vmatmul.mubr.f32.gmra.mrb[0].mxu0 %v524
    %v758 = vpop.f32.mrb[0].mxu0
    %v759 = vadd.f32 0.0, %v758
    %v760 = vpop.f32.mrb[0].mxu0
    %v761 = vadd.f32 0.0, %v760
    %762 = vdwg.mxu0
    %763 = vmatprep.subr.mxu0 0.0
    %764 = vmatpush1.msra.mxu0 %v545
    %765 = vmatprep.subr.mxu0 0.0
    %766 = vmatpush1.msra.mxu0 %v550
    %767 = vmatprep.subr.mxu0 0.0
    %768 = vmatpush1.msra.mxu0 %v555
    %769 = vmatprep.subr.mxu0 0.0
    %770 = vmatpush1.msra.mxu0 %v560
    %771 = vmatprep.subr.mxu0 0.0
    %772 = vmatpush1.msra.mxu0 %v565
    %773 = vmatprep.subr.mxu0 0.0
    %774 = vmatpush1.msra.mxu0 %v570
    %775 = vmatprep.subr.mxu0 0.0
    %776 = vmatpush1.msra.mxu0 %v575
    %777 = vmatprep.subr.mxu0 0.0
    %778 = vmatpush1.msra.mxu0 %v580
    %779 = vmatprep.subr.mxu0 0.0
    %780 = vmatpush1.msra.mxu0 %v585
    %781 = vmatprep.subr.mxu0 0.0
    %782 = vmatpush1.msra.mxu0 %v590
    %783 = vmatprep.subr.mxu0 0.0
    %784 = vmatpush1.msra.mxu0 %v595
    %785 = vmatprep.subr.mxu0 0.0
    %786 = vmatpush1.msra.mxu0 %v600
    %787 = vmatprep.subr.mxu0 0.0
    %788 = vmatpush1.msra.mxu0 %v605
    %789 = vmatprep.subr.mxu0 0.0
    %790 = vmatpush1.msra.mxu0 %v610
    %791 = vmatprep.subr.mxu0 0.0
    %792 = vmatpush1.msra.mxu0 %v615
    %793 = vmatprep.subr.mxu0 0.0
    %794 = vmatpush1.msra.mxu0 %v620
    %795 = vmatprep.subr.mxu0 0.0
    %796 = vmatpush1.msra.mxu0 0.0
    %797 = vmatprep.subr.mxu0 0.0
    %798 = vmatpush1.msra.mxu0 0.0
    %799 = vmatprep.subr.mxu0 0.0
    %800 = vmatpush1.msra.mxu0 0.0
    %801 = vmatprep.subr.mxu0 0.0
    %802 = vmatpush1.msra.mxu0 0.0
    %803 = vmatprep.subr.mxu0 0.0
    %804 = vmatpush1.msra.mxu0 0.0
    %805 = vmatprep.subr.mxu0 0.0
    %806 = vmatpush1.msra.mxu0 0.0
    %807 = vmatprep.subr.mxu0 0.0
    %808 = vmatpush1.msra.mxu0 0.0
    %809 = vmatprep.subr.mxu0 0.0
    %810 = vmatpush1.msra.mxu0 0.0
    %811 = vmatprep.subr.mxu0 0.0
    %812 = vmatpush1.msra.mxu0 0.0
    %813 = vmatprep.subr.mxu0 0.0
    %814 = vmatpush1.msra.mxu0 0.0
    %815 = vmatprep.subr.mxu0 0.0
    %816 = vmatpush1.msra.mxu0 0.0
    %817 = vmatprep.subr.mxu0 0.0
    %818 = vmatpush1.msra.mxu0 0.0
    %819 = vmatprep.subr.mxu0 0.0
    %820 = vmatpush1.msra.mxu0 0.0
    %821 = vmatprep.subr.mxu0 0.0
    %822 = vmatpush1.msra.mxu0 0.0
    %823 = vmatprep.subr.mxu0 0.0
    %824 = vmatpush1.msra.mxu0 0.0
    %825 = vmatprep.subr.mxu0 0.0
    %826 = vmatpush1.msra.mxu0 0.0
    %827 = vmatprep.mubr.f32.mxu0 0.0
    %828 = vmatmul.mubr.f32.gmra.mrb[0].mxu0 %v524
    %v829 = vpop.f32.mrb[0].mxu0
    %v830 = vadd.f32 0.0, %v829
    %v831 = vpop.f32.mrb[0].mxu0
    %832 = vdwg.mxu0
    %v837 = vcombine.low %v690, %v759
    %v838 = vcombine.low %v761, %v830
    %v840 = vunpack.c.l.s4 1966171168
    %v841 = vunpack.c.0.s8 %v840
    %v842 = vlaneseq
    %v843 = vshrl.u32 %v842, 7
    %v844 = vsub.s32 %v841, %v843
    %v845 = vrot.slane %v837, %v844
    %v847 = vunpack.c.l.s4 1966171168
    %v848 = vunpack.c.0.s8 %v847
    %v849 = vlaneseq
    %v850 = vshrl.u32 %v849, 7
    %v851 = vsub.s32 %v848, %v850
    %v852 = vrot.slane %v838, %v851
    %v853 = vcombine.low %v845, %v852
    %v855 = vunpack.c.l.s4 1966171168
    %v856 = vunpack.c.0.s8 %v855
    %v857 = vlaneseq
    %v858 = vshrl.u32 %v857, 7
    %v859 = vsub.s32 %v856, %v858
    %v860 = vrot.slane %v853, %v859
    %v862 = vlaneseq
    %vm863 = vcmp.ge.s32.totalorder %v862, 0
    %vm864 = vcmp.lt.s32.totalorder %v862, 512
    %vm865 = vmand %vm863, %vm864
    %s866 = scalar_lea.vmem [#allocation3], 7
    %867 = vst.msk [vmem:[%s866] ss:$8 sm:$0xf] %vm865, %v860
    %868 = vst.msk [vmem:[%s866] ss:$8 sm:$0x0] %vm865, %v860
    %v869 = vcombine.high %v845, %v852
    %v871 = vunpack.c.l.s4 1966171168
    %v872 = vunpack.c.0.s8 %v871
    %v873 = vlaneseq
    %v874 = vshrl.u32 %v873, 7
    %v875 = vsub.s32 %v872, %v874
    %v876 = vrot.slane %v869, %v875
    %s878 = scalar_lea.vmem [#allocation3], 71
    %879 = vst.msk [vmem:[%s878] ss:$8 sm:$0xf] %vm865, %v876
    %880 = vst.msk [vmem:[%s878] ss:$8 sm:$0x0] %vm865, %v876
    %v881 = vld [vmem:[#allocation3] sm:$0xff]
    %v882 = vld [vmem:[#allocation3 + $0x20] sm:$0xff]
    %v883 = vld [vmem:[#allocation3 + $0x40] sm:$0xff]
    %v884 = vld [vmem:[#allocation3 + $0x60] sm:$0xff]
    %v885 = vld [vmem:[#allocation3 + $0x8] sm:$0xff]
    %v886 = vld [vmem:[#allocation3 + $0x28] sm:$0xff]
    %v887 = vld [vmem:[#allocation3 + $0x48] sm:$0xff]
    %v888 = vld [vmem:[#allocation3 + $0x68] sm:$0xff]
    %v889 = vld [vmem:[#allocation3 + $0x10] sm:$0xff]
    %v890 = vld [vmem:[#allocation3 + $0x30] sm:$0xff]
    %v891 = vld [vmem:[#allocation3 + $0x50] sm:$0xff]
    %v892 = vld [vmem:[#allocation3 + $0x70] sm:$0xff]
    %v893 = vld [vmem:[#allocation3 + $0x18] sm:$0xff]
    %v894 = vld [vmem:[#allocation3 + $0x38] sm:$0xff]
    %v895 = vld [vmem:[#allocation3 + $0x58] sm:$0xff]
    %v896 = vld [vmem:[#allocation3 + $0x78] sm:$0xff]
    %vm897 = vcmp.lt.s32.totalorder %v539, 8
    %vm898 = vmand %vm535, %vm897
    %vm899 = vmand %vm536, %vm897
    %vm900 = vmand %vm537, %vm897
    %vm901 = vmand %vm538, %vm897
    %vm902 = vmand %vm540, %vm897
    %903 = vmatprep.subr.mxu0 0.0
    %904 = vmatpush1.xpose.msra.mxu0 %v881
    %905 = vmatprep.subr.mxu0 0.0
    %906 = vmatpush1.xpose.msra.mxu0 %v882
    %907 = vmatprep.subr.mxu0 0.0
    %908 = vmatpush1.xpose.msra.mxu0 %v883
    %909 = vmatprep.subr.mxu0 0.0
    %910 = vmatpush1.xpose.msra.mxu0 %v884
    %911 = vmatprep.subr.mxu0 0.0
    %912 = vmatpush1.xpose.msra.mxu0 0.0
    %913 = vmatprep.subr.mxu0 0.0
    %914 = vmatpush1.xpose.msra.mxu0 0.0
    %915 = vmatprep.subr.mxu0 0.0
    %916 = vmatpush1.xpose.msra.mxu0 0.0
    %917 = vmatprep.subr.mxu0 0.0
    %918 = vmatpush1.xpose.msra.mxu0 0.0
    %919 = vmatprep.subr.mxu0 0.0
    %920 = vmatpush1.xpose.msra.mxu0 0.0
    %921 = vmatprep.subr.mxu0 0.0
    %922 = vmatpush1.xpose.msra.mxu0 0.0
    %923 = vmatprep.subr.mxu0 0.0
    %924 = vmatpush1.xpose.msra.mxu0 0.0
    %925 = vmatprep.subr.mxu0 0.0
    %926 = vmatpush1.xpose.msra.mxu0 0.0
    %927 = vmatprep.subr.mxu0 0.0
    %928 = vmatpush1.xpose.msra.mxu0 0.0
    %929 = vmatprep.subr.mxu0 0.0
    %930 = vmatpush1.xpose.msra.mxu0 0.0
    %931 = vmatprep.subr.mxu0 0.0
    %932 = vmatpush1.xpose.msra.mxu0 0.0
    %933 = vmatprep.subr.mxu0 0.0
    %934 = vmatpush1.xpose.msra.mxu0 0.0
    %935 = vmatprep.subr.mxu0 0.0
    %936 = vmatpush1.xpose.msra.mxu0 0.0
    %937 = vmatprep.subr.mxu0 0.0
    %938 = vmatpush1.xpose.msra.mxu0 0.0
    %939 = vmatprep.subr.mxu0 0.0
    %940 = vmatpush1.xpose.msra.mxu0 0.0
    %941 = vmatprep.subr.mxu0 0.0
    %942 = vmatpush1.xpose.msra.mxu0 0.0
    %943 = vmatprep.subr.mxu0 0.0
    %944 = vmatpush1.xpose.msra.mxu0 0.0
    %945 = vmatprep.subr.mxu0 0.0
    %946 = vmatpush1.xpose.msra.mxu0 0.0
    %947 = vmatprep.subr.mxu0 0.0
    %948 = vmatpush1.xpose.msra.mxu0 0.0
    %949 = vmatprep.subr.mxu0 0.0
    %950 = vmatpush1.xpose.msra.mxu0 0.0
    %951 = vmatprep.subr.mxu0 0.0
    %952 = vmatpush1.xpose.msra.mxu0 0.0
    %953 = vmatprep.subr.mxu0 0.0
    %954 = vmatpush1.xpose.msra.mxu0 0.0
    %955 = vmatprep.subr.mxu0 0.0
    %956 = vmatpush1.xpose.msra.mxu0 0.0
    %957 = vmatprep.subr.mxu0 0.0
    %958 = vmatpush1.xpose.msra.mxu0 0.0
    %959 = vmatprep.subr.mxu0 0.0
    %960 = vmatpush1.xpose.msra.mxu0 0.0
    %961 = vmatprep.subr.mxu0 0.0
    %962 = vmatpush1.xpose.msra.mxu0 0.0
    %963 = vmatprep.subr.mxu0 0.0
    %964 = vmatpush1.xpose.msra.mxu0 0.0
    %965 = vmatprep.subr.mxu0 0.0
    %966 = vmatpush1.xpose.msra.mxu0 0.0
    %967 = vmatprep.mubr.f32.mxu0 0.0
    %968 = vmatmul.mubr.f32.gmra.mrb[0].mxu0 %v688
    %v969 = vpop.f32.mrb[0].mxu0
    %v970 = vadd.f32 0.0, %v969
    %v971 = vpop.f32.mrb[0].mxu0
    %972 = vdwg.mxu0
    %v973 = vmul.f32 %v970, 0.15811388
    %v974 = vmul.f32 %v973, 1.442695
    %v975 = vpow.pop %v974
    %v976 = vsel %vm902, %v975, 0.0
    %977 = vmatprep.subr.mxu0 0.0
    %978 = vmatpush1.xpose.msra.mxu0 %v885
    %979 = vmatprep.subr.mxu0 0.0
    %980 = vmatpush1.xpose.msra.mxu0 %v886
    %981 = vmatprep.subr.mxu0 0.0
    %982 = vmatpush1.xpose.msra.mxu0 %v887
    %983 = vmatprep.subr.mxu0 0.0
    %984 = vmatpush1.xpose.msra.mxu0 %v888
    %985 = vmatprep.subr.mxu0 0.0
    %986 = vmatpush1.xpose.msra.mxu0 0.0
    %987 = vmatprep.subr.mxu0 0.0
    %988 = vmatpush1.xpose.msra.mxu0 0.0
    %989 = vmatprep.subr.mxu0 0.0
    %990 = vmatpush1.xpose.msra.mxu0 0.0
    %991 = vmatprep.subr.mxu0 0.0
    %992 = vmatpush1.xpose.msra.mxu0 0.0
    %993 = vmatprep.subr.mxu0 0.0
    %994 = vmatpush1.xpose.msra.mxu0 0.0
    %995 = vmatprep.subr.mxu0 0.0
    %996 = vmatpush1.xpose.msra.mxu0 0.0
    %997 = vmatprep.subr.mxu0 0.0
    %998 = vmatpush1.xpose.msra.mxu0 0.0
    %999 = vmatprep.subr.mxu0 0.0
    %1000 = vmatpush1.xpose.msra.mxu0 0.0
    %1001 = vmatprep.subr.mxu0 0.0
    %1002 = vmatpush1.xpose.msra.mxu0 0.0
    %1003 = vmatprep.subr.mxu0 0.0
    %1004 = vmatpush1.xpose.msra.mxu0 0.0
    %1005 = vmatprep.subr.mxu0 0.0
    %1006 = vmatpush1.xpose.msra.mxu0 0.0
    %1007 = vmatprep.subr.mxu0 0.0
    %1008 = vmatpush1.xpose.msra.mxu0 0.0
    %1009 = vmatprep.subr.mxu0 0.0
    %1010 = vmatpush1.xpose.msra.mxu0 0.0
    %1011 = vmatprep.subr.mxu0 0.0
    %1012 = vmatpush1.xpose.msra.mxu0 0.0
    %1013 = vmatprep.subr.mxu0 0.0
    %1014 = vmatpush1.xpose.msra.mxu0 0.0
    %1015 = vmatprep.subr.mxu0 0.0
    %1016 = vmatpush1.xpose.msra.mxu0 0.0
    %1017 = vmatprep.subr.mxu0 0.0
    %1018 = vmatpush1.xpose.msra.mxu0 0.0
    %1019 = vmatprep.subr.mxu0 0.0
    %1020 = vmatpush1.xpose.msra.mxu0 0.0
    %1021 = vmatprep.subr.mxu0 0.0
    %1022 = vmatpush1.xpose.msra.mxu0 0.0
    %1023 = vmatprep.subr.mxu0 0.0
    %1024 = vmatpush1.xpose.msra.mxu0 0.0
    %1025 = vmatprep.subr.mxu0 0.0
    %1026 = vmatpush1.xpose.msra.mxu0 0.0
    %1027 = vmatprep.subr.mxu0 0.0
    %1028 = vmatpush1.xpose.msra.mxu0 0.0
    %1029 = vmatprep.subr.mxu0 0.0
    %1030 = vmatpush1.xpose.msra.mxu0 0.0
    %1031 = vmatprep.subr.mxu0 0.0
    %1032 = vmatpush1.xpose.msra.mxu0 0.0
    %1033 = vmatprep.subr.mxu0 0.0
    %1034 = vmatpush1.xpose.msra.mxu0 0.0
    %1035 = vmatprep.subr.mxu0 0.0
    %1036 = vmatpush1.xpose.msra.mxu0 0.0
    %1037 = vmatprep.subr.mxu0 0.0
    %1038 = vmatpush1.xpose.msra.mxu0 0.0
    %1039 = vmatprep.subr.mxu0 0.0
    %1040 = vmatpush1.xpose.msra.mxu0 0.0
    %1041 = vmatprep.mubr.f32.mxu0 0.0
    %1042 = vmatmul.mubr.f32.gmra.mrb[0].mxu0 %v688
    %v1043 = vpop.f32.mrb[0].mxu0
    %v1044 = vadd.f32 0.0, %v1043
    %v1045 = vpop.f32.mrb[0].mxu0
    %1046 = vdwg.mxu0
    %v1047 = vmul.f32 %v1044, 0.15811388
    %v1048 = vmul.f32 %v1047, 1.442695
    %v1049 = vpow.pop %v1048
    %1050 = vmatprep.subr.mxu0 0.0
    %1051 = vmatpush1.xpose.msra.mxu0 %v885
    %1052 = vmatprep.subr.mxu0 0.0
    %1053 = vmatpush1.xpose.msra.mxu0 %v886
    %1054 = vmatprep.subr.mxu0 0.0
    %1055 = vmatpush1.xpose.msra.mxu0 %v887
    %1056 = vmatprep.subr.mxu0 0.0
    %1057 = vmatpush1.xpose.msra.mxu0 %v888
    %1058 = vmatprep.subr.mxu0 0.0
    %1059 = vmatpush1.xpose.msra.mxu0 0.0
    %1060 = vmatprep.subr.mxu0 0.0
    %1061 = vmatpush1.xpose.msra.mxu0 0.0
    %1062 = vmatprep.subr.mxu0 0.0
    %1063 = vmatpush1.xpose.msra.mxu0 0.0
    %1064 = vmatprep.subr.mxu0 0.0
    %1065 = vmatpush1.xpose.msra.mxu0 0.0
    %1066 = vmatprep.subr.mxu0 0.0
    %1067 = vmatpush1.xpose.msra.mxu0 0.0
    %1068 = vmatprep.subr.mxu0 0.0
    %1069 = vmatpush1.xpose.msra.mxu0 0.0
    %1070 = vmatprep.subr.mxu0 0.0
    %1071 = vmatpush1.xpose.msra.mxu0 0.0
    %1072 = vmatprep.subr.mxu0 0.0
    %1073 = vmatpush1.xpose.msra.mxu0 0.0
    %1074 = vmatprep.subr.mxu0 0.0
    %1075 = vmatpush1.xpose.msra.mxu0 0.0
    %1076 = vmatprep.subr.mxu0 0.0
    %1077 = vmatpush1.xpose.msra.mxu0 0.0
    %1078 = vmatprep.subr.mxu0 0.0
    %1079 = vmatpush1.xpose.msra.mxu0 0.0
    %1080 = vmatprep.subr.mxu0 0.0
    %1081 = vmatpush1.xpose.msra.mxu0 0.0
    %1082 = vmatprep.subr.mxu0 0.0
    %1083 = vmatpush1.xpose.msra.mxu0 0.0
    %1084 = vmatprep.subr.mxu0 0.0
    %1085 = vmatpush1.xpose.msra.mxu0 0.0
    %1086 = vmatprep.subr.mxu0 0.0
    %1087 = vmatpush1.xpose.msra.mxu0 0.0
    %1088 = vmatprep.subr.mxu0 0.0
    %1089 = vmatpush1.xpose.msra.mxu0 0.0
    %1090 = vmatprep.subr.mxu0 0.0
    %1091 = vmatpush1.xpose.msra.mxu0 0.0
    %1092 = vmatprep.subr.mxu0 0.0
    %1093 = vmatpush1.xpose.msra.mxu0 0.0
    %1094 = vmatprep.subr.mxu0 0.0
    %1095 = vmatpush1.xpose.msra.mxu0 0.0
    %1096 = vmatprep.subr.mxu0 0.0
    %1097 = vmatpush1.xpose.msra.mxu0 0.0
    %1098 = vmatprep.subr.mxu0 0.0
    %1099 = vmatpush1.xpose.msra.mxu0 0.0
    %1100 = vmatprep.subr.mxu0 0.0
    %1101 = vmatpush1.xpose.msra.mxu0 0.0
    %1102 = vmatprep.subr.mxu0 0.0
    %1103 = vmatpush1.xpose.msra.mxu0 0.0
    %1104 = vmatprep.subr.mxu0 0.0
    %1105 = vmatpush1.xpose.msra.mxu0 0.0
    %1106 = vmatprep.subr.mxu0 0.0
    %1107 = vmatpush1.xpose.msra.mxu0 0.0
    %1108 = vmatprep.subr.mxu0 0.0
    %1109 = vmatpush1.xpose.msra.mxu0 0.0
    %1110 = vmatprep.subr.mxu0 0.0
    %1111 = vmatpush1.xpose.msra.mxu0 0.0
    %1112 = vmatprep.subr.mxu0 0.0
    %1113 = vmatpush1.xpose.msra.mxu0 0.0
    %1114 = vmatprep.mubr.f32.mxu0 0.0
    %1115 = vmatmul.mubr.f32.gmra.mrb[0].mxu0 %v881
    %v1116 = vpop.f32.mrb[0].mxu0
    %v1117 = vadd.f32 0.0, %v1116
    %v1118 = vpop.f32.mrb[0].mxu0
    %1119 = vmatprep.mubr.f32.mxu0 0.0
    %1120 = vmatmul.mubr.f32.gmra.mrb[0].mxu0 %v882
    %v1121 = vpop.f32.mrb[0].mxu0
    %v1122 = vadd.f32 0.0, %v1121
    %v1123 = vpop.f32.mrb[0].mxu0
    %1124 = vmatprep.mubr.f32.mxu0 0.0
    %1125 = vmatmul.mubr.f32.gmra.mrb[0].mxu0 %v883
    %v1126 = vpop.f32.mrb[0].mxu0
    %v1127 = vadd.f32 0.0, %v1126
    %v1128 = vpop.f32.mrb[0].mxu0
    %1129 = vmatprep.mubr.f32.mxu0 0.0
    %1130 = vmatmul.mubr.f32.gmra.mrb[0].mxu0 %v884
    %v1131 = vpop.f32.mrb[0].mxu0
    %v1132 = vadd.f32 0.0, %v1131
    %v1133 = vpop.f32.mrb[0].mxu0
    %1134 = vdwg.mxu0
    %v1135 = vmul.f32 %v1117, 0.15811388
    %v1136 = vmul.f32 %v1122, 0.15811388
    %v1137 = vmul.f32 %v1127, 0.15811388
    %v1138 = vmul.f32 %v1132, 0.15811388
    %v1139 = vmul.f32 %v1135, 1.442695
    %v1140 = vpow.pop %v1139
    %v1141 = vmul.f32 %v1136, 1.442695
    %v1142 = vpow.pop %v1141
    %v1143 = vmul.f32 %v1137, 1.442695
    %v1144 = vpow.pop %v1143
    %v1145 = vmul.f32 %v1138, 1.442695
    %v1146 = vpow.pop %v1145
    %v1147 = vsel %vm898, %v1140, 0.0
    %v1148 = vsel %vm899, %v1142, 0.0
    %v1149 = vsel %vm900, %v1144, 0.0
    %v1150 = vsel %vm901, %v1146, 0.0
    %v1152 = vsel %vm157, %v1049, 0
    %v1155 = vsel %vm157, %v1147, 0
    %v1158 = vsel %vm157, %v1148, 0
    %v1161 = vsel %vm157, %v1149, 0
    %v1164 = vsel %vm157, %v1150, 0
    %1166 = vmatprep.subr.mxu0 0.0
    %1167 = vmatpush1.xpose.msra.mxu0 %v1155
    %1168 = vmatprep.subr.mxu0 0.0
    %1169 = vmatpush1.xpose.msra.mxu0 %v1158
    %1170 = vmatprep.subr.mxu0 0.0
    %1171 = vmatpush1.xpose.msra.mxu0 %v1161
    %1172 = vmatprep.subr.mxu0 0.0
    %1173 = vmatpush1.xpose.msra.mxu0 %v1164
    %1174 = vmatprep.subr.mxu0 0.0
    %1175 = vmatpush1.xpose.msra.mxu0 0.0
    %1176 = vmatprep.subr.mxu0 0.0
    %1177 = vmatpush1.xpose.msra.mxu0 0.0
    %1178 = vmatprep.subr.mxu0 0.0
    %1179 = vmatpush1.xpose.msra.mxu0 0.0
    %1180 = vmatprep.subr.mxu0 0.0
    %1181 = vmatpush1.xpose.msra.mxu0 0.0
    %1182 = vmatprep.subr.mxu0 0.0
    %1183 = vmatpush1.xpose.msra.mxu0 0.0
    %1184 = vmatprep.subr.mxu0 0.0
    %1185 = vmatpush1.xpose.msra.mxu0 0.0
    %1186 = vmatprep.subr.mxu0 0.0
    %1187 = vmatpush1.xpose.msra.mxu0 0.0
    %1188 = vmatprep.subr.mxu0 0.0
    %1189 = vmatpush1.xpose.msra.mxu0 0.0
    %1190 = vmatprep.subr.mxu0 0.0
    %1191 = vmatpush1.xpose.msra.mxu0 0.0
    %1192 = vmatprep.subr.mxu0 0.0
    %1193 = vmatpush1.xpose.msra.mxu0 0.0
    %1194 = vmatprep.subr.mxu0 0.0
    %1195 = vmatpush1.xpose.msra.mxu0 0.0
    %1196 = vmatprep.subr.mxu0 0.0
    %1197 = vmatpush1.xpose.msra.mxu0 0.0
    %1198 = vmatprep.subr.mxu0 0.0
    %1199 = vmatpush1.xpose.msra.mxu0 0.0
    %1200 = vmatprep.subr.mxu0 0.0
    %1201 = vmatpush1.xpose.msra.mxu0 0.0
    %1202 = vmatprep.subr.mxu0 0.0
    %1203 = vmatpush1.xpose.msra.mxu0 0.0
    %1204 = vmatprep.subr.mxu0 0.0
    %1205 = vmatpush1.xpose.msra.mxu0 0.0
    %1206 = vmatprep.subr.mxu0 0.0
    %1207 = vmatpush1.xpose.msra.mxu0 0.0
    %1208 = vmatprep.subr.mxu0 0.0
    %1209 = vmatpush1.xpose.msra.mxu0 0.0
    %1210 = vmatprep.subr.mxu0 0.0
    %1211 = vmatpush1.xpose.msra.mxu0 0.0
    %1212 = vmatprep.subr.mxu0 0.0
    %1213 = vmatpush1.xpose.msra.mxu0 0.0
    %1214 = vmatprep.subr.mxu0 0.0
    %1215 = vmatpush1.xpose.msra.mxu0 0.0
    %1216 = vmatprep.subr.mxu0 0.0
    %1217 = vmatpush1.xpose.msra.mxu0 0.0
    %1218 = vmatprep.subr.mxu0 0.0
    %1219 = vmatpush1.xpose.msra.mxu0 0.0
    %1220 = vmatprep.subr.mxu0 0.0
    %1221 = vmatpush1.xpose.msra.mxu0 0.0
    %1222 = vmatprep.subr.mxu0 0.0
    %1223 = vmatpush1.xpose.msra.mxu0 0.0
    %1224 = vmatprep.subr.mxu0 0.0
    %1225 = vmatpush1.xpose.msra.mxu0 0.0
    %1226 = vmatprep.subr.mxu0 0.0
    %1227 = vmatpush1.xpose.msra.mxu0 0.0
    %1228 = vmatprep.subr.mxu0 0.0
    %1229 = vmatpush1.xpose.msra.mxu0 0.0
    %1230 = vmatprep.mubr.f32.mxu0 0.0
    %1231 = vmatmul.mubr.f32.gmra.mrb[0].mxu0 %v1152
    %v1232 = vpop.f32.mrb[0].mxu0
    %v1233 = vadd.f32 0.0, %v1232
    %v1234 = vpop.f32.mrb[0].mxu0
    %1235 = vdwg.mxu0
    %v1236 = vmul.f32 %v976, %v1233
    %v1238 = vsel %vm157, %v976, 0
    %1240 = vmatprep.subr.mxu0 0.0
    %1241 = vmatpush1.msra.mxu0 %v1147
    %1242 = vmatprep.subr.mxu0 0.0
    %1243 = vmatpush1.msra.mxu0 %v1148
    %1244 = vmatprep.subr.mxu0 0.0
    %1245 = vmatpush1.msra.mxu0 %v1149
    %1246 = vmatprep.subr.mxu0 0.0
    %1247 = vmatpush1.msra.mxu0 %v1150
    %1248 = vmatprep.subr.mxu0 0.0
    %1249 = vmatpush1.msra.mxu0 0.0
    %1250 = vmatprep.subr.mxu0 0.0
    %1251 = vmatpush1.msra.mxu0 0.0
    %1252 = vmatprep.subr.mxu0 0.0
    %1253 = vmatpush1.msra.mxu0 0.0
    %1254 = vmatprep.subr.mxu0 0.0
    %1255 = vmatpush1.msra.mxu0 0.0
    %1256 = vmatprep.subr.mxu0 0.0
    %1257 = vmatpush1.msra.mxu0 0.0
    %1258 = vmatprep.subr.mxu0 0.0
    %1259 = vmatpush1.msra.mxu0 0.0
    %1260 = vmatprep.subr.mxu0 0.0
    %1261 = vmatpush1.msra.mxu0 0.0
    %1262 = vmatprep.subr.mxu0 0.0
    %1263 = vmatpush1.msra.mxu0 0.0
    %1264 = vmatprep.subr.mxu0 0.0
    %1265 = vmatpush1.msra.mxu0 0.0
    %1266 = vmatprep.subr.mxu0 0.0
    %1267 = vmatpush1.msra.mxu0 0.0
    %1268 = vmatprep.subr.mxu0 0.0
    %1269 = vmatpush1.msra.mxu0 0.0
    %1270 = vmatprep.subr.mxu0 0.0
    %1271 = vmatpush1.msra.mxu0 0.0
    %1272 = vmatprep.subr.mxu0 0.0
    %1273 = vmatpush1.msra.mxu0 0.0
    %1274 = vmatprep.subr.mxu0 0.0
    %1275 = vmatpush1.msra.mxu0 0.0
    %1276 = vmatprep.subr.mxu0 0.0
    %1277 = vmatpush1.msra.mxu0 0.0
    %1278 = vmatprep.subr.mxu0 0.0
    %1279 = vmatpush1.msra.mxu0 0.0
    %1280 = vmatprep.subr.mxu0 0.0
    %1281 = vmatpush1.msra.mxu0 0.0
    %1282 = vmatprep.subr.mxu0 0.0
    %1283 = vmatpush1.msra.mxu0 0.0
    %1284 = vmatprep.subr.mxu0 0.0
    %1285 = vmatpush1.msra.mxu0 0.0
    %1286 = vmatprep.subr.mxu0 0.0
    %1287 = vmatpush1.msra.mxu0 0.0
    %1288 = vmatprep.subr.mxu0 0.0
    %1289 = vmatpush1.msra.mxu0 0.0
    %1290 = vmatprep.subr.mxu0 0.0
    %1291 = vmatpush1.msra.mxu0 0.0
    %1292 = vmatprep.subr.mxu0 0.0
    %1293 = vmatpush1.msra.mxu0 0.0
    %1294 = vmatprep.subr.mxu0 0.0
    %1295 = vmatpush1.msra.mxu0 0.0
    %1296 = vmatprep.subr.mxu0 0.0
    %1297 = vmatpush1.msra.mxu0 0.0
    %1298 = vmatprep.subr.mxu0 0.0
    %1299 = vmatpush1.msra.mxu0 0.0
    %1300 = vmatprep.subr.mxu0 0.0
    %1301 = vmatpush1.msra.mxu0 0.0
    %1302 = vmatprep.subr.mxu0 0.0
    %1303 = vmatpush1.msra.mxu0 0.0
    %1304 = vmatprep.mubr.f32.mxu0 0.0
    %1305 = vmatmul.mubr.f32.gmra.mrb[0].mxu0 %v1238
    %v1306 = vpop.f32.mrb[0].mxu0
    %v1307 = vadd.f32 0.0, %v1306
    %v1308 = vpop.f32.mrb[0].mxu0
    %1309 = vdwg.mxu0
    %v1310 = vmul.f32 %v1307, %v1049
    %v1312 = vsel %vm157, %v1236, 0
    %1314 = vmatprep.subr.mxu0 0.0
    %1315 = vmatpush1.msra.mxu0 %v889
    %1316 = vmatprep.subr.mxu0 0.0
    %1317 = vmatpush1.msra.mxu0 %v890
    %1318 = vmatprep.subr.mxu0 0.0
    %1319 = vmatpush1.msra.mxu0 %v891
    %1320 = vmatprep.subr.mxu0 0.0
    %1321 = vmatpush1.msra.mxu0 %v892
    %1322 = vmatprep.subr.mxu0 0.0
    %1323 = vmatpush1.msra.mxu0 0.0
    %1324 = vmatprep.subr.mxu0 0.0
    %1325 = vmatpush1.msra.mxu0 0.0
    %1326 = vmatprep.subr.mxu0 0.0
    %1327 = vmatpush1.msra.mxu0 0.0
    %1328 = vmatprep.subr.mxu0 0.0
    %1329 = vmatpush1.msra.mxu0 0.0
    %1330 = vmatprep.subr.mxu0 0.0
    %1331 = vmatpush1.msra.mxu0 0.0
    %1332 = vmatprep.subr.mxu0 0.0
    %1333 = vmatpush1.msra.mxu0 0.0
    %1334 = vmatprep.subr.mxu0 0.0
    %1335 = vmatpush1.msra.mxu0 0.0
    %1336 = vmatprep.subr.mxu0 0.0
    %1337 = vmatpush1.msra.mxu0 0.0
    %1338 = vmatprep.subr.mxu0 0.0
    %1339 = vmatpush1.msra.mxu0 0.0
    %1340 = vmatprep.subr.mxu0 0.0
    %1341 = vmatpush1.msra.mxu0 0.0
    %1342 = vmatprep.subr.mxu0 0.0
    %1343 = vmatpush1.msra.mxu0 0.0
    %1344 = vmatprep.subr.mxu0 0.0
    %1345 = vmatpush1.msra.mxu0 0.0
    %1346 = vmatprep.subr.mxu0 0.0
    %1347 = vmatpush1.msra.mxu0 0.0
    %1348 = vmatprep.subr.mxu0 0.0
    %1349 = vmatpush1.msra.mxu0 0.0
    %1350 = vmatprep.subr.mxu0 0.0
    %1351 = vmatpush1.msra.mxu0 0.0
    %1352 = vmatprep.subr.mxu0 0.0
    %1353 = vmatpush1.msra.mxu0 0.0
    %1354 = vmatprep.subr.mxu0 0.0
    %1355 = vmatpush1.msra.mxu0 0.0
    %1356 = vmatprep.subr.mxu0 0.0
    %1357 = vmatpush1.msra.mxu0 0.0
    %1358 = vmatprep.subr.mxu0 0.0
    %1359 = vmatpush1.msra.mxu0 0.0
    %1360 = vmatprep.subr.mxu0 0.0
    %1361 = vmatpush1.msra.mxu0 0.0
    %1362 = vmatprep.subr.mxu0 0.0
    %1363 = vmatpush1.msra.mxu0 0.0
    %1364 = vmatprep.subr.mxu0 0.0
    %1365 = vmatpush1.msra.mxu0 0.0
    %1366 = vmatprep.subr.mxu0 0.0
    %1367 = vmatpush1.msra.mxu0 0.0
    %1368 = vmatprep.subr.mxu0 0.0
    %1369 = vmatpush1.msra.mxu0 0.0
    %1370 = vmatprep.subr.mxu0 0.0
    %1371 = vmatpush1.msra.mxu0 0.0
    %1372 = vmatprep.subr.mxu0 0.0
    %1373 = vmatpush1.msra.mxu0 0.0
    %1374 = vmatprep.subr.mxu0 0.0
    %1375 = vmatpush1.msra.mxu0 0.0
    %1376 = vmatprep.subr.mxu0 0.0
    %1377 = vmatpush1.msra.mxu0 0.0
    %1378 = vmatprep.mubr.f32.mxu0 0.0
    %1379 = vmatmul.mubr.f32.gmra.mrb[0].mxu0 %v1312
    %v1380 = vpop.f32.mrb[0].mxu0
    %v1381 = vadd.f32 0.0, %v1380
    %v1382 = vpop.f32.mrb[0].mxu0
    %1383 = vdwg.mxu0
    %v1385 = vsel %vm157, %v1310, 0
    %1387 = vmatprep.subr.mxu0 0.0
    %1388 = vmatpush1.msra.mxu0 %v893
    %1389 = vmatprep.subr.mxu0 0.0
    %1390 = vmatpush1.msra.mxu0 %v894
    %1391 = vmatprep.subr.mxu0 0.0
    %1392 = vmatpush1.msra.mxu0 %v895
    %1393 = vmatprep.subr.mxu0 0.0
    %1394 = vmatpush1.msra.mxu0 %v896
    %1395 = vmatprep.subr.mxu0 0.0
    %1396 = vmatpush1.msra.mxu0 0.0
    %1397 = vmatprep.subr.mxu0 0.0
    %1398 = vmatpush1.msra.mxu0 0.0
    %1399 = vmatprep.subr.mxu0 0.0
    %1400 = vmatpush1.msra.mxu0 0.0
    %1401 = vmatprep.subr.mxu0 0.0
    %1402 = vmatpush1.msra.mxu0 0.0
    %1403 = vmatprep.subr.mxu0 0.0
    %1404 = vmatpush1.msra.mxu0 0.0
    %1405 = vmatprep.subr.mxu0 0.0
    %1406 = vmatpush1.msra.mxu0 0.0
    %1407 = vmatprep.subr.mxu0 0.0
    %1408 = vmatpush1.msra.mxu0 0.0
    %1409 = vmatprep.subr.mxu0 0.0
    %1410 = vmatpush1.msra.mxu0 0.0
    %1411 = vmatprep.subr.mxu0 0.0
    %1412 = vmatpush1.msra.mxu0 0.0
    %1413 = vmatprep.subr.mxu0 0.0
    %1414 = vmatpush1.msra.mxu0 0.0
    %1415 = vmatprep.subr.mxu0 0.0
    %1416 = vmatpush1.msra.mxu0 0.0
    %1417 = vmatprep.subr.mxu0 0.0
    %1418 = vmatpush1.msra.mxu0 0.0
    %1419 = vmatprep.subr.mxu0 0.0
    %1420 = vmatpush1.msra.mxu0 0.0
    %1421 = vmatprep.subr.mxu0 0.0
    %1422 = vmatpush1.msra.mxu0 0.0
    %1423 = vmatprep.subr.mxu0 0.0
    %1424 = vmatpush1.msra.mxu0 0.0
    %1425 = vmatprep.subr.mxu0 0.0
    %1426 = vmatpush1.msra.mxu0 0.0
    %1427 = vmatprep.subr.mxu0 0.0
    %1428 = vmatpush1.msra.mxu0 0.0
    %1429 = vmatprep.subr.mxu0 0.0
    %1430 = vmatpush1.msra.mxu0 0.0
    %1431 = vmatprep.subr.mxu0 0.0
    %1432 = vmatpush1.msra.mxu0 0.0
    %1433 = vmatprep.subr.mxu0 0.0
    %1434 = vmatpush1.msra.mxu0 0.0
    %1435 = vmatprep.subr.mxu0 0.0
    %1436 = vmatpush1.msra.mxu0 0.0
    %1437 = vmatprep.subr.mxu0 0.0
    %1438 = vmatpush1.msra.mxu0 0.0
    %1439 = vmatprep.subr.mxu0 0.0
    %1440 = vmatpush1.msra.mxu0 0.0
    %1441 = vmatprep.subr.mxu0 0.0
    %1442 = vmatpush1.msra.mxu0 0.0
    %1443 = vmatprep.subr.mxu0 0.0
    %1444 = vmatpush1.msra.mxu0 0.0
    %1445 = vmatprep.subr.mxu0 0.0
    %1446 = vmatpush1.msra.mxu0 0.0
    %1447 = vmatprep.subr.mxu0 0.0
    %1448 = vmatpush1.msra.mxu0 0.0
    %1449 = vmatprep.subr.mxu0 0.0
    %1450 = vmatpush1.msra.mxu0 0.0
    %1451 = vmatprep.mubr.f32.mxu0 0.0
    %1452 = vmatmul.mubr.f32.gmra.mrb[0].mxu0 %v1385
    %v1453 = vpop.f32.mrb[0].mxu0
    %v1454 = vadd.f32 0.0, %v1453
    %v1455 = vpop.f32.mrb[0].mxu0
    %1456 = vdwg.mxu0
    %vm1457 = vcmask 254976
    %v1458 = vsel %vm1457, %v1310, 0.0
    %1459 = vadd.xlane.f32.xlu0 %v1458
    %v1460 = vpop.xlane.xlu0 %1459
    %v1461 = vrcp.pop %v1460
    %v1462 = vmul.f32 %v1381, %v1461
    %v1463 = vmul.f32 %v1454, %v1461
    %v1464 = vld [vmem:[#allocation9] sm:$0xff]
    %v1465 = vld [vmem:[#allocation9 + $0x8] sm:$0xff]
    %v1466 = vld [vmem:[#allocation9 + $0x10] sm:$0xff]
    %v1467 = vld [vmem:[#allocation9 + $0x18] sm:$0xff]
    %v1468 = vld [vmem:[#allocation9 + $0x20] sm:$0xff]
    %v1469 = vld [vmem:[#allocation9 + $0x28] sm:$0xff]
    %v1470 = vld [vmem:[#allocation9 + $0x30] sm:$0xff]
    %v1471 = vld [vmem:[#allocation9 + $0x38] sm:$0xff]
    %v1472 = vld [vmem:[#allocation9 + $0x40] sm:$0xff]
    %v1473 = vld [vmem:[#allocation9 + $0x48] sm:$0xff]
    %v1474 = vld [vmem:[#allocation9 + $0x50] sm:$0xff]
    %v1475 = vld [vmem:[#allocation9 + $0x58] sm:$0xff]
    %v1476 = vld [vmem:[#allocation9 + $0x60] sm:$0xff]
    %v1477 = vld [vmem:[#allocation9 + $0x68] sm:$0xff]
    %v1478 = vld [vmem:[#allocation9 + $0x70] sm:$0xff]
    %v1479 = vld [vmem:[#allocation9 + $0x78] sm:$0xff]
    %v1480 = vld [vmem:[#allocation9 + $0x80] sm:$0xff]
    %v1481 = vld [vmem:[#allocation9 + $0x88] sm:$0xff]
    %v1482 = vld [vmem:[#allocation9 + $0x90] sm:$0xff]
    %v1483 = vld [vmem:[#allocation9 + $0x98] sm:$0xff]
    %v1484 = vld [vmem:[#allocation9 + $0xa0] sm:$0xff]
    %v1485 = vld [vmem:[#allocation9 + $0xa8] sm:$0xff]
    %v1486 = vld [vmem:[#allocation9 + $0xb0] sm:$0xff]
    %v1487 = vld [vmem:[#allocation9 + $0xb8] sm:$0xff]
    %v1488 = vld [vmem:[#allocation9 + $0xc0] sm:$0xff]
    %v1489 = vld [vmem:[#allocation9 + $0xc8] sm:$0xff]
    %v1490 = vld [vmem:[#allocation9 + $0xd0] sm:$0xff]
    %v1491 = vld [vmem:[#allocation9 + $0xd8] sm:$0xff]
    %v1492 = vld [vmem:[#allocation9 + $0xe0] sm:$0xff]
    %v1493 = vld [vmem:[#allocation9 + $0xe8] sm:$0xff]
    %v1494 = vld [vmem:[#allocation9 + $0xf0] sm:$0xff]
    %v1495 = vld [vmem:[#allocation9 + $0xf8] sm:$0xff]
    %v1496 = vld [vmem:[%s5] sm:$0x1]
    %v1498 = vlaneseq
    %v1499 = vshrl.u32 %v1498, 7
    %v1500 = vsub.s32 0, %v1499
    %v1501 = vrot.slane %v1496, %v1500
    %1503 = vmatprep.subr.mxu0 0.0
    %1504 = vmatpush1.msra.mxu0 %v1464
    %1505 = vmatprep.subr.mxu0 0.0
    %1506 = vmatpush1.msra.mxu0 %v1465
    %1507 = vmatprep.subr.mxu0 0.0
    %1508 = vmatpush1.msra.mxu0 %v1466
    %1509 = vmatprep.subr.mxu0 0.0
    %1510 = vmatpush1.msra.mxu0 %v1467
    %1511 = vmatprep.subr.mxu0 0.0
    %1512 = vmatpush1.msra.mxu0 %v1468
    %1513 = vmatprep.subr.mxu0 0.0
    %1514 = vmatpush1.msra.mxu0 %v1469
    %1515 = vmatprep.subr.mxu0 0.0
    %1516 = vmatpush1.msra.mxu0 %v1470
    %1517 = vmatprep.subr.mxu0 0.0
    %1518 = vmatpush1.msra.mxu0 %v1471
    %1519 = vmatprep.subr.mxu0 0.0
    %1520 = vmatpush1.msra.mxu0 %v1472
    %1521 = vmatprep.subr.mxu0 0.0
    %1522 = vmatpush1.msra.mxu0 %v1473
    %1523 = vmatprep.subr.mxu0 0.0
    %1524 = vmatpush1.msra.mxu0 %v1474
    %1525 = vmatprep.subr.mxu0 0.0
    %1526 = vmatpush1.msra.mxu0 %v1475
    %1527 = vmatprep.subr.mxu0 0.0
    %1528 = vmatpush1.msra.mxu0 %v1476
    %1529 = vmatprep.subr.mxu0 0.0
    %1530 = vmatpush1.msra.mxu0 %v1477
    %1531 = vmatprep.subr.mxu0 0.0
    %1532 = vmatpush1.msra.mxu0 %v1478
    %1533 = vmatprep.subr.mxu0 0.0
    %1534 = vmatpush1.msra.mxu0 %v1479
    %1535 = vmatprep.subr.mxu0 0.0
    %1536 = vmatpush1.msra.mxu0 %v1480
    %1537 = vmatprep.subr.mxu0 0.0
    %1538 = vmatpush1.msra.mxu0 %v1481
    %1539 = vmatprep.subr.mxu0 0.0
    %1540 = vmatpush1.msra.mxu0 %v1482
    %1541 = vmatprep.subr.mxu0 0.0
    %1542 = vmatpush1.msra.mxu0 %v1483
    %1543 = vmatprep.subr.mxu0 0.0
    %1544 = vmatpush1.msra.mxu0 %v1484
    %1545 = vmatprep.subr.mxu0 0.0
    %1546 = vmatpush1.msra.mxu0 %v1485
    %1547 = vmatprep.subr.mxu0 0.0
    %1548 = vmatpush1.msra.mxu0 %v1486
    %1549 = vmatprep.subr.mxu0 0.0
    %1550 = vmatpush1.msra.mxu0 %v1487
    %1551 = vmatprep.subr.mxu0 0.0
    %1552 = vmatpush1.msra.mxu0 %v1488
    %1553 = vmatprep.subr.mxu0 0.0
    %1554 = vmatpush1.msra.mxu0 %v1489
    %1555 = vmatprep.subr.mxu0 0.0
    %1556 = vmatpush1.msra.mxu0 %v1490
    %1557 = vmatprep.subr.mxu0 0.0
    %1558 = vmatpush1.msra.mxu0 %v1491
    %1559 = vmatprep.subr.mxu0 0.0
    %1560 = vmatpush1.msra.mxu0 %v1492
    %1561 = vmatprep.subr.mxu0 0.0
    %1562 = vmatpush1.msra.mxu0 %v1493
    %1563 = vmatprep.subr.mxu0 0.0
    %1564 = vmatpush1.msra.mxu0 %v1494
    %1565 = vmatprep.subr.mxu0 0.0
    %1566 = vmatpush1.msra.mxu0 %v1495
    %1567 = vmatprep.mubr.f32.mxu0 %v1463
    %1568 = vmatmul.mubr.f32.gmra.mrb[0].mxu0 %v1462
    %v1569 = vpop.f32.mrb[0].mxu0
    %v1570 = vadd.f32 %v1501, %v1569
    %v1571 = vpop.f32.mrb[0].mxu0
    %1572 = vdwg.mxu0
    %v1573 = vadd.f32 %v1570, %v524
    %v1574 = vld [vmem:[#allocation10] sm:$0xff]
    %v1575 = vld [vmem:[#allocation10 + $0x8] sm:$0xff]
    %v1576 = vld [vmem:[#allocation10 + $0x10] sm:$0xff]
    %v1577 = vld [vmem:[#allocation10 + $0x18] sm:$0xff]
    %v1578 = vld [vmem:[#allocation10 + $0x20] sm:$0xff]
    %v1579 = vld [vmem:[#allocation10 + $0x28] sm:$0xff]
    %v1580 = vld [vmem:[#allocation10 + $0x30] sm:$0xff]
    %v1581 = vld [vmem:[#allocation10 + $0x38] sm:$0xff]
    %v1582 = vld [vmem:[#allocation10 + $0x40] sm:$0xff]
    %v1583 = vld [vmem:[#allocation10 + $0x48] sm:$0xff]
    %v1584 = vld [vmem:[#allocation10 + $0x50] sm:$0xff]
    %v1585 = vld [vmem:[#allocation10 + $0x58] sm:$0xff]
    %v1586 = vld [vmem:[#allocation10 + $0x60] sm:$0xff]
    %v1587 = vld [vmem:[#allocation10 + $0x68] sm:$0xff]
    %v1588 = vld [vmem:[#allocation10 + $0x70] sm:$0xff]
    %v1589 = vld [vmem:[#allocation10 + $0x78] sm:$0xff]
    %v1590 = vld [vmem:[%s7] sm:$0x1]
    %v1592 = vlaneseq
    %v1593 = vshrl.u32 %v1592, 7
    %v1594 = vsub.s32 0, %v1593
    %v1595 = vrot.slane %v1590, %v1594
    %1597 = vmatprep.subr.mxu0 0.0
    %1598 = vmatpush1.msra.mxu0 %v1574
    %1599 = vmatprep.subr.mxu0 0.0
    %1600 = vmatpush1.msra.mxu0 %v1575
    %1601 = vmatprep.subr.mxu0 0.0
    %1602 = vmatpush1.msra.mxu0 %v1576
    %1603 = vmatprep.subr.mxu0 0.0
    %1604 = vmatpush1.msra.mxu0 %v1577
    %1605 = vmatprep.subr.mxu0 0.0
    %1606 = vmatpush1.msra.mxu0 %v1578
    %1607 = vmatprep.subr.mxu0 0.0
    %1608 = vmatpush1.msra.mxu0 %v1579
    %1609 = vmatprep.subr.mxu0 0.0
    %1610 = vmatpush1.msra.mxu0 %v1580
    %1611 = vmatprep.subr.mxu0 0.0
    %1612 = vmatpush1.msra.mxu0 %v1581
    %1613 = vmatprep.subr.mxu0 0.0
    %1614 = vmatpush1.msra.mxu0 %v1582
    %1615 = vmatprep.subr.mxu0 0.0
    %1616 = vmatpush1.msra.mxu0 %v1583
    %1617 = vmatprep.subr.mxu0 0.0
    %1618 = vmatpush1.msra.mxu0 %v1584
    %1619 = vmatprep.subr.mxu0 0.0
    %1620 = vmatpush1.msra.mxu0 %v1585
    %1621 = vmatprep.subr.mxu0 0.0
    %1622 = vmatpush1.msra.mxu0 %v1586
    %1623 = vmatprep.subr.mxu0 0.0
    %1624 = vmatpush1.msra.mxu0 %v1587
    %1625 = vmatprep.subr.mxu0 0.0
    %1626 = vmatpush1.msra.mxu0 %v1588
    %1627 = vmatprep.subr.mxu0 0.0
    %1628 = vmatpush1.msra.mxu0 %v1589
    %1629 = vmatprep.subr.mxu0 0.0
    %1630 = vmatpush1.msra.mxu0 0.0
    %1631 = vmatprep.subr.mxu0 0.0
    %1632 = vmatpush1.msra.mxu0 0.0
    %1633 = vmatprep.subr.mxu0 0.0
    %1634 = vmatpush1.msra.mxu0 0.0
    %1635 = vmatprep.subr.mxu0 0.0
    %1636 = vmatpush1.msra.mxu0 0.0
    %1637 = vmatprep.subr.mxu0 0.0
    %1638 = vmatpush1.msra.mxu0 0.0
    %1639 = vmatprep.subr.mxu0 0.0
    %1640 = vmatpush1.msra.mxu0 0.0
    %1641 = vmatprep.subr.mxu0 0.0
    %1642 = vmatpush1.msra.mxu0 0.0
    %1643 = vmatprep.subr.mxu0 0.0
    %1644 = vmatpush1.msra.mxu0 0.0
    %1645 = vmatprep.subr.mxu0 0.0
    %1646 = vmatpush1.msra.mxu0 0.0
    %1647 = vmatprep.subr.mxu0 0.0
    %1648 = vmatpush1.msra.mxu0 0.0
    %1649 = vmatprep.subr.mxu0 0.0
    %1650 = vmatpush1.msra.mxu0 0.0
    %1651 = vmatprep.subr.mxu0 0.0
    %1652 = vmatpush1.msra.mxu0 0.0
    %1653 = vmatprep.subr.mxu0 0.0
    %1654 = vmatpush1.msra.mxu0 0.0
    %1655 = vmatprep.subr.mxu0 0.0
    %1656 = vmatpush1.msra.mxu0 0.0
    %1657 = vmatprep.subr.mxu0 0.0
    %1658 = vmatpush1.msra.mxu0 0.0
    %1659 = vmatprep.subr.mxu0 0.0
    %1660 = vmatpush1.msra.mxu0 0.0
    %1661 = vmatprep.mubr.f32.mxu0 0.0
    %1662 = vmatmul.mubr.f32.gmra.mrb[0].mxu0 %v1573
    %v1663 = vpop.f32.mrb[0].mxu0
    %v1664 = vadd.f32 %v1595, %v1663
    %v1665 = vpop.f32.mrb[0].mxu0
    %1666 = vdwg.mxu0
    %v1667 = vmax.f32 %v1664, 0.0
    %v1668 = vld [vmem:[#allocation12] sm:$0xff]
    %v1669 = vld [vmem:[#allocation12 + $0x8] sm:$0xff]
    %v1670 = vld [vmem:[#allocation12 + $0x10] sm:$0xff]
    %v1671 = vld [vmem:[#allocation12 + $0x18] sm:$0xff]
    %v1672 = vld [vmem:[#allocation12 + $0x20] sm:$0xff]
    %v1673 = vld [vmem:[#allocation12 + $0x28] sm:$0xff]
    %v1674 = vld [vmem:[#allocation12 + $0x30] sm:$0xff]
    %v1675 = vld [vmem:[#allocation12 + $0x38] sm:$0xff]
    %v1676 = vld [vmem:[#allocation12 + $0x40] sm:$0xff]
    %v1677 = vld [vmem:[#allocation12 + $0x48] sm:$0xff]
    %v1678 = vld [vmem:[#allocation12 + $0x50] sm:$0xff]
    %v1679 = vld [vmem:[#allocation12 + $0x58] sm:$0xff]
    %v1680 = vld [vmem:[#allocation12 + $0x60] sm:$0xff]
    %v1681 = vld [vmem:[#allocation12 + $0x68] sm:$0xff]
    %v1682 = vld [vmem:[#allocation12 + $0x70] sm:$0xff]
    %v1683 = vld [vmem:[#allocation12 + $0x78] sm:$0xff]
    %v1684 = vld [vmem:[%s9] sm:$0x1]
    %v1686 = vlaneseq
    %v1687 = vshrl.u32 %v1686, 7
    %v1688 = vsub.s32 0, %v1687
    %v1689 = vrot.slane %v1684, %v1688
    %1691 = vmatprep.subr.mxu0 0.0
    %1692 = vmatpush1.msra.mxu0 %v1668
    %1693 = vmatprep.subr.mxu0 0.0
    %1694 = vmatpush1.msra.mxu0 %v1669
    %1695 = vmatprep.subr.mxu0 0.0
    %1696 = vmatpush1.msra.mxu0 %v1670
    %1697 = vmatprep.subr.mxu0 0.0
    %1698 = vmatpush1.msra.mxu0 %v1671
    %1699 = vmatprep.subr.mxu0 0.0
    %1700 = vmatpush1.msra.mxu0 %v1672
    %1701 = vmatprep.subr.mxu0 0.0
    %1702 = vmatpush1.msra.mxu0 %v1673
    %1703 = vmatprep.subr.mxu0 0.0
    %1704 = vmatpush1.msra.mxu0 %v1674
    %1705 = vmatprep.subr.mxu0 0.0
    %1706 = vmatpush1.msra.mxu0 %v1675
    %1707 = vmatprep.subr.mxu0 0.0
    %1708 = vmatpush1.msra.mxu0 %v1676
    %1709 = vmatprep.subr.mxu0 0.0
    %1710 = vmatpush1.msra.mxu0 %v1677
    %1711 = vmatprep.subr.mxu0 0.0
    %1712 = vmatpush1.msra.mxu0 %v1678
    %1713 = vmatprep.subr.mxu0 0.0
    %1714 = vmatpush1.msra.mxu0 %v1679
    %1715 = vmatprep.subr.mxu0 0.0
    %1716 = vmatpush1.msra.mxu0 %v1680
    %1717 = vmatprep.subr.mxu0 0.0
    %1718 = vmatpush1.msra.mxu0 %v1681
    %1719 = vmatprep.subr.mxu0 0.0
    %1720 = vmatpush1.msra.mxu0 %v1682
    %1721 = vmatprep.subr.mxu0 0.0
    %1722 = vmatpush1.msra.mxu0 %v1683
    %1723 = vmatprep.subr.mxu0 0.0
    %1724 = vmatpush1.msra.mxu0 0.0
    %1725 = vmatprep.subr.mxu0 0.0
    %1726 = vmatpush1.msra.mxu0 0.0
    %1727 = vmatprep.subr.mxu0 0.0
    %1728 = vmatpush1.msra.mxu0 0.0
    %1729 = vmatprep.subr.mxu0 0.0
    %1730 = vmatpush1.msra.mxu0 0.0
    %1731 = vmatprep.subr.mxu0 0.0
    %1732 = vmatpush1.msra.mxu0 0.0
    %1733 = vmatprep.subr.mxu0 0.0
    %1734 = vmatpush1.msra.mxu0 0.0
    %1735 = vmatprep.subr.mxu0 0.0
    %1736 = vmatpush1.msra.mxu0 0.0
    %1737 = vmatprep.subr.mxu0 0.0
    %1738 = vmatpush1.msra.mxu0 0.0
    %1739 = vmatprep.subr.mxu0 0.0
    %1740 = vmatpush1.msra.mxu0 0.0
    %1741 = vmatprep.subr.mxu0 0.0
    %1742 = vmatpush1.msra.mxu0 0.0
    %1743 = vmatprep.subr.mxu0 0.0
    %1744 = vmatpush1.msra.mxu0 0.0
    %1745 = vmatprep.subr.mxu0 0.0
    %1746 = vmatpush1.msra.mxu0 0.0
    %1747 = vmatprep.subr.mxu0 0.0
    %1748 = vmatpush1.msra.mxu0 0.0
    %1749 = vmatprep.subr.mxu0 0.0
    %1750 = vmatpush1.msra.mxu0 0.0
    %1751 = vmatprep.subr.mxu0 0.0
    %1752 = vmatpush1.msra.mxu0 0.0
    %1753 = vmatprep.subr.mxu0 0.0
    %1754 = vmatpush1.msra.mxu0 0.0
    %1755 = vmatprep.mubr.f32.mxu0 0.0
    %1756 = vmatmul.mubr.f32.gmra.mrb[0].mxu0 %v1667
    %v1757 = vpop.f32.mrb[0].mxu0
    %v1758 = vadd.f32 %v1689, %v1757
    %v1759 = vpop.f32.mrb[0].mxu0
    %1760 = vdwg.mxu0
    %1761 = vst [vmem:[#allocation2 + $0x8] sm:$0x1] %v1758
    %1762 = vst [vmem:[#allocation2 + $0x17] sm:$0x2] %v1758
    %v1763 = vld [vmem:[#allocation7] sm:$0xff]
    %v1764 = vld [vmem:[#allocation7 + $0x8] sm:$0xff]
    %v1765 = vld [vmem:[#allocation7 + $0x10] sm:$0xff]
    %v1766 = vld [vmem:[#allocation7 + $0x18] sm:$0xff]
    %v1767 = vld [vmem:[#allocation7 + $0x20] sm:$0xff]
    %v1768 = vld [vmem:[#allocation7 + $0x28] sm:$0xff]
    %v1769 = vld [vmem:[#allocation7 + $0x30] sm:$0xff]
    %v1770 = vld [vmem:[#allocation7 + $0x38] sm:$0xff]
    %v1771 = vld [vmem:[#allocation7 + $0x40] sm:$0xff]
    %v1772 = vld [vmem:[#allocation7 + $0x48] sm:$0xff]
    %v1773 = vld [vmem:[#allocation7 + $0x50] sm:$0xff]
    %v1774 = vld [vmem:[#allocation7 + $0x58] sm:$0xff]
    %v1775 = vld [vmem:[#allocation7 + $0x60] sm:$0xff]
    %v1776 = vld [vmem:[#allocation7 + $0x68] sm:$0xff]
    %v1777 = vld [vmem:[#allocation7 + $0x70] sm:$0xff]
    %v1778 = vld [vmem:[#allocation7 + $0x78] sm:$0xff]
    %v1779 = vld [vmem:[#allocation7 + $0x80] sm:$0xff]
    %v1780 = vld [vmem:[#allocation7 + $0x88] sm:$0xff]
    %v1781 = vld [vmem:[#allocation7 + $0x90] sm:$0xff]
    %v1782 = vld [vmem:[#allocation7 + $0x98] sm:$0xff]
    %v1783 = vld [vmem:[#allocation7 + $0xa0] sm:$0xff]
    %v1784 = vld [vmem:[#allocation7 + $0xa8] sm:$0xff]
    %v1785 = vld [vmem:[#allocation7 + $0xb0] sm:$0xff]
    %v1786 = vld [vmem:[#allocation7 + $0xb8] sm:$0xff]
    %v1787 = vld [vmem:[#allocation7 + $0xc0] sm:$0xff]
    %v1788 = vld [vmem:[#allocation7 + $0xc8] sm:$0xff]
    %v1789 = vld [vmem:[#allocation7 + $0xd0] sm:$0xff]
    %v1790 = vld [vmem:[#allocation7 + $0xd8] sm:$0xff]
    %v1791 = vld [vmem:[#allocation7 + $0xe0] sm:$0xff]
    %v1792 = vld [vmem:[#allocation7 + $0xe8] sm:$0xff]
    %v1793 = vld [vmem:[#allocation7 + $0xf0] sm:$0xff]
    %v1794 = vld [vmem:[#allocation7 + $0xf8] sm:$0xff]
    %v1795 = vld [vmem:[#allocation7 + $0x100] sm:$0xff]
    %v1796 = vld [vmem:[#allocation7 + $0x108] sm:$0xff]
    %v1797 = vld [vmem:[#allocation7 + $0x110] sm:$0xff]
    %v1798 = vld [vmem:[#allocation7 + $0x118] sm:$0xff]
    %v1799 = vld [vmem:[#allocation7 + $0x120] sm:$0xff]
    %v1800 = vld [vmem:[#allocation7 + $0x128] sm:$0xff]
    %v1801 = vld [vmem:[#allocation7 + $0x130] sm:$0xff]
    %v1802 = vld [vmem:[#allocation7 + $0x138] sm:$0xff]
    %v1803 = vld [vmem:[#allocation7 + $0x140] sm:$0xff]
    %v1804 = vld [vmem:[#allocation7 + $0x148] sm:$0xff]
    %v1805 = vld [vmem:[#allocation7 + $0x150] sm:$0xff]
    %v1806 = vld [vmem:[#allocation7 + $0x158] sm:$0xff]
    %v1807 = vld [vmem:[#allocation7 + $0x160] sm:$0xff]
    %v1808 = vld [vmem:[#allocation7 + $0x168] sm:$0xff]
    %v1809 = vld [vmem:[#allocation7 + $0x170] sm:$0xff]
    %v1810 = vld [vmem:[#allocation7 + $0x178] sm:$0xff]
    %v1811 = vld [vmem:[#allocation7 + $0x180] sm:$0xff]
    %v1812 = vld [vmem:[#allocation7 + $0x188] sm:$0xff]
    %v1813 = vld [vmem:[#allocation7 + $0x190] sm:$0xff]
    %v1814 = vld [vmem:[#allocation7 + $0x198] sm:$0xff]
    %v1815 = vld [vmem:[#allocation7 + $0x1a0] sm:$0xff]
    %v1816 = vld [vmem:[#allocation7 + $0x1a8] sm:$0xff]
    %v1817 = vld [vmem:[#allocation7 + $0x1b0] sm:$0xff]
    %v1818 = vld [vmem:[#allocation7 + $0x1b8] sm:$0xff]
    %v1819 = vld [vmem:[#allocation7 + $0x1c0] sm:$0xff]
    %v1820 = vld [vmem:[#allocation7 + $0x1c8] sm:$0xff]
    %v1821 = vld [vmem:[#allocation7 + $0x1d0] sm:$0xff]
    %v1822 = vld [vmem:[#allocation7 + $0x1d8] sm:$0xff]
    %v1823 = vld [vmem:[#allocation7 + $0x1e0] sm:$0xff]
    %v1824 = vld [vmem:[#allocation7 + $0x1e8] sm:$0xff]
    %v1825 = vld [vmem:[#allocation7 + $0x1f0] sm:$0xff]
    %v1826 = vld [vmem:[#allocation7 + $0x1f8] sm:$0xff]
    %v1827 = vld [vmem:[#allocation7 + $0x200] sm:$0xff]
    %v1828 = vld [vmem:[#allocation7 + $0x208] sm:$0xff]
    %v1829 = vld [vmem:[#allocation7 + $0x210] sm:$0xff]
    %v1830 = vld [vmem:[#allocation7 + $0x218] sm:$0xff]
    %v1831 = vld [vmem:[#allocation7 + $0x220] sm:$0xff]
    %v1832 = vld [vmem:[#allocation7 + $0x228] sm:$0xff]
    %v1833 = vld [vmem:[#allocation7 + $0x230] sm:$0xff]
    %v1834 = vld [vmem:[#allocation7 + $0x238] sm:$0xff]
    %v1835 = vld [vmem:[#allocation7 + $0x240] sm:$0xff]
    %v1836 = vld [vmem:[#allocation7 + $0x248] sm:$0xff]
    %v1837 = vld [vmem:[#allocation7 + $0x250] sm:$0xff]
    %v1838 = vld [vmem:[#allocation7 + $0x258] sm:$0xff]
    %v1839 = vld [vmem:[#allocation7 + $0x260] sm:$0xff]
    %v1840 = vld [vmem:[#allocation7 + $0x268] sm:$0xff]
    %v1841 = vld [vmem:[#allocation7 + $0x270] sm:$0xff]
    %v1842 = vld [vmem:[#allocation7 + $0x278] sm:$0xff]
    %1843 = vmatprep.subr.mxu0 %v1764
    %1844 = vmatpush1.msra.mxu0 %v1763
    %1845 = vmatprep.subr.mxu0 %v1769
    %1846 = vmatpush1.msra.mxu0 %v1768
    %1847 = vmatprep.subr.mxu0 %v1774
    %1848 = vmatpush1.msra.mxu0 %v1773
    %1849 = vmatprep.subr.mxu0 %v1779
    %1850 = vmatpush1.msra.mxu0 %v1778
    %1851 = vmatprep.subr.mxu0 %v1784
    %1852 = vmatpush1.msra.mxu0 %v1783
    %1853 = vmatprep.subr.mxu0 %v1789
    %1854 = vmatpush1.msra.mxu0 %v1788
    %1855 = vmatprep.subr.mxu0 %v1794
    %1856 = vmatpush1.msra.mxu0 %v1793
    %1857 = vmatprep.subr.mxu0 %v1799
    %1858 = vmatpush1.msra.mxu0 %v1798
    %1859 = vmatprep.subr.mxu0 %v1804
    %1860 = vmatpush1.msra.mxu0 %v1803
    %1861 = vmatprep.subr.mxu0 %v1809
    %1862 = vmatpush1.msra.mxu0 %v1808
    %1863 = vmatprep.subr.mxu0 %v1814
    %1864 = vmatpush1.msra.mxu0 %v1813
    %1865 = vmatprep.subr.mxu0 %v1819
    %1866 = vmatpush1.msra.mxu0 %v1818
    %1867 = vmatprep.subr.mxu0 %v1824
    %1868 = vmatpush1.msra.mxu0 %v1823
    %1869 = vmatprep.subr.mxu0 %v1829
    %1870 = vmatpush1.msra.mxu0 %v1828
    %1871 = vmatprep.subr.mxu0 %v1834
    %1872 = vmatpush1.msra.mxu0 %v1833
    %1873 = vmatprep.subr.mxu0 %v1839
    %1874 = vmatpush1.msra.mxu0 %v1838
    %1875 = vmatprep.subr.mxu0 0.0
    %1876 = vmatpush1.msra.mxu0 0.0
    %1877 = vmatprep.subr.mxu0 0.0
    %1878 = vmatpush1.msra.mxu0 0.0
    %1879 = vmatprep.subr.mxu0 0.0
    %1880 = vmatpush1.msra.mxu0 0.0
    %1881 = vmatprep.subr.mxu0 0.0
    %1882 = vmatpush1.msra.mxu0 0.0
    %1883 = vmatprep.subr.mxu0 0.0
    %1884 = vmatpush1.msra.mxu0 0.0
    %1885 = vmatprep.subr.mxu0 0.0
    %1886 = vmatpush1.msra.mxu0 0.0
    %1887 = vmatprep.subr.mxu0 0.0
    %1888 = vmatpush1.msra.mxu0 0.0
    %1889 = vmatprep.subr.mxu0 0.0
    %1890 = vmatpush1.msra.mxu0 0.0
    %1891 = vmatprep.subr.mxu0 0.0
    %1892 = vmatpush1.msra.mxu0 0.0
    %1893 = vmatprep.subr.mxu0 0.0
    %1894 = vmatpush1.msra.mxu0 0.0
    %1895 = vmatprep.subr.mxu0 0.0
    %1896 = vmatpush1.msra.mxu0 0.0
    %1897 = vmatprep.subr.mxu0 0.0
    %1898 = vmatpush1.msra.mxu0 0.0
    %1899 = vmatprep.subr.mxu0 0.0
    %1900 = vmatpush1.msra.mxu0 0.0
    %1901 = vmatprep.subr.mxu0 0.0
    %1902 = vmatpush1.msra.mxu0 0.0
    %1903 = vmatprep.subr.mxu0 0.0
    %1904 = vmatpush1.msra.mxu0 0.0
    %1905 = vmatprep.subr.mxu0 0.0
    %1906 = vmatpush1.msra.mxu0 0.0
    %1907 = vmatprep.mubr.f32.mxu0 0.0
    %1908 = vmatmul.mubr.f32.gmra.mrb[0].mxu0 %v1758
    %v1909 = vpop.f32.mrb[0].mxu0
    %v1910 = vadd.f32 0.0, %v1909
    %v1911 = vpop.f32.mrb[0].mxu0
    %v1912 = vadd.f32 0.0, %v1911
    %1913 = vdwg.mxu0
    %1914 = vmatprep.subr.mxu0 %v1766
    %1915 = vmatpush1.msra.mxu0 %v1765
    %1916 = vmatprep.subr.mxu0 %v1771
    %1917 = vmatpush1.msra.mxu0 %v1770
    %1918 = vmatprep.subr.mxu0 %v1776
    %1919 = vmatpush1.msra.mxu0 %v1775
    %1920 = vmatprep.subr.mxu0 %v1781
    %1921 = vmatpush1.msra.mxu0 %v1780
    %1922 = vmatprep.subr.mxu0 %v1786
    %1923 = vmatpush1.msra.mxu0 %v1785
    %1924 = vmatprep.subr.mxu0 %v1791
    %1925 = vmatpush1.msra.mxu0 %v1790
    %1926 = vmatprep.subr.mxu0 %v1796
    %1927 = vmatpush1.msra.mxu0 %v1795
    %1928 = vmatprep.subr.mxu0 %v1801
    %1929 = vmatpush1.msra.mxu0 %v1800
    %1930 = vmatprep.subr.mxu0 %v1806
    %1931 = vmatpush1.msra.mxu0 %v1805
    %1932 = vmatprep.subr.mxu0 %v1811
    %1933 = vmatpush1.msra.mxu0 %v1810
    %1934 = vmatprep.subr.mxu0 %v1816
    %1935 = vmatpush1.msra.mxu0 %v1815
    %1936 = vmatprep.subr.mxu0 %v1821
    %1937 = vmatpush1.msra.mxu0 %v1820
    %1938 = vmatprep.subr.mxu0 %v1826
    %1939 = vmatpush1.msra.mxu0 %v1825
    %1940 = vmatprep.subr.mxu0 %v1831
    %1941 = vmatpush1.msra.mxu0 %v1830
    %1942 = vmatprep.subr.mxu0 %v1836
    %1943 = vmatpush1.msra.mxu0 %v1835
    %1944 = vmatprep.subr.mxu0 %v1841
    %1945 = vmatpush1.msra.mxu0 %v1840
    %1946 = vmatprep.subr.mxu0 0.0
    %1947 = vmatpush1.msra.mxu0 0.0
    %1948 = vmatprep.subr.mxu0 0.0
    %1949 = vmatpush1.msra.mxu0 0.0
    %1950 = vmatprep.subr.mxu0 0.0
    %1951 = vmatpush1.msra.mxu0 0.0
    %1952 = vmatprep.subr.mxu0 0.0
    %1953 = vmatpush1.msra.mxu0 0.0
    %1954 = vmatprep.subr.mxu0 0.0
    %1955 = vmatpush1.msra.mxu0 0.0
    %1956 = vmatprep.subr.mxu0 0.0
    %1957 = vmatpush1.msra.mxu0 0.0
    %1958 = vmatprep.subr.mxu0 0.0
    %1959 = vmatpush1.msra.mxu0 0.0
    %1960 = vmatprep.subr.mxu0 0.0
    %1961 = vmatpush1.msra.mxu0 0.0
    %1962 = vmatprep.subr.mxu0 0.0
    %1963 = vmatpush1.msra.mxu0 0.0
    %1964 = vmatprep.subr.mxu0 0.0
    %1965 = vmatpush1.msra.mxu0 0.0
    %1966 = vmatprep.subr.mxu0 0.0
    %1967 = vmatpush1.msra.mxu0 0.0
    %1968 = vmatprep.subr.mxu0 0.0
    %1969 = vmatpush1.msra.mxu0 0.0
    %1970 = vmatprep.subr.mxu0 0.0
    %1971 = vmatpush1.msra.mxu0 0.0
    %1972 = vmatprep.subr.mxu0 0.0
    %1973 = vmatpush1.msra.mxu0 0.0
    %1974 = vmatprep.subr.mxu0 0.0
    %1975 = vmatpush1.msra.mxu0 0.0
    %1976 = vmatprep.subr.mxu0 0.0
    %1977 = vmatpush1.msra.mxu0 0.0
    %1978 = vmatprep.mubr.f32.mxu0 0.0
    %1979 = vmatmul.mubr.f32.gmra.mrb[0].mxu0 %v1758
    %v1980 = vpop.f32.mrb[0].mxu0
    %v1981 = vadd.f32 0.0, %v1980
    %v1982 = vpop.f32.mrb[0].mxu0
    %v1983 = vadd.f32 0.0, %v1982
    %1984 = vdwg.mxu0
    %1985 = vmatprep.subr.mxu0 0.0
    %1986 = vmatpush1.msra.mxu0 %v1767
    %1987 = vmatprep.subr.mxu0 0.0
    %1988 = vmatpush1.msra.mxu0 %v1772
    %1989 = vmatprep.subr.mxu0 0.0
    %1990 = vmatpush1.msra.mxu0 %v1777
    %1991 = vmatprep.subr.mxu0 0.0
    %1992 = vmatpush1.msra.mxu0 %v1782
    %1993 = vmatprep.subr.mxu0 0.0
    %1994 = vmatpush1.msra.mxu0 %v1787
    %1995 = vmatprep.subr.mxu0 0.0
    %1996 = vmatpush1.msra.mxu0 %v1792
    %1997 = vmatprep.subr.mxu0 0.0
    %1998 = vmatpush1.msra.mxu0 %v1797
    %1999 = vmatprep.subr.mxu0 0.0
    %2000 = vmatpush1.msra.mxu0 %v1802
    %2001 = vmatprep.subr.mxu0 0.0
    %2002 = vmatpush1.msra.mxu0 %v1807
    %2003 = vmatprep.subr.mxu0 0.0
    %2004 = vmatpush1.msra.mxu0 %v1812
    %2005 = vmatprep.subr.mxu0 0.0
    %2006 = vmatpush1.msra.mxu0 %v1817
    %2007 = vmatprep.subr.mxu0 0.0
    %2008 = vmatpush1.msra.mxu0 %v1822
    %2009 = vmatprep.subr.mxu0 0.0
    %2010 = vmatpush1.msra.mxu0 %v1827
    %2011 = vmatprep.subr.mxu0 0.0
    %2012 = vmatpush1.msra.mxu0 %v1832
    %2013 = vmatprep.subr.mxu0 0.0
    %2014 = vmatpush1.msra.mxu0 %v1837
    %2015 = vmatprep.subr.mxu0 0.0
    %2016 = vmatpush1.msra.mxu0 %v1842
    %2017 = vmatprep.subr.mxu0 0.0
    %2018 = vmatpush1.msra.mxu0 0.0
    %2019 = vmatprep.subr.mxu0 0.0
    %2020 = vmatpush1.msra.mxu0 0.0
    %2021 = vmatprep.subr.mxu0 0.0
    %2022 = vmatpush1.msra.mxu0 0.0
    %2023 = vmatprep.subr.mxu0 0.0
    %2024 = vmatpush1.msra.mxu0 0.0
    %2025 = vmatprep.subr.mxu0 0.0
    %2026 = vmatpush1.msra.mxu0 0.0
    %2027 = vmatprep.subr.mxu0 0.0
    %2028 = vmatpush1.msra.mxu0 0.0
    %2029 = vmatprep.subr.mxu0 0.0
    %2030 = vmatpush1.msra.mxu0 0.0
    %2031 = vmatprep.subr.mxu0 0.0
    %2032 = vmatpush1.msra.mxu0 0.0
    %2033 = vmatprep.subr.mxu0 0.0
    %2034 = vmatpush1.msra.mxu0 0.0
    %2035 = vmatprep.subr.mxu0 0.0
    %2036 = vmatpush1.msra.mxu0 0.0
    %2037 = vmatprep.subr.mxu0 0.0
    %2038 = vmatpush1.msra.mxu0 0.0
    %2039 = vmatprep.subr.mxu0 0.0
    %2040 = vmatpush1.msra.mxu0 0.0
    %2041 = vmatprep.subr.mxu0 0.0
    %2042 = vmatpush1.msra.mxu0 0.0
    %2043 = vmatprep.subr.mxu0 0.0
    %2044 = vmatpush1.msra.mxu0 0.0
    %2045 = vmatprep.subr.mxu0 0.0
    %2046 = vmatpush1.msra.mxu0 0.0
    %2047 = vmatprep.subr.mxu0 0.0
    %2048 = vmatpush1.msra.mxu0 0.0
    %2049 = vmatprep.mubr.f32.mxu0 0.0
    %2050 = vmatmul.mubr.f32.gmra.mrb[0].mxu0 %v1758
    %v2051 = vpop.f32.mrb[0].mxu0
    %v2052 = vadd.f32 0.0, %v2051
    %v2053 = vpop.f32.mrb[0].mxu0
    %2054 = vdwg.mxu0
    %v2059 = vcombine.low %v1912, %v1981
    %v2060 = vcombine.low %v1983, %v2052
    %v2062 = vunpack.c.l.s4 1966171168
    %v2063 = vunpack.c.0.s8 %v2062
    %v2064 = vlaneseq
    %v2065 = vshrl.u32 %v2064, 7
    %v2066 = vsub.s32 %v2063, %v2065
    %v2067 = vrot.slane %v2059, %v2066
    %v2069 = vunpack.c.l.s4 1966171168
    %v2070 = vunpack.c.0.s8 %v2069
    %v2071 = vlaneseq
    %v2072 = vshrl.u32 %v2071, 7
    %v2073 = vsub.s32 %v2070, %v2072
    %v2074 = vrot.slane %v2060, %v2073
    %v2075 = vcombine.low %v2067, %v2074
    %v2077 = vunpack.c.l.s4 1966171168
    %v2078 = vunpack.c.0.s8 %v2077
    %v2079 = vlaneseq
    %v2080 = vshrl.u32 %v2079, 7
    %v2081 = vsub.s32 %v2078, %v2080
    %v2082 = vrot.slane %v2075, %v2081
    %s2084 = scalar_lea.vmem [#allocation3], 32
    %2085 = vst.msk [vmem:[%s2084] ss:$8 sm:$0xf] %vm865, %v2082
    %2086 = vst.msk [vmem:[%s2084] ss:$8 sm:$0x0] %vm865, %v2082
    %v2087 = vcombine.high %v2067, %v2074
    %v2089 = vunpack.c.l.s4 1966171168
    %v2090 = vunpack.c.0.s8 %v2089
    %v2091 = vlaneseq
    %v2092 = vshrl.u32 %v2091, 7
    %v2093 = vsub.s32 %v2090, %v2092
    %v2094 = vrot.slane %v2087, %v2093
    %s2096 = scalar_lea.vmem [#allocation3], 96
    %2097 = vst.msk [vmem:[%s2096] ss:$8 sm:$0xf] %vm865, %v2094
    %2098 = vst.msk [vmem:[%s2096] ss:$8 sm:$0x0] %vm865, %v2094
    %v2099 = vld [vmem:[#allocation3] sm:$0xff]
    %v2100 = vld [vmem:[#allocation3 + $0x20] sm:$0xff]
    %v2101 = vld [vmem:[#allocation3 + $0x40] sm:$0xff]
    %v2102 = vld [vmem:[#allocation3 + $0x60] sm:$0xff]
    %v2103 = vld [vmem:[#allocation3 + $0x8] sm:$0xff]
    %v2104 = vld [vmem:[#allocation3 + $0x28] sm:$0xff]
    %v2105 = vld [vmem:[#allocation3 + $0x48] sm:$0xff]
    %v2106 = vld [vmem:[#allocation3 + $0x68] sm:$0xff]
    %v2107 = vld [vmem:[#allocation3 + $0x10] sm:$0xff]
    %v2108 = vld [vmem:[#allocation3 + $0x30] sm:$0xff]
    %v2109 = vld [vmem:[#allocation3 + $0x50] sm:$0xff]
    %v2110 = vld [vmem:[#allocation3 + $0x70] sm:$0xff]
    %v2111 = vld [vmem:[#allocation3 + $0x18] sm:$0xff]
    %v2112 = vld [vmem:[#allocation3 + $0x38] sm:$0xff]
    %v2113 = vld [vmem:[#allocation3 + $0x58] sm:$0xff]
    %v2114 = vld [vmem:[#allocation3 + $0x78] sm:$0xff]
    %vm2115 = vcmp.lt.s32.totalorder %v539, 9
    %vm2116 = vmand %vm535, %vm2115
    %vm2117 = vmand %vm536, %vm2115
    %vm2118 = vmand %vm537, %vm2115
    %vm2119 = vmand %vm538, %vm2115
    %vm2120 = vmand %vm540, %vm2115
    %2121 = vmatprep.subr.mxu0 0.0
    %2122 = vmatpush1.xpose.msra.mxu0 %v2099
    %2123 = vmatprep.subr.mxu0 0.0
    %2124 = vmatpush1.xpose.msra.mxu0 %v2100
    %2125 = vmatprep.subr.mxu0 0.0
    %2126 = vmatpush1.xpose.msra.mxu0 %v2101
    %2127 = vmatprep.subr.mxu0 0.0
    %2128 = vmatpush1.xpose.msra.mxu0 %v2102
    %2129 = vmatprep.subr.mxu0 0.0
    %2130 = vmatpush1.xpose.msra.mxu0 0.0
    %2131 = vmatprep.subr.mxu0 0.0
    %2132 = vmatpush1.xpose.msra.mxu0 0.0
    %2133 = vmatprep.subr.mxu0 0.0
    %2134 = vmatpush1.xpose.msra.mxu0 0.0
    %2135 = vmatprep.subr.mxu0 0.0
    %2136 = vmatpush1.xpose.msra.mxu0 0.0
    %2137 = vmatprep.subr.mxu0 0.0
    %2138 = vmatpush1.xpose.msra.mxu0 0.0
    %2139 = vmatprep.subr.mxu0 0.0
    %2140 = vmatpush1.xpose.msra.mxu0 0.0
    %2141 = vmatprep.subr.mxu0 0.0
    %2142 = vmatpush1.xpose.msra.mxu0 0.0
    %2143 = vmatprep.subr.mxu0 0.0
    %2144 = vmatpush1.xpose.msra.mxu0 0.0
    %2145 = vmatprep.subr.mxu0 0.0
    %2146 = vmatpush1.xpose.msra.mxu0 0.0
    %2147 = vmatprep.subr.mxu0 0.0
    %2148 = vmatpush1.xpose.msra.mxu0 0.0
    %2149 = vmatprep.subr.mxu0 0.0
    %2150 = vmatpush1.xpose.msra.mxu0 0.0
    %2151 = vmatprep.subr.mxu0 0.0
    %2152 = vmatpush1.xpose.msra.mxu0 0.0
    %2153 = vmatprep.subr.mxu0 0.0
    %2154 = vmatpush1.xpose.msra.mxu0 0.0
    %2155 = vmatprep.subr.mxu0 0.0
    %2156 = vmatpush1.xpose.msra.mxu0 0.0
    %2157 = vmatprep.subr.mxu0 0.0
    %2158 = vmatpush1.xpose.msra.mxu0 0.0
    %2159 = vmatprep.subr.mxu0 0.0
    %2160 = vmatpush1.xpose.msra.mxu0 0.0
    %2161 = vmatprep.subr.mxu0 0.0
    %2162 = vmatpush1.xpose.msra.mxu0 0.0
    %2163 = vmatprep.subr.mxu0 0.0
    %2164 = vmatpush1.xpose.msra.mxu0 0.0
    %2165 = vmatprep.subr.mxu0 0.0
    %2166 = vmatpush1.xpose.msra.mxu0 0.0
    %2167 = vmatprep.subr.mxu0 0.0
    %2168 = vmatpush1.xpose.msra.mxu0 0.0
    %2169 = vmatprep.subr.mxu0 0.0
    %2170 = vmatpush1.xpose.msra.mxu0 0.0
    %2171 = vmatprep.subr.mxu0 0.0
    %2172 = vmatpush1.xpose.msra.mxu0 0.0
    %2173 = vmatprep.subr.mxu0 0.0
    %2174 = vmatpush1.xpose.msra.mxu0 0.0
    %2175 = vmatprep.subr.mxu0 0.0
    %2176 = vmatpush1.xpose.msra.mxu0 0.0
    %2177 = vmatprep.subr.mxu0 0.0
    %2178 = vmatpush1.xpose.msra.mxu0 0.0
    %2179 = vmatprep.subr.mxu0 0.0
    %2180 = vmatpush1.xpose.msra.mxu0 0.0
    %2181 = vmatprep.subr.mxu0 0.0
    %2182 = vmatpush1.xpose.msra.mxu0 0.0
    %2183 = vmatprep.subr.mxu0 0.0
    %2184 = vmatpush1.xpose.msra.mxu0 0.0
    %2185 = vmatprep.mubr.f32.mxu0 0.0
    %2186 = vmatmul.mubr.f32.gmra.mrb[0].mxu0 %v1910
    %v2187 = vpop.f32.mrb[0].mxu0
    %v2188 = vadd.f32 0.0, %v2187
    %v2189 = vpop.f32.mrb[0].mxu0
    %2190 = vdwg.mxu0
    %v2191 = vmul.f32 %v2188, 0.15811388
    %v2192 = vmul.f32 %v2191, 1.442695
    %v2193 = vpow.pop %v2192
    %v2194 = vsel %vm2120, %v2193, 0.0
    %2195 = vmatprep.subr.mxu0 0.0
    %2196 = vmatpush1.xpose.msra.mxu0 %v2103
    %2197 = vmatprep.subr.mxu0 0.0
    %2198 = vmatpush1.xpose.msra.mxu0 %v2104
    %2199 = vmatprep.subr.mxu0 0.0
    %2200 = vmatpush1.xpose.msra.mxu0 %v2105
    %2201 = vmatprep.subr.mxu0 0.0
    %2202 = vmatpush1.xpose.msra.mxu0 %v2106
    %2203 = vmatprep.subr.mxu0 0.0
    %2204 = vmatpush1.xpose.msra.mxu0 0.0
    %2205 = vmatprep.subr.mxu0 0.0
    %2206 = vmatpush1.xpose.msra.mxu0 0.0
    %2207 = vmatprep.subr.mxu0 0.0
    %2208 = vmatpush1.xpose.msra.mxu0 0.0
    %2209 = vmatprep.subr.mxu0 0.0
    %2210 = vmatpush1.xpose.msra.mxu0 0.0
    %2211 = vmatprep.subr.mxu0 0.0
    %2212 = vmatpush1.xpose.msra.mxu0 0.0
    %2213 = vmatprep.subr.mxu0 0.0
    %2214 = vmatpush1.xpose.msra.mxu0 0.0
    %2215 = vmatprep.subr.mxu0 0.0
    %2216 = vmatpush1.xpose.msra.mxu0 0.0
    %2217 = vmatprep.subr.mxu0 0.0
    %2218 = vmatpush1.xpose.msra.mxu0 0.0
    %2219 = vmatprep.subr.mxu0 0.0
    %2220 = vmatpush1.xpose.msra.mxu0 0.0
    %2221 = vmatprep.subr.mxu0 0.0
    %2222 = vmatpush1.xpose.msra.mxu0 0.0
    %2223 = vmatprep.subr.mxu0 0.0
    %2224 = vmatpush1.xpose.msra.mxu0 0.0
    %2225 = vmatprep.subr.mxu0 0.0
    %2226 = vmatpush1.xpose.msra.mxu0 0.0
    %2227 = vmatprep.subr.mxu0 0.0
    %2228 = vmatpush1.xpose.msra.mxu0 0.0
    %2229 = vmatprep.subr.mxu0 0.0
    %2230 = vmatpush1.xpose.msra.mxu0 0.0
    %2231 = vmatprep.subr.mxu0 0.0
    %2232 = vmatpush1.xpose.msra.mxu0 0.0
    %2233 = vmatprep.subr.mxu0 0.0
    %2234 = vmatpush1.xpose.msra.mxu0 0.0
    %2235 = vmatprep.subr.mxu0 0.0
    %2236 = vmatpush1.xpose.msra.mxu0 0.0
    %2237 = vmatprep.subr.mxu0 0.0
    %2238 = vmatpush1.xpose.msra.mxu0 0.0
    %2239 = vmatprep.subr.mxu0 0.0
    %2240 = vmatpush1.xpose.msra.mxu0 0.0
    %2241 = vmatprep.subr.mxu0 0.0
    %2242 = vmatpush1.xpose.msra.mxu0 0.0
    %2243 = vmatprep.subr.mxu0 0.0
    %2244 = vmatpush1.xpose.msra.mxu0 0.0
    %2245 = vmatprep.subr.mxu0 0.0
    %2246 = vmatpush1.xpose.msra.mxu0 0.0
    %2247 = vmatprep.subr.mxu0 0.0
    %2248 = vmatpush1.xpose.msra.mxu0 0.0
    %2249 = vmatprep.subr.mxu0 0.0
    %2250 = vmatpush1.xpose.msra.mxu0 0.0
    %2251 = vmatprep.subr.mxu0 0.0
    %2252 = vmatpush1.xpose.msra.mxu0 0.0
    %2253 = vmatprep.subr.mxu0 0.0
    %2254 = vmatpush1.xpose.msra.mxu0 0.0
    %2255 = vmatprep.subr.mxu0 0.0
    %2256 = vmatpush1.xpose.msra.mxu0 0.0
    %2257 = vmatprep.subr.mxu0 0.0
    %2258 = vmatpush1.xpose.msra.mxu0 0.0
    %2259 = vmatprep.mubr.f32.mxu0 0.0
    %2260 = vmatmul.mubr.f32.gmra.mrb[0].mxu0 %v1910
    %v2261 = vpop.f32.mrb[0].mxu0
    %v2262 = vadd.f32 0.0, %v2261
    %v2263 = vpop.f32.mrb[0].mxu0
    %2264 = vdwg.mxu0
    %v2265 = vmul.f32 %v2262, 0.15811388
    %v2266 = vmul.f32 %v2265, 1.442695
    %v2267 = vpow.pop %v2266
    %2268 = vmatprep.subr.mxu0 0.0
    %2269 = vmatpush1.xpose.msra.mxu0 %v2103
    %2270 = vmatprep.subr.mxu0 0.0
    %2271 = vmatpush1.xpose.msra.mxu0 %v2104
    %2272 = vmatprep.subr.mxu0 0.0
    %2273 = vmatpush1.xpose.msra.mxu0 %v2105
    %2274 = vmatprep.subr.mxu0 0.0
    %2275 = vmatpush1.xpose.msra.mxu0 %v2106
    %2276 = vmatprep.subr.mxu0 0.0
    %2277 = vmatpush1.xpose.msra.mxu0 0.0
    %2278 = vmatprep.subr.mxu0 0.0
    %2279 = vmatpush1.xpose.msra.mxu0 0.0
    %2280 = vmatprep.subr.mxu0 0.0
    %2281 = vmatpush1.xpose.msra.mxu0 0.0
    %2282 = vmatprep.subr.mxu0 0.0
    %2283 = vmatpush1.xpose.msra.mxu0 0.0
    %2284 = vmatprep.subr.mxu0 0.0
    %2285 = vmatpush1.xpose.msra.mxu0 0.0
    %2286 = vmatprep.subr.mxu0 0.0
    %2287 = vmatpush1.xpose.msra.mxu0 0.0
    %2288 = vmatprep.subr.mxu0 0.0
    %2289 = vmatpush1.xpose.msra.mxu0 0.0
    %2290 = vmatprep.subr.mxu0 0.0
    %2291 = vmatpush1.xpose.msra.mxu0 0.0
    %2292 = vmatprep.subr.mxu0 0.0
    %2293 = vmatpush1.xpose.msra.mxu0 0.0
    %2294 = vmatprep.subr.mxu0 0.0
    %2295 = vmatpush1.xpose.msra.mxu0 0.0
    %2296 = vmatprep.subr.mxu0 0.0
    %2297 = vmatpush1.xpose.msra.mxu0 0.0
    %2298 = vmatprep.subr.mxu0 0.0
    %2299 = vmatpush1.xpose.msra.mxu0 0.0
    %2300 = vmatprep.subr.mxu0 0.0
    %2301 = vmatpush1.xpose.msra.mxu0 0.0
    %2302 = vmatprep.subr.mxu0 0.0
    %2303 = vmatpush1.xpose.msra.mxu0 0.0
    %2304 = vmatprep.subr.mxu0 0.0
    %2305 = vmatpush1.xpose.msra.mxu0 0.0
    %2306 = vmatprep.subr.mxu0 0.0
    %2307 = vmatpush1.xpose.msra.mxu0 0.0
    %2308 = vmatprep.subr.mxu0 0.0
    %2309 = vmatpush1.xpose.msra.mxu0 0.0
    %2310 = vmatprep.subr.mxu0 0.0
    %2311 = vmatpush1.xpose.msra.mxu0 0.0
    %2312 = vmatprep.subr.mxu0 0.0
    %2313 = vmatpush1.xpose.msra.mxu0 0.0
    %2314 = vmatprep.subr.mxu0 0.0
    %2315 = vmatpush1.xpose.msra.mxu0 0.0
    %2316 = vmatprep.subr.mxu0 0.0
    %2317 = vmatpush1.xpose.msra.mxu0 0.0
    %2318 = vmatprep.subr.mxu0 0.0
    %2319 = vmatpush1.xpose.msra.mxu0 0.0
    %2320 = vmatprep.subr.mxu0 0.0
    %2321 = vmatpush1.xpose.msra.mxu0 0.0
    %2322 = vmatprep.subr.mxu0 0.0
    %2323 = vmatpush1.xpose.msra.mxu0 0.0
    %2324 = vmatprep.subr.mxu0 0.0
    %2325 = vmatpush1.xpose.msra.mxu0 0.0
    %2326 = vmatprep.subr.mxu0 0.0
    %2327 = vmatpush1.xpose.msra.mxu0 0.0
    %2328 = vmatprep.subr.mxu0 0.0
    %2329 = vmatpush1.xpose.msra.mxu0 0.0
    %2330 = vmatprep.subr.mxu0 0.0
    %2331 = vmatpush1.xpose.msra.mxu0 0.0
    %2332 = vmatprep.mubr.f32.mxu0 0.0
    %2333 = vmatmul.mubr.f32.gmra.mrb[0].mxu0 %v2099
    %v2334 = vpop.f32.mrb[0].mxu0
    %v2335 = vadd.f32 0.0, %v2334
    %v2336 = vpop.f32.mrb[0].mxu0
    %2337 = vmatprep.mubr.f32.mxu0 0.0
    %2338 = vmatmul.mubr.f32.gmra.mrb[0].mxu0 %v2100
    %v2339 = vpop.f32.mrb[0].mxu0
    %v2340 = vadd.f32 0.0, %v2339
    %v2341 = vpop.f32.mrb[0].mxu0
    %2342 = vmatprep.mubr.f32.mxu0 0.0
    %2343 = vmatmul.mubr.f32.gmra.mrb[0].mxu0 %v2101
    %v2344 = vpop.f32.mrb[0].mxu0
    %v2345 = vadd.f32 0.0, %v2344
    %v2346 = vpop.f32.mrb[0].mxu0
    %2347 = vmatprep.mubr.f32.mxu0 0.0
    %2348 = vmatmul.mubr.f32.gmra.mrb[0].mxu0 %v2102
    %v2349 = vpop.f32.mrb[0].mxu0
    %v2350 = vadd.f32 0.0, %v2349
    %v2351 = vpop.f32.mrb[0].mxu0
    %2352 = vdwg.mxu0
    %v2353 = vmul.f32 %v2335, 0.15811388
    %v2354 = vmul.f32 %v2340, 0.15811388
    %v2355 = vmul.f32 %v2345, 0.15811388
    %v2356 = vmul.f32 %v2350, 0.15811388
    %v2357 = vmul.f32 %v2353, 1.442695
    %v2358 = vpow.pop %v2357
    %v2359 = vmul.f32 %v2354, 1.442695
    %v2360 = vpow.pop %v2359
    %v2361 = vmul.f32 %v2355, 1.442695
    %v2362 = vpow.pop %v2361
    %v2363 = vmul.f32 %v2356, 1.442695
    %v2364 = vpow.pop %v2363
    %v2365 = vsel %vm2116, %v2358, 0.0
    %v2366 = vsel %vm2117, %v2360, 0.0
    %v2367 = vsel %vm2118, %v2362, 0.0
    %v2368 = vsel %vm2119, %v2364, 0.0
    %v2370 = vsel %vm157, %v2267, 0
    %v2373 = vsel %vm157, %v2365, 0
    %v2376 = vsel %vm157, %v2366, 0
    %v2379 = vsel %vm157, %v2367, 0
    %v2382 = vsel %vm157, %v2368, 0
    %2384 = vmatprep.subr.mxu0 0.0
    %2385 = vmatpush1.xpose.msra.mxu0 %v2373
    %2386 = vmatprep.subr.mxu0 0.0
    %2387 = vmatpush1.xpose.msra.mxu0 %v2376
    %2388 = vmatprep.subr.mxu0 0.0
    %2389 = vmatpush1.xpose.msra.mxu0 %v2379
    %2390 = vmatprep.subr.mxu0 0.0
    %2391 = vmatpush1.xpose.msra.mxu0 %v2382
    %2392 = vmatprep.subr.mxu0 0.0
    %2393 = vmatpush1.xpose.msra.mxu0 0.0
    %2394 = vmatprep.subr.mxu0 0.0
    %2395 = vmatpush1.xpose.msra.mxu0 0.0
    %2396 = vmatprep.subr.mxu0 0.0
    %2397 = vmatpush1.xpose.msra.mxu0 0.0
    %2398 = vmatprep.subr.mxu0 0.0
    %2399 = vmatpush1.xpose.msra.mxu0 0.0
    %2400 = vmatprep.subr.mxu0 0.0
    %2401 = vmatpush1.xpose.msra.mxu0 0.0
    %2402 = vmatprep.subr.mxu0 0.0
    %2403 = vmatpush1.xpose.msra.mxu0 0.0
    %2404 = vmatprep.subr.mxu0 0.0
    %2405 = vmatpush1.xpose.msra.mxu0 0.0
    %2406 = vmatprep.subr.mxu0 0.0
    %2407 = vmatpush1.xpose.msra.mxu0 0.0
    %2408 = vmatprep.subr.mxu0 0.0
    %2409 = vmatpush1.xpose.msra.mxu0 0.0
    %2410 = vmatprep.subr.mxu0 0.0
    %2411 = vmatpush1.xpose.msra.mxu0 0.0
    %2412 = vmatprep.subr.mxu0 0.0
    %2413 = vmatpush1.xpose.msra.mxu0 0.0
    %2414 = vmatprep.subr.mxu0 0.0
    %2415 = vmatpush1.xpose.msra.mxu0 0.0
    %2416 = vmatprep.subr.mxu0 0.0
    %2417 = vmatpush1.xpose.msra.mxu0 0.0
    %2418 = vmatprep.subr.mxu0 0.0
    %2419 = vmatpush1.xpose.msra.mxu0 0.0
    %2420 = vmatprep.subr.mxu0 0.0
    %2421 = vmatpush1.xpose.msra.mxu0 0.0
    %2422 = vmatprep.subr.mxu0 0.0
    %2423 = vmatpush1.xpose.msra.mxu0 0.0
    %2424 = vmatprep.subr.mxu0 0.0
    %2425 = vmatpush1.xpose.msra.mxu0 0.0
    %2426 = vmatprep.subr.mxu0 0.0
    %2427 = vmatpush1.xpose.msra.mxu0 0.0
    %2428 = vmatprep.subr.mxu0 0.0
    %2429 = vmatpush1.xpose.msra.mxu0 0.0
    %2430 = vmatprep.subr.mxu0 0.0
    %2431 = vmatpush1.xpose.msra.mxu0 0.0
    %2432 = vmatprep.subr.mxu0 0.0
    %2433 = vmatpush1.xpose.msra.mxu0 0.0
    %2434 = vmatprep.subr.mxu0 0.0
    %2435 = vmatpush1.xpose.msra.mxu0 0.0
    %2436 = vmatprep.subr.mxu0 0.0
    %2437 = vmatpush1.xpose.msra.mxu0 0.0
    %2438 = vmatprep.subr.mxu0 0.0
    %2439 = vmatpush1.xpose.msra.mxu0 0.0
    %2440 = vmatprep.subr.mxu0 0.0
    %2441 = vmatpush1.xpose.msra.mxu0 0.0
    %2442 = vmatprep.subr.mxu0 0.0
    %2443 = vmatpush1.xpose.msra.mxu0 0.0
    %2444 = vmatprep.subr.mxu0 0.0
    %2445 = vmatpush1.xpose.msra.mxu0 0.0
    %2446 = vmatprep.subr.mxu0 0.0
    %2447 = vmatpush1.xpose.msra.mxu0 0.0
    %2448 = vmatprep.mubr.f32.mxu0 0.0
    %2449 = vmatmul.mubr.f32.gmra.mrb[0].mxu0 %v2370
    %v2450 = vpop.f32.mrb[0].mxu0
    %v2451 = vadd.f32 0.0, %v2450
    %v2452 = vpop.f32.mrb[0].mxu0
    %2453 = vdwg.mxu0
    %v2454 = vmul.f32 %v2194, %v2451
    %v2456 = vsel %vm157, %v2194, 0
    %2458 = vmatprep.subr.mxu0 0.0
    %2459 = vmatpush1.msra.mxu0 %v2365
    %2460 = vmatprep.subr.mxu0 0.0
    %2461 = vmatpush1.msra.mxu0 %v2366
    %2462 = vmatprep.subr.mxu0 0.0
    %2463 = vmatpush1.msra.mxu0 %v2367
    %2464 = vmatprep.subr.mxu0 0.0
    %2465 = vmatpush1.msra.mxu0 %v2368
    %2466 = vmatprep.subr.mxu0 0.0
    %2467 = vmatpush1.msra.mxu0 0.0
    %2468 = vmatprep.subr.mxu0 0.0
    %2469 = vmatpush1.msra.mxu0 0.0
    %2470 = vmatprep.subr.mxu0 0.0
    %2471 = vmatpush1.msra.mxu0 0.0
    %2472 = vmatprep.subr.mxu0 0.0
    %2473 = vmatpush1.msra.mxu0 0.0
    %2474 = vmatprep.subr.mxu0 0.0
    %2475 = vmatpush1.msra.mxu0 0.0
    %2476 = vmatprep.subr.mxu0 0.0
    %2477 = vmatpush1.msra.mxu0 0.0
    %2478 = vmatprep.subr.mxu0 0.0
    %2479 = vmatpush1.msra.mxu0 0.0
    %2480 = vmatprep.subr.mxu0 0.0
    %2481 = vmatpush1.msra.mxu0 0.0
    %2482 = vmatprep.subr.mxu0 0.0
    %2483 = vmatpush1.msra.mxu0 0.0
    %2484 = vmatprep.subr.mxu0 0.0
    %2485 = vmatpush1.msra.mxu0 0.0
    %2486 = vmatprep.subr.mxu0 0.0
    %2487 = vmatpush1.msra.mxu0 0.0
    %2488 = vmatprep.subr.mxu0 0.0
    %2489 = vmatpush1.msra.mxu0 0.0
    %2490 = vmatprep.subr.mxu0 0.0
    %2491 = vmatpush1.msra.mxu0 0.0
    %2492 = vmatprep.subr.mxu0 0.0
    %2493 = vmatpush1.msra.mxu0 0.0
    %2494 = vmatprep.subr.mxu0 0.0
    %2495 = vmatpush1.msra.mxu0 0.0
    %2496 = vmatprep.subr.mxu0 0.0
    %2497 = vmatpush1.msra.mxu0 0.0
    %2498 = vmatprep.subr.mxu0 0.0
    %2499 = vmatpush1.msra.mxu0 0.0
    %2500 = vmatprep.subr.mxu0 0.0
    %2501 = vmatpush1.msra.mxu0 0.0
    %2502 = vmatprep.subr.mxu0 0.0
    %2503 = vmatpush1.msra.mxu0 0.0
    %2504 = vmatprep.subr.mxu0 0.0
    %2505 = vmatpush1.msra.mxu0 0.0
    %2506 = vmatprep.subr.mxu0 0.0
    %2507 = vmatpush1.msra.mxu0 0.0
    %2508 = vmatprep.subr.mxu0 0.0
    %2509 = vmatpush1.msra.mxu0 0.0
    %2510 = vmatprep.subr.mxu0 0.0
    %2511 = vmatpush1.msra.mxu0 0.0
    %2512 = vmatprep.subr.mxu0 0.0
    %2513 = vmatpush1.msra.mxu0 0.0
    %2514 = vmatprep.subr.mxu0 0.0
    %2515 = vmatpush1.msra.mxu0 0.0
    %2516 = vmatprep.subr.mxu0 0.0
    %2517 = vmatpush1.msra.mxu0 0.0
    %2518 = vmatprep.subr.mxu0 0.0
    %2519 = vmatpush1.msra.mxu0 0.0
    %2520 = vmatprep.subr.mxu0 0.0
    %2521 = vmatpush1.msra.mxu0 0.0
    %2522 = vmatprep.mubr.f32.mxu0 0.0
    %2523 = vmatmul.mubr.f32.gmra.mrb[0].mxu0 %v2456
    %v2524 = vpop.f32.mrb[0].mxu0
    %v2525 = vadd.f32 0.0, %v2524
    %v2526 = vpop.f32.mrb[0].mxu0
    %2527 = vdwg.mxu0
    %v2528 = vmul.f32 %v2525, %v2267
    %v2530 = vsel %vm157, %v2454, 0
    %2532 = vmatprep.subr.mxu0 0.0
    %2533 = vmatpush1.msra.mxu0 %v2107
    %2534 = vmatprep.subr.mxu0 0.0
    %2535 = vmatpush1.msra.mxu0 %v2108
    %2536 = vmatprep.subr.mxu0 0.0
    %2537 = vmatpush1.msra.mxu0 %v2109
    %2538 = vmatprep.subr.mxu0 0.0
    %2539 = vmatpush1.msra.mxu0 %v2110
    %2540 = vmatprep.subr.mxu0 0.0
    %2541 = vmatpush1.msra.mxu0 0.0
    %2542 = vmatprep.subr.mxu0 0.0
    %2543 = vmatpush1.msra.mxu0 0.0
    %2544 = vmatprep.subr.mxu0 0.0
    %2545 = vmatpush1.msra.mxu0 0.0
    %2546 = vmatprep.subr.mxu0 0.0
    %2547 = vmatpush1.msra.mxu0 0.0
    %2548 = vmatprep.subr.mxu0 0.0
    %2549 = vmatpush1.msra.mxu0 0.0
    %2550 = vmatprep.subr.mxu0 0.0
    %2551 = vmatpush1.msra.mxu0 0.0
    %2552 = vmatprep.subr.mxu0 0.0
    %2553 = vmatpush1.msra.mxu0 0.0
    %2554 = vmatprep.subr.mxu0 0.0
    %2555 = vmatpush1.msra.mxu0 0.0
    %2556 = vmatprep.subr.mxu0 0.0
    %2557 = vmatpush1.msra.mxu0 0.0
    %2558 = vmatprep.subr.mxu0 0.0
    %2559 = vmatpush1.msra.mxu0 0.0
    %2560 = vmatprep.subr.mxu0 0.0
    %2561 = vmatpush1.msra.mxu0 0.0
    %2562 = vmatprep.subr.mxu0 0.0
    %2563 = vmatpush1.msra.mxu0 0.0
    %2564 = vmatprep.subr.mxu0 0.0
    %2565 = vmatpush1.msra.mxu0 0.0
    %2566 = vmatprep.subr.mxu0 0.0
    %2567 = vmatpush1.msra.mxu0 0.0
    %2568 = vmatprep.subr.mxu0 0.0
    %2569 = vmatpush1.msra.mxu0 0.0
    %2570 = vmatprep.subr.mxu0 0.0
    %2571 = vmatpush1.msra.mxu0 0.0
    %2572 = vmatprep.subr.mxu0 0.0
    %2573 = vmatpush1.msra.mxu0 0.0
    %2574 = vmatprep.subr.mxu0 0.0
    %2575 = vmatpush1.msra.mxu0 0.0
    %2576 = vmatprep.subr.mxu0 0.0
    %2577 = vmatpush1.msra.mxu0 0.0
    %2578 = vmatprep.subr.mxu0 0.0
    %2579 = vmatpush1.msra.mxu0 0.0
    %2580 = vmatprep.subr.mxu0 0.0
    %2581 = vmatpush1.msra.mxu0 0.0
    %2582 = vmatprep.subr.mxu0 0.0
    %2583 = vmatpush1.msra.mxu0 0.0
    %2584 = vmatprep.subr.mxu0 0.0
    %2585 = vmatpush1.msra.mxu0 0.0
    %2586 = vmatprep.subr.mxu0 0.0
    %2587 = vmatpush1.msra.mxu0 0.0
    %2588 = vmatprep.subr.mxu0 0.0
    %2589 = vmatpush1.msra.mxu0 0.0
    %2590 = vmatprep.subr.mxu0 0.0
    %2591 = vmatpush1.msra.mxu0 0.0
    %2592 = vmatprep.subr.mxu0 0.0
    %2593 = vmatpush1.msra.mxu0 0.0
    %2594 = vmatprep.subr.mxu0 0.0
    %2595 = vmatpush1.msra.mxu0 0.0
    %2596 = vmatprep.mubr.f32.mxu0 0.0
    %2597 = vmatmul.mubr.f32.gmra.mrb[0].mxu0 %v2530
    %v2598 = vpop.f32.mrb[0].mxu0
    %v2599 = vadd.f32 0.0, %v2598
    %v2600 = vpop.f32.mrb[0].mxu0
    %2601 = vdwg.mxu0
    %v2603 = vsel %vm157, %v2528, 0
    %2605 = vmatprep.subr.mxu0 0.0
    %2606 = vmatpush1.msra.mxu0 %v2111
    %2607 = vmatprep.subr.mxu0 0.0
    %2608 = vmatpush1.msra.mxu0 %v2112
    %2609 = vmatprep.subr.mxu0 0.0
    %2610 = vmatpush1.msra.mxu0 %v2113
    %2611 = vmatprep.subr.mxu0 0.0
    %2612 = vmatpush1.msra.mxu0 %v2114
    %2613 = vmatprep.subr.mxu0 0.0
    %2614 = vmatpush1.msra.mxu0 0.0
    %2615 = vmatprep.subr.mxu0 0.0
    %2616 = vmatpush1.msra.mxu0 0.0
    %2617 = vmatprep.subr.mxu0 0.0
    %2618 = vmatpush1.msra.mxu0 0.0
    %2619 = vmatprep.subr.mxu0 0.0
    %2620 = vmatpush1.msra.mxu0 0.0
    %2621 = vmatprep.subr.mxu0 0.0
    %2622 = vmatpush1.msra.mxu0 0.0
    %2623 = vmatprep.subr.mxu0 0.0
    %2624 = vmatpush1.msra.mxu0 0.0
    %2625 = vmatprep.subr.mxu0 0.0
    %2626 = vmatpush1.msra.mxu0 0.0
    %2627 = vmatprep.subr.mxu0 0.0
    %2628 = vmatpush1.msra.mxu0 0.0
    %2629 = vmatprep.subr.mxu0 0.0
    %2630 = vmatpush1.msra.mxu0 0.0
    %2631 = vmatprep.subr.mxu0 0.0
    %2632 = vmatpush1.msra.mxu0 0.0
    %2633 = vmatprep.subr.mxu0 0.0
    %2634 = vmatpush1.msra.mxu0 0.0
    %2635 = vmatprep.subr.mxu0 0.0
    %2636 = vmatpush1.msra.mxu0 0.0
    %2637 = vmatprep.subr.mxu0 0.0
    %2638 = vmatpush1.msra.mxu0 0.0
    %2639 = vmatprep.subr.mxu0 0.0
    %2640 = vmatpush1.msra.mxu0 0.0
    %2641 = vmatprep.subr.mxu0 0.0
    %2642 = vmatpush1.msra.mxu0 0.0
    %2643 = vmatprep.subr.mxu0 0.0
    %2644 = vmatpush1.msra.mxu0 0.0
    %2645 = vmatprep.subr.mxu0 0.0
    %2646 = vmatpush1.msra.mxu0 0.0
    %2647 = vmatprep.subr.mxu0 0.0
    %2648 = vmatpush1.msra.mxu0 0.0
    %2649 = vmatprep.subr.mxu0 0.0
    %2650 = vmatpush1.msra.mxu0 0.0
    %2651 = vmatprep.subr.mxu0 0.0
    %2652 = vmatpush1.msra.mxu0 0.0
    %2653 = vmatprep.subr.mxu0 0.0
    %2654 = vmatpush1.msra.mxu0 0.0
    %2655 = vmatprep.subr.mxu0 0.0
    %2656 = vmatpush1.msra.mxu0 0.0
    %2657 = vmatprep.subr.mxu0 0.0
    %2658 = vmatpush1.msra.mxu0 0.0
    %2659 = vmatprep.subr.mxu0 0.0
    %2660 = vmatpush1.msra.mxu0 0.0
    %2661 = vmatprep.subr.mxu0 0.0
    %2662 = vmatpush1.msra.mxu0 0.0
    %2663 = vmatprep.subr.mxu0 0.0
    %2664 = vmatpush1.msra.mxu0 0.0
    %2665 = vmatprep.subr.mxu0 0.0
    %2666 = vmatpush1.msra.mxu0 0.0
    %2667 = vmatprep.subr.mxu0 0.0
    %2668 = vmatpush1.msra.mxu0 0.0
    %2669 = vmatprep.mubr.f32.mxu0 0.0
    %2670 = vmatmul.mubr.f32.gmra.mrb[0].mxu0 %v2603
    %v2671 = vpop.f32.mrb[0].mxu0
    %v2672 = vadd.f32 0.0, %v2671
    %v2673 = vpop.f32.mrb[0].mxu0
    %2674 = vdwg.mxu0
    %v2675 = vsel %vm1457, %v2528, 0.0
    %2676 = vadd.xlane.f32.xlu0 %v2675
    %v2677 = vpop.xlane.xlu0 %2676
    %v2678 = vrcp.pop %v2677
    %v2679 = vmul.f32 %v2599, %v2678
    %v2680 = vmul.f32 %v2672, %v2678
    %v2681 = vld [vmem:[#allocation9] sm:$0xff]
    %v2682 = vld [vmem:[#allocation9 + $0x8] sm:$0xff]
    %v2683 = vld [vmem:[#allocation9 + $0x10] sm:$0xff]
    %v2684 = vld [vmem:[#allocation9 + $0x18] sm:$0xff]
    %v2685 = vld [vmem:[#allocation9 + $0x20] sm:$0xff]
    %v2686 = vld [vmem:[#allocation9 + $0x28] sm:$0xff]
    %v2687 = vld [vmem:[#allocation9 + $0x30] sm:$0xff]
    %v2688 = vld [vmem:[#allocation9 + $0x38] sm:$0xff]
    %v2689 = vld [vmem:[#allocation9 + $0x40] sm:$0xff]
    %v2690 = vld [vmem:[#allocation9 + $0x48] sm:$0xff]
    %v2691 = vld [vmem:[#allocation9 + $0x50] sm:$0xff]
    %v2692 = vld [vmem:[#allocation9 + $0x58] sm:$0xff]
    %v2693 = vld [vmem:[#allocation9 + $0x60] sm:$0xff]
    %v2694 = vld [vmem:[#allocation9 + $0x68] sm:$0xff]
    %v2695 = vld [vmem:[#allocation9 + $0x70] sm:$0xff]
    %v2696 = vld [vmem:[#allocation9 + $0x78] sm:$0xff]
    %v2697 = vld [vmem:[#allocation9 + $0x80] sm:$0xff]
    %v2698 = vld [vmem:[#allocation9 + $0x88] sm:$0xff]
    %v2699 = vld [vmem:[#allocation9 + $0x90] sm:$0xff]
    %v2700 = vld [vmem:[#allocation9 + $0x98] sm:$0xff]
    %v2701 = vld [vmem:[#allocation9 + $0xa0] sm:$0xff]
    %v2702 = vld [vmem:[#allocation9 + $0xa8] sm:$0xff]
    %v2703 = vld [vmem:[#allocation9 + $0xb0] sm:$0xff]
    %v2704 = vld [vmem:[#allocation9 + $0xb8] sm:$0xff]
    %v2705 = vld [vmem:[#allocation9 + $0xc0] sm:$0xff]
    %v2706 = vld [vmem:[#allocation9 + $0xc8] sm:$0xff]
    %v2707 = vld [vmem:[#allocation9 + $0xd0] sm:$0xff]
    %v2708 = vld [vmem:[#allocation9 + $0xd8] sm:$0xff]
    %v2709 = vld [vmem:[#allocation9 + $0xe0] sm:$0xff]
    %v2710 = vld [vmem:[#allocation9 + $0xe8] sm:$0xff]
    %v2711 = vld [vmem:[#allocation9 + $0xf0] sm:$0xff]
    %v2712 = vld [vmem:[#allocation9 + $0xf8] sm:$0xff]
    %v2713 = vld [vmem:[%s5] sm:$0x1]
    %v2715 = vlaneseq
    %v2716 = vshrl.u32 %v2715, 7
    %v2717 = vsub.s32 0, %v2716
    %v2718 = vrot.slane %v2713, %v2717
    %2720 = vmatprep.subr.mxu0 0.0
    %2721 = vmatpush1.msra.mxu0 %v2681
    %2722 = vmatprep.subr.mxu0 0.0
    %2723 = vmatpush1.msra.mxu0 %v2682
    %2724 = vmatprep.subr.mxu0 0.0
    %2725 = vmatpush1.msra.mxu0 %v2683
    %2726 = vmatprep.subr.mxu0 0.0
    %2727 = vmatpush1.msra.mxu0 %v2684
    %2728 = vmatprep.subr.mxu0 0.0
    %2729 = vmatpush1.msra.mxu0 %v2685
    %2730 = vmatprep.subr.mxu0 0.0
    %2731 = vmatpush1.msra.mxu0 %v2686
    %2732 = vmatprep.subr.mxu0 0.0
    %2733 = vmatpush1.msra.mxu0 %v2687
    %2734 = vmatprep.subr.mxu0 0.0
    %2735 = vmatpush1.msra.mxu0 %v2688
    %2736 = vmatprep.subr.mxu0 0.0
    %2737 = vmatpush1.msra.mxu0 %v2689
    %2738 = vmatprep.subr.mxu0 0.0
    %2739 = vmatpush1.msra.mxu0 %v2690
    %2740 = vmatprep.subr.mxu0 0.0
    %2741 = vmatpush1.msra.mxu0 %v2691
    %2742 = vmatprep.subr.mxu0 0.0
    %2743 = vmatpush1.msra.mxu0 %v2692
    %2744 = vmatprep.subr.mxu0 0.0
    %2745 = vmatpush1.msra.mxu0 %v2693
    %2746 = vmatprep.subr.mxu0 0.0
    %2747 = vmatpush1.msra.mxu0 %v2694
    %2748 = vmatprep.subr.mxu0 0.0
    %2749 = vmatpush1.msra.mxu0 %v2695
    %2750 = vmatprep.subr.mxu0 0.0
    %2751 = vmatpush1.msra.mxu0 %v2696
    %2752 = vmatprep.subr.mxu0 0.0
    %2753 = vmatpush1.msra.mxu0 %v2697
    %2754 = vmatprep.subr.mxu0 0.0
    %2755 = vmatpush1.msra.mxu0 %v2698
    %2756 = vmatprep.subr.mxu0 0.0
    %2757 = vmatpush1.msra.mxu0 %v2699
    %2758 = vmatprep.subr.mxu0 0.0
    %2759 = vmatpush1.msra.mxu0 %v2700
    %2760 = vmatprep.subr.mxu0 0.0
    %2761 = vmatpush1.msra.mxu0 %v2701
    %2762 = vmatprep.subr.mxu0 0.0
    %2763 = vmatpush1.msra.mxu0 %v2702
    %2764 = vmatprep.subr.mxu0 0.0
    %2765 = vmatpush1.msra.mxu0 %v2703
    %2766 = vmatprep.subr.mxu0 0.0
    %2767 = vmatpush1.msra.mxu0 %v2704
    %2768 = vmatprep.subr.mxu0 0.0
    %2769 = vmatpush1.msra.mxu0 %v2705
    %2770 = vmatprep.subr.mxu0 0.0
    %2771 = vmatpush1.msra.mxu0 %v2706
    %2772 = vmatprep.subr.mxu0 0.0
    %2773 = vmatpush1.msra.mxu0 %v2707
    %2774 = vmatprep.subr.mxu0 0.0
    %2775 = vmatpush1.msra.mxu0 %v2708
    %2776 = vmatprep.subr.mxu0 0.0
    %2777 = vmatpush1.msra.mxu0 %v2709
    %2778 = vmatprep.subr.mxu0 0.0
    %2779 = vmatpush1.msra.mxu0 %v2710
    %2780 = vmatprep.subr.mxu0 0.0
    %2781 = vmatpush1.msra.mxu0 %v2711
    %2782 = vmatprep.subr.mxu0 0.0
    %2783 = vmatpush1.msra.mxu0 %v2712
    %2784 = vmatprep.mubr.f32.mxu0 %v2680
    %2785 = vmatmul.mubr.f32.gmra.mrb[0].mxu0 %v2679
    %v2786 = vpop.f32.mrb[0].mxu0
    %v2787 = vadd.f32 %v2718, %v2786
    %v2788 = vpop.f32.mrb[0].mxu0
    %2789 = vdwg.mxu0
    %v2790 = vadd.f32 %v2787, %v1758
    %v2791 = vld [vmem:[#allocation10] sm:$0xff]
    %v2792 = vld [vmem:[#allocation10 + $0x8] sm:$0xff]
    %v2793 = vld [vmem:[#allocation10 + $0x10] sm:$0xff]
    %v2794 = vld [vmem:[#allocation10 + $0x18] sm:$0xff]
    %v2795 = vld [vmem:[#allocation10 + $0x20] sm:$0xff]
    %v2796 = vld [vmem:[#allocation10 + $0x28] sm:$0xff]
    %v2797 = vld [vmem:[#allocation10 + $0x30] sm:$0xff]
    %v2798 = vld [vmem:[#allocation10 + $0x38] sm:$0xff]
    %v2799 = vld [vmem:[#allocation10 + $0x40] sm:$0xff]
    %v2800 = vld [vmem:[#allocation10 + $0x48] sm:$0xff]
    %v2801 = vld [vmem:[#allocation10 + $0x50] sm:$0xff]
    %v2802 = vld [vmem:[#allocation10 + $0x58] sm:$0xff]
    %v2803 = vld [vmem:[#allocation10 + $0x60] sm:$0xff]
    %v2804 = vld [vmem:[#allocation10 + $0x68] sm:$0xff]
    %v2805 = vld [vmem:[#allocation10 + $0x70] sm:$0xff]
    %v2806 = vld [vmem:[#allocation10 + $0x78] sm:$0xff]
    %v2807 = vld [vmem:[%s7] sm:$0x1]
    %v2809 = vlaneseq
    %v2810 = vshrl.u32 %v2809, 7
    %v2811 = vsub.s32 0, %v2810
    %v2812 = vrot.slane %v2807, %v2811
    %2814 = vmatprep.subr.mxu0 0.0
    %2815 = vmatpush1.msra.mxu0 %v2791
    %2816 = vmatprep.subr.mxu0 0.0
    %2817 = vmatpush1.msra.mxu0 %v2792
    %2818 = vmatprep.subr.mxu0 0.0
    %2819 = vmatpush1.msra.mxu0 %v2793
    %2820 = vmatprep.subr.mxu0 0.0
    %2821 = vmatpush1.msra.mxu0 %v2794
    %2822 = vmatprep.subr.mxu0 0.0
    %2823 = vmatpush1.msra.mxu0 %v2795
    %2824 = vmatprep.subr.mxu0 0.0
    %2825 = vmatpush1.msra.mxu0 %v2796
    %2826 = vmatprep.subr.mxu0 0.0
    %2827 = vmatpush1.msra.mxu0 %v2797
    %2828 = vmatprep.subr.mxu0 0.0
    %2829 = vmatpush1.msra.mxu0 %v2798
    %2830 = vmatprep.subr.mxu0 0.0
    %2831 = vmatpush1.msra.mxu0 %v2799
    %2832 = vmatprep.subr.mxu0 0.0
    %2833 = vmatpush1.msra.mxu0 %v2800
    %2834 = vmatprep.subr.mxu0 0.0
    %2835 = vmatpush1.msra.mxu0 %v2801
    %2836 = vmatprep.subr.mxu0 0.0
    %2837 = vmatpush1.msra.mxu0 %v2802
    %2838 = vmatprep.subr.mxu0 0.0
    %2839 = vmatpush1.msra.mxu0 %v2803
    %2840 = vmatprep.subr.mxu0 0.0
    %2841 = vmatpush1.msra.mxu0 %v2804
    %2842 = vmatprep.subr.mxu0 0.0
    %2843 = vmatpush1.msra.mxu0 %v2805
    %2844 = vmatprep.subr.mxu0 0.0
    %2845 = vmatpush1.msra.mxu0 %v2806
    %2846 = vmatprep.subr.mxu0 0.0
    %2847 = vmatpush1.msra.mxu0 0.0
    %2848 = vmatprep.subr.mxu0 0.0
    %2849 = vmatpush1.msra.mxu0 0.0
    %2850 = vmatprep.subr.mxu0 0.0
    %2851 = vmatpush1.msra.mxu0 0.0
    %2852 = vmatprep.subr.mxu0 0.0
    %2853 = vmatpush1.msra.mxu0 0.0
    %2854 = vmatprep.subr.mxu0 0.0
    %2855 = vmatpush1.msra.mxu0 0.0
    %2856 = vmatprep.subr.mxu0 0.0
    %2857 = vmatpush1.msra.mxu0 0.0
    %2858 = vmatprep.subr.mxu0 0.0
    %2859 = vmatpush1.msra.mxu0 0.0
    %2860 = vmatprep.subr.mxu0 0.0
    %2861 = vmatpush1.msra.mxu0 0.0
    %2862 = vmatprep.subr.mxu0 0.0
    %2863 = vmatpush1.msra.mxu0 0.0
    %2864 = vmatprep.subr.mxu0 0.0
    %2865 = vmatpush1.msra.mxu0 0.0
    %2866 = vmatprep.subr.mxu0 0.0
    %2867 = vmatpush1.msra.mxu0 0.0
    %2868 = vmatprep.subr.mxu0 0.0
    %2869 = vmatpush1.msra.mxu0 0.0
    %2870 = vmatprep.subr.mxu0 0.0
    %2871 = vmatpush1.msra.mxu0 0.0
    %2872 = vmatprep.subr.mxu0 0.0
    %2873 = vmatpush1.msra.mxu0 0.0
    %2874 = vmatprep.subr.mxu0 0.0
    %2875 = vmatpush1.msra.mxu0 0.0
    %2876 = vmatprep.subr.mxu0 0.0
    %2877 = vmatpush1.msra.mxu0 0.0
    %2878 = vmatprep.mubr.f32.mxu0 0.0
    %2879 = vmatmul.mubr.f32.gmra.mrb[0].mxu0 %v2790
    %v2880 = vpop.f32.mrb[0].mxu0
    %v2881 = vadd.f32 %v2812, %v2880
    %v2882 = vpop.f32.mrb[0].mxu0
    %2883 = vdwg.mxu0
    %v2884 = vmax.f32 %v2881, 0.0
    %v2885 = vld [vmem:[#allocation12] sm:$0xff]
    %v2886 = vld [vmem:[#allocation12 + $0x8] sm:$0xff]
    %v2887 = vld [vmem:[#allocation12 + $0x10] sm:$0xff]
    %v2888 = vld [vmem:[#allocation12 + $0x18] sm:$0xff]
    %v2889 = vld [vmem:[#allocation12 + $0x20] sm:$0xff]
    %v2890 = vld [vmem:[#allocation12 + $0x28] sm:$0xff]
    %v2891 = vld [vmem:[#allocation12 + $0x30] sm:$0xff]
    %v2892 = vld [vmem:[#allocation12 + $0x38] sm:$0xff]
    %v2893 = vld [vmem:[#allocation12 + $0x40] sm:$0xff]
    %v2894 = vld [vmem:[#allocation12 + $0x48] sm:$0xff]
    %v2895 = vld [vmem:[#allocation12 + $0x50] sm:$0xff]
    %v2896 = vld [vmem:[#allocation12 + $0x58] sm:$0xff]
    %v2897 = vld [vmem:[#allocation12 + $0x60] sm:$0xff]
    %v2898 = vld [vmem:[#allocation12 + $0x68] sm:$0xff]
    %v2899 = vld [vmem:[#allocation12 + $0x70] sm:$0xff]
    %v2900 = vld [vmem:[#allocation12 + $0x78] sm:$0xff]
    %v2901 = vld [vmem:[%s9] sm:$0x1]
    %v2903 = vlaneseq
    %v2904 = vshrl.u32 %v2903, 7
    %v2905 = vsub.s32 0, %v2904
    %v2906 = vrot.slane %v2901, %v2905
    %2908 = vmatprep.subr.mxu0 0.0
    %2909 = vmatpush1.msra.mxu0 %v2885
    %2910 = vmatprep.subr.mxu0 0.0
    %2911 = vmatpush1.msra.mxu0 %v2886
    %2912 = vmatprep.subr.mxu0 0.0
    %2913 = vmatpush1.msra.mxu0 %v2887
    %2914 = vmatprep.subr.mxu0 0.0
    %2915 = vmatpush1.msra.mxu0 %v2888
    %2916 = vmatprep.subr.mxu0 0.0
    %2917 = vmatpush1.msra.mxu0 %v2889
    %2918 = vmatprep.subr.mxu0 0.0
    %2919 = vmatpush1.msra.mxu0 %v2890
    %2920 = vmatprep.subr.mxu0 0.0
    %2921 = vmatpush1.msra.mxu0 %v2891
    %2922 = vmatprep.subr.mxu0 0.0
    %2923 = vmatpush1.msra.mxu0 %v2892
    %2924 = vmatprep.subr.mxu0 0.0
    %2925 = vmatpush1.msra.mxu0 %v2893
    %2926 = vmatprep.subr.mxu0 0.0
    %2927 = vmatpush1.msra.mxu0 %v2894
    %2928 = vmatprep.subr.mxu0 0.0
    %2929 = vmatpush1.msra.mxu0 %v2895
    %2930 = vmatprep.subr.mxu0 0.0
    %2931 = vmatpush1.msra.mxu0 %v2896
    %2932 = vmatprep.subr.mxu0 0.0
    %2933 = vmatpush1.msra.mxu0 %v2897
    %2934 = vmatprep.subr.mxu0 0.0
    %2935 = vmatpush1.msra.mxu0 %v2898
    %2936 = vmatprep.subr.mxu0 0.0
    %2937 = vmatpush1.msra.mxu0 %v2899
    %2938 = vmatprep.subr.mxu0 0.0
    %2939 = vmatpush1.msra.mxu0 %v2900
    %2940 = vmatprep.subr.mxu0 0.0
    %2941 = vmatpush1.msra.mxu0 0.0
    %2942 = vmatprep.subr.mxu0 0.0
    %2943 = vmatpush1.msra.mxu0 0.0
    %2944 = vmatprep.subr.mxu0 0.0
    %2945 = vmatpush1.msra.mxu0 0.0
    %2946 = vmatprep.subr.mxu0 0.0
    %2947 = vmatpush1.msra.mxu0 0.0
    %2948 = vmatprep.subr.mxu0 0.0
    %2949 = vmatpush1.msra.mxu0 0.0
    %2950 = vmatprep.subr.mxu0 0.0
    %2951 = vmatpush1.msra.mxu0 0.0
    %2952 = vmatprep.subr.mxu0 0.0
    %2953 = vmatpush1.msra.mxu0 0.0
    %2954 = vmatprep.subr.mxu0 0.0
    %2955 = vmatpush1.msra.mxu0 0.0
    %2956 = vmatprep.subr.mxu0 0.0
    %2957 = vmatpush1.msra.mxu0 0.0
    %2958 = vmatprep.subr.mxu0 0.0
    %2959 = vmatpush1.msra.mxu0 0.0
    %2960 = vmatprep.subr.mxu0 0.0
    %2961 = vmatpush1.msra.mxu0 0.0
    %2962 = vmatprep.subr.mxu0 0.0
    %2963 = vmatpush1.msra.mxu0 0.0
    %2964 = vmatprep.subr.mxu0 0.0
    %2965 = vmatpush1.msra.mxu0 0.0
    %2966 = vmatprep.subr.mxu0 0.0
    %2967 = vmatpush1.msra.mxu0 0.0
    %2968 = vmatprep.subr.mxu0 0.0
    %2969 = vmatpush1.msra.mxu0 0.0
    %2970 = vmatprep.subr.mxu0 0.0
    %2971 = vmatpush1.msra.mxu0 0.0
    %2972 = vmatprep.mubr.f32.mxu0 0.0
    %2973 = vmatmul.mubr.f32.gmra.mrb[0].mxu0 %v2884
    %v2974 = vpop.f32.mrb[0].mxu0
    %v2975 = vadd.f32 %v2906, %v2974
    %v2976 = vpop.f32.mrb[0].mxu0
    %2977 = vdwg.mxu0
    %2978 = vst [vmem:[#allocation2 + $0x9] sm:$0x1] %v2975
    %2979 = vst [vmem:[#allocation2 + $0x18] sm:$0x2] %v2975
    %v2980 = vld [vmem:[#allocation7] sm:$0xff]
    %v2981 = vld [vmem:[#allocation7 + $0x8] sm:$0xff]
    %v2982 = vld [vmem:[#allocation7 + $0x10] sm:$0xff]
    %v2983 = vld [vmem:[#allocation7 + $0x18] sm:$0xff]
    %v2984 = vld [vmem:[#allocation7 + $0x20] sm:$0xff]
    %v2985 = vld [vmem:[#allocation7 + $0x28] sm:$0xff]
    %v2986 = vld [vmem:[#allocation7 + $0x30] sm:$0xff]
    %v2987 = vld [vmem:[#allocation7 + $0x38] sm:$0xff]
    %v2988 = vld [vmem:[#allocation7 + $0x40] sm:$0xff]
    %v2989 = vld [vmem:[#allocation7 + $0x48] sm:$0xff]
    %v2990 = vld [vmem:[#allocation7 + $0x50] sm:$0xff]
    %v2991 = vld [vmem:[#allocation7 + $0x58] sm:$0xff]
    %v2992 = vld [vmem:[#allocation7 + $0x60] sm:$0xff]
    %v2993 = vld [vmem:[#allocation7 + $0x68] sm:$0xff]
    %v2994 = vld [vmem:[#allocation7 + $0x70] sm:$0xff]
    %v2995 = vld [vmem:[#allocation7 + $0x78] sm:$0xff]
    %v2996 = vld [vmem:[#allocation7 + $0x80] sm:$0xff]
    %v2997 = vld [vmem:[#allocation7 + $0x88] sm:$0xff]
    %v2998 = vld [vmem:[#allocation7 + $0x90] sm:$0xff]
    %v2999 = vld [vmem:[#allocation7 + $0x98] sm:$0xff]
    %v3000 = vld [vmem:[#allocation7 + $0xa0] sm:$0xff]
    %v3001 = vld [vmem:[#allocation7 + $0xa8] sm:$0xff]
    %v3002 = vld [vmem:[#allocation7 + $0xb0] sm:$0xff]
    %v3003 = vld [vmem:[#allocation7 + $0xb8] sm:$0xff]
    %v3004 = vld [vmem:[#allocation7 + $0xc0] sm:$0xff]
    %v3005 = vld [vmem:[#allocation7 + $0xc8] sm:$0xff]
    %v3006 = vld [vmem:[#allocation7 + $0xd0] sm:$0xff]
    %v3007 = vld [vmem:[#allocation7 + $0xd8] sm:$0xff]
    %v3008 = vld [vmem:[#allocation7 + $0xe0] sm:$0xff]
    %v3009 = vld [vmem:[#allocation7 + $0xe8] sm:$0xff]
    %v3010 = vld [vmem:[#allocation7 + $0xf0] sm:$0xff]
    %v3011 = vld [vmem:[#allocation7 + $0xf8] sm:$0xff]
    %v3012 = vld [vmem:[#allocation7 + $0x100] sm:$0xff]
    %v3013 = vld [vmem:[#allocation7 + $0x108] sm:$0xff]
    %v3014 = vld [vmem:[#allocation7 + $0x110] sm:$0xff]
    %v3015 = vld [vmem:[#allocation7 + $0x118] sm:$0xff]
    %v3016 = vld [vmem:[#allocation7 + $0x120] sm:$0xff]
    %v3017 = vld [vmem:[#allocation7 + $0x128] sm:$0xff]
    %v3018 = vld [vmem:[#allocation7 + $0x130] sm:$0xff]
    %v3019 = vld [vmem:[#allocation7 + $0x138] sm:$0xff]
    %v3020 = vld [vmem:[#allocation7 + $0x140] sm:$0xff]
    %v3021 = vld [vmem:[#allocation7 + $0x148] sm:$0xff]
    %v3022 = vld [vmem:[#allocation7 + $0x150] sm:$0xff]
    %v3023 = vld [vmem:[#allocation7 + $0x158] sm:$0xff]
    %v3024 = vld [vmem:[#allocation7 + $0x160] sm:$0xff]
    %v3025 = vld [vmem:[#allocation7 + $0x168] sm:$0xff]
    %v3026 = vld [vmem:[#allocation7 + $0x170] sm:$0xff]
    %v3027 = vld [vmem:[#allocation7 + $0x178] sm:$0xff]
    %v3028 = vld [vmem:[#allocation7 + $0x180] sm:$0xff]
    %v3029 = vld [vmem:[#allocation7 + $0x188] sm:$0xff]
    %v3030 = vld [vmem:[#allocation7 + $0x190] sm:$0xff]
    %v3031 = vld [vmem:[#allocation7 + $0x198] sm:$0xff]
    %v3032 = vld [vmem:[#allocation7 + $0x1a0] sm:$0xff]
    %v3033 = vld [vmem:[#allocation7 + $0x1a8] sm:$0xff]
    %v3034 = vld [vmem:[#allocation7 + $0x1b0] sm:$0xff]
    %v3035 = vld [vmem:[#allocation7 + $0x1b8] sm:$0xff]
    %v3036 = vld [vmem:[#allocation7 + $0x1c0] sm:$0xff]
    %v3037 = vld [vmem:[#allocation7 + $0x1c8] sm:$0xff]
    %v3038 = vld [vmem:[#allocation7 + $0x1d0] sm:$0xff]
    %v3039 = vld [vmem:[#allocation7 + $0x1d8] sm:$0xff]
    %v3040 = vld [vmem:[#allocation7 + $0x1e0] sm:$0xff]
    %v3041 = vld [vmem:[#allocation7 + $0x1e8] sm:$0xff]
    %v3042 = vld [vmem:[#allocation7 + $0x1f0] sm:$0xff]
    %v3043 = vld [vmem:[#allocation7 + $0x1f8] sm:$0xff]
    %v3044 = vld [vmem:[#allocation7 + $0x200] sm:$0xff]
    %v3045 = vld [vmem:[#allocation7 + $0x208] sm:$0xff]
    %v3046 = vld [vmem:[#allocation7 + $0x210] sm:$0xff]
    %v3047 = vld [vmem:[#allocation7 + $0x218] sm:$0xff]
    %v3048 = vld [vmem:[#allocation7 + $0x220] sm:$0xff]
    %v3049 = vld [vmem:[#allocation7 + $0x228] sm:$0xff]
    %v3050 = vld [vmem:[#allocation7 + $0x230] sm:$0xff]
    %v3051 = vld [vmem:[#allocation7 + $0x238] sm:$0xff]
    %v3052 = vld [vmem:[#allocation7 + $0x240] sm:$0xff]
    %v3053 = vld [vmem:[#allocation7 + $0x248] sm:$0xff]
    %v3054 = vld [vmem:[#allocation7 + $0x250] sm:$0xff]
    %v3055 = vld [vmem:[#allocation7 + $0x258] sm:$0xff]
    %v3056 = vld [vmem:[#allocation7 + $0x260] sm:$0xff]
    %v3057 = vld [vmem:[#allocation7 + $0x268] sm:$0xff]
    %v3058 = vld [vmem:[#allocation7 + $0x270] sm:$0xff]
    %v3059 = vld [vmem:[#allocation7 + $0x278] sm:$0xff]
    %3060 = vmatprep.subr.mxu0 %v2981
    %3061 = vmatpush1.msra.mxu0 %v2980
    %3062 = vmatprep.subr.mxu0 %v2986
    %3063 = vmatpush1.msra.mxu0 %v2985
    %3064 = vmatprep.subr.mxu0 %v2991
    %3065 = vmatpush1.msra.mxu0 %v2990
    %3066 = vmatprep.subr.mxu0 %v2996
    %3067 = vmatpush1.msra.mxu0 %v2995
    %3068 = vmatprep.subr.mxu0 %v3001
    %3069 = vmatpush1.msra.mxu0 %v3000
    %3070 = vmatprep.subr.mxu0 %v3006
    %3071 = vmatpush1.msra.mxu0 %v3005
    %3072 = vmatprep.subr.mxu0 %v3011
    %3073 = vmatpush1.msra.mxu0 %v3010
    %3074 = vmatprep.subr.mxu0 %v3016
    %3075 = vmatpush1.msra.mxu0 %v3015
    %3076 = vmatprep.subr.mxu0 %v3021
    %3077 = vmatpush1.msra.mxu0 %v3020
    %3078 = vmatprep.subr.mxu0 %v3026
    %3079 = vmatpush1.msra.mxu0 %v3025
    %3080 = vmatprep.subr.mxu0 %v3031
    %3081 = vmatpush1.msra.mxu0 %v3030
    %3082 = vmatprep.subr.mxu0 %v3036
    %3083 = vmatpush1.msra.mxu0 %v3035
    %3084 = vmatprep.subr.mxu0 %v3041
    %3085 = vmatpush1.msra.mxu0 %v3040
    %3086 = vmatprep.subr.mxu0 %v3046
    %3087 = vmatpush1.msra.mxu0 %v3045
    %3088 = vmatprep.subr.mxu0 %v3051
    %3089 = vmatpush1.msra.mxu0 %v3050
    %3090 = vmatprep.subr.mxu0 %v3056
    %3091 = vmatpush1.msra.mxu0 %v3055
    %3092 = vmatprep.subr.mxu0 0.0
    %3093 = vmatpush1.msra.mxu0 0.0
    %3094 = vmatprep.subr.mxu0 0.0
    %3095 = vmatpush1.msra.mxu0 0.0
    %3096 = vmatprep.subr.mxu0 0.0
    %3097 = vmatpush1.msra.mxu0 0.0
    %3098 = vmatprep.subr.mxu0 0.0
    %3099 = vmatpush1.msra.mxu0 0.0
    %3100 = vmatprep.subr.mxu0 0.0
    %3101 = vmatpush1.msra.mxu0 0.0
    %3102 = vmatprep.subr.mxu0 0.0
    %3103 = vmatpush1.msra.mxu0 0.0
    %3104 = vmatprep.subr.mxu0 0.0
    %3105 = vmatpush1.msra.mxu0 0.0
    %3106 = vmatprep.subr.mxu0 0.0
    %3107 = vmatpush1.msra.mxu0 0.0
    %3108 = vmatprep.subr.mxu0 0.0
    %3109 = vmatpush1.msra.mxu0 0.0
    %3110 = vmatprep.subr.mxu0 0.0
    %3111 = vmatpush1.msra.mxu0 0.0
    %3112 = vmatprep.subr.mxu0 0.0
    %3113 = vmatpush1.msra.mxu0 0.0
    %3114 = vmatprep.subr.mxu0 0.0
    %3115 = vmatpush1.msra.mxu0 0.0
    %3116 = vmatprep.subr.mxu0 0.0
    %3117 = vmatpush1.msra.mxu0 0.0
    %3118 = vmatprep.subr.mxu0 0.0
    %3119 = vmatpush1.msra.mxu0 0.0
    %3120 = vmatprep.subr.mxu0 0.0
    %3121 = vmatpush1.msra.mxu0 0.0
    %3122 = vmatprep.subr.mxu0 0.0
    %3123 = vmatpush1.msra.mxu0 0.0
    %3124 = vmatprep.mubr.f32.mxu0 0.0
    %3125 = vmatmul.mubr.f32.gmra.mrb[0].mxu0 %v2975
    %v3126 = vpop.f32.mrb[0].mxu0
    %v3127 = vadd.f32 0.0, %v3126
    %v3128 = vpop.f32.mrb[0].mxu0
    %v3129 = vadd.f32 0.0, %v3128
    %3130 = vdwg.mxu0
    %3131 = vmatprep.subr.mxu0 %v2983
    %3132 = vmatpush1.msra.mxu0 %v2982
    %3133 = vmatprep.subr.mxu0 %v2988
    %3134 = vmatpush1.msra.mxu0 %v2987
    %3135 = vmatprep.subr.mxu0 %v2993
    %3136 = vmatpush1.msra.mxu0 %v2992
    %3137 = vmatprep.subr.mxu0 %v2998
    %3138 = vmatpush1.msra.mxu0 %v2997
    %3139 = vmatprep.subr.mxu0 %v3003
    %3140 = vmatpush1.msra.mxu0 %v3002
    %3141 = vmatprep.subr.mxu0 %v3008
    %3142 = vmatpush1.msra.mxu0 %v3007
    %3143 = vmatprep.subr.mxu0 %v3013
    %3144 = vmatpush1.msra.mxu0 %v3012
    %3145 = vmatprep.subr.mxu0 %v3018
    %3146 = vmatpush1.msra.mxu0 %v3017
    %3147 = vmatprep.subr.mxu0 %v3023
    %3148 = vmatpush1.msra.mxu0 %v3022
    %3149 = vmatprep.subr.mxu0 %v3028
    %3150 = vmatpush1.msra.mxu0 %v3027
    %3151 = vmatprep.subr.mxu0 %v3033
    %3152 = vmatpush1.msra.mxu0 %v3032
    %3153 = vmatprep.subr.mxu0 %v3038
    %3154 = vmatpush1.msra.mxu0 %v3037
    %3155 = vmatprep.subr.mxu0 %v3043
    %3156 = vmatpush1.msra.mxu0 %v3042
    %3157 = vmatprep.subr.mxu0 %v3048
    %3158 = vmatpush1.msra.mxu0 %v3047
    %3159 = vmatprep.subr.mxu0 %v3053
    %3160 = vmatpush1.msra.mxu0 %v3052
    %3161 = vmatprep.subr.mxu0 %v3058
    %3162 = vmatpush1.msra.mxu0 %v3057
    %3163 = vmatprep.subr.mxu0 0.0
    %3164 = vmatpush1.msra.mxu0 0.0
    %3165 = vmatprep.subr.mxu0 0.0
    %3166 = vmatpush1.msra.mxu0 0.0
    %3167 = vmatprep.subr.mxu0 0.0
    %3168 = vmatpush1.msra.mxu0 0.0
    %3169 = vmatprep.subr.mxu0 0.0
    %3170 = vmatpush1.msra.mxu0 0.0
    %3171 = vmatprep.subr.mxu0 0.0
    %3172 = vmatpush1.msra.mxu0 0.0
    %3173 = vmatprep.subr.mxu0 0.0
    %3174 = vmatpush1.msra.mxu0 0.0
    %3175 = vmatprep.subr.mxu0 0.0
    %3176 = vmatpush1.msra.mxu0 0.0
    %3177 = vmatprep.subr.mxu0 0.0
    %3178 = vmatpush1.msra.mxu0 0.0
    %3179 = vmatprep.subr.mxu0 0.0
    %3180 = vmatpush1.msra.mxu0 0.0
    %3181 = vmatprep.subr.mxu0 0.0
    %3182 = vmatpush1.msra.mxu0 0.0
    %3183 = vmatprep.subr.mxu0 0.0
    %3184 = vmatpush1.msra.mxu0 0.0
    %3185 = vmatprep.subr.mxu0 0.0
    %3186 = vmatpush1.msra.mxu0 0.0
    %3187 = vmatprep.subr.mxu0 0.0
    %3188 = vmatpush1.msra.mxu0 0.0
    %3189 = vmatprep.subr.mxu0 0.0
    %3190 = vmatpush1.msra.mxu0 0.0
    %3191 = vmatprep.subr.mxu0 0.0
    %3192 = vmatpush1.msra.mxu0 0.0
    %3193 = vmatprep.subr.mxu0 0.0
    %3194 = vmatpush1.msra.mxu0 0.0
    %3195 = vmatprep.mubr.f32.mxu0 0.0
    %3196 = vmatmul.mubr.f32.gmra.mrb[0].mxu0 %v2975
    %v3197 = vpop.f32.mrb[0].mxu0
    %v3198 = vadd.f32 0.0, %v3197
    %v3199 = vpop.f32.mrb[0].mxu0
    %v3200 = vadd.f32 0.0, %v3199
    %3201 = vdwg.mxu0
    %3202 = vmatprep.subr.mxu0 0.0
    %3203 = vmatpush1.msra.mxu0 %v2984
    %3204 = vmatprep.subr.mxu0 0.0
    %3205 = vmatpush1.msra.mxu0 %v2989
    %3206 = vmatprep.subr.mxu0 0.0
    %3207 = vmatpush1.msra.mxu0 %v2994
    %3208 = vmatprep.subr.mxu0 0.0
    %3209 = vmatpush1.msra.mxu0 %v2999
    %3210 = vmatprep.subr.mxu0 0.0
    %3211 = vmatpush1.msra.mxu0 %v3004
    %3212 = vmatprep.subr.mxu0 0.0
    %3213 = vmatpush1.msra.mxu0 %v3009
    %3214 = vmatprep.subr.mxu0 0.0
    %3215 = vmatpush1.msra.mxu0 %v3014
    %3216 = vmatprep.subr.mxu0 0.0
    %3217 = vmatpush1.msra.mxu0 %v3019
    %3218 = vmatprep.subr.mxu0 0.0
    %3219 = vmatpush1.msra.mxu0 %v3024
    %3220 = vmatprep.subr.mxu0 0.0
    %3221 = vmatpush1.msra.mxu0 %v3029
    %3222 = vmatprep.subr.mxu0 0.0
    %3223 = vmatpush1.msra.mxu0 %v3034
    %3224 = vmatprep.subr.mxu0 0.0
    %3225 = vmatpush1.msra.mxu0 %v3039
    %3226 = vmatprep.subr.mxu0 0.0
    %3227 = vmatpush1.msra.mxu0 %v3044
    %3228 = vmatprep.subr.mxu0 0.0
    %3229 = vmatpush1.msra.mxu0 %v3049
    %3230 = vmatprep.subr.mxu0 0.0
    %3231 = vmatpush1.msra.mxu0 %v3054
    %3232 = vmatprep.subr.mxu0 0.0
    %3233 = vmatpush1.msra.mxu0 %v3059
    %3234 = vmatprep.subr.mxu0 0.0
    %3235 = vmatpush1.msra.mxu0 0.0
    %3236 = vmatprep.subr.mxu0 0.0
    %3237 = vmatpush1.msra.mxu0 0.0
    %3238 = vmatprep.subr.mxu0 0.0
    %3239 = vmatpush1.msra.mxu0 0.0
    %3240 = vmatprep.subr.mxu0 0.0
    %3241 = vmatpush1.msra.mxu0 0.0
    %3242 = vmatprep.subr.mxu0 0.0
    %3243 = vmatpush1.msra.mxu0 0.0
    %3244 = vmatprep.subr.mxu0 0.0
    %3245 = vmatpush1.msra.mxu0 0.0
    %3246 = vmatprep.subr.mxu0 0.0
    %3247 = vmatpush1.msra.mxu0 0.0
    %3248 = vmatprep.subr.mxu0 0.0
    %3249 = vmatpush1.msra.mxu0 0.0
    %3250 = vmatprep.subr.mxu0 0.0
    %3251 = vmatpush1.msra.mxu0 0.0
    %3252 = vmatprep.subr.mxu0 0.0
    %3253 = vmatpush1.msra.mxu0 0.0
    %3254 = vmatprep.subr.mxu0 0.0
    %3255 = vmatpush1.msra.mxu0 0.0
    %3256 = vmatprep.subr.mxu0 0.0
    %3257 = vmatpush1.msra.mxu0 0.0
    %3258 = vmatprep.subr.mxu0 0.0
    %3259 = vmatpush1.msra.mxu0 0.0
    %3260 = vmatprep.subr.mxu0 0.0
    %3261 = vmatpush1.msra.mxu0 0.0
    %3262 = vmatprep.subr.mxu0 0.0
    %3263 = vmatpush1.msra.mxu0 0.0
    %3264 = vmatprep.subr.mxu0 0.0
    %3265 = vmatpush1.msra.mxu0 0.0
    %3266 = vmatprep.mubr.f32.mxu0 0.0
    %3267 = vmatmul.mubr.f32.gmra.mrb[0].mxu0 %v2975
    %v3268 = vpop.f32.mrb[0].mxu0
    %v3269 = vadd.f32 0.0, %v3268
    %v3270 = vpop.f32.mrb[0].mxu0
    %3271 = vdwg.mxu0
    %v3276 = vcombine.low %v3129, %v3198
    %v3277 = vcombine.low %v3200, %v3269
    %v3279 = vunpack.c.l.s4 1966171168
    %v3280 = vunpack.c.0.s8 %v3279
    %v3281 = vlaneseq
    %v3282 = vshrl.u32 %v3281, 7
    %v3283 = vsub.s32 %v3280, %v3282
    %v3284 = vrot.slane %v3276, %v3283
    %v3286 = vunpack.c.l.s4 1966171168
    %v3287 = vunpack.c.0.s8 %v3286
    %v3288 = vlaneseq
    %v3289 = vshrl.u32 %v3288, 7
    %v3290 = vsub.s32 %v3287, %v3289
    %v3291 = vrot.slane %v3277, %v3290
    %v3292 = vcombine.low %v3284, %v3291
    %v3294 = vunpack.c.l.s4 1966171168
    %v3295 = vunpack.c.0.s8 %v3294
    %v3296 = vlaneseq
    %v3297 = vshrl.u32 %v3296, 7
    %v3298 = vsub.s32 %v3295, %v3297
    %v3299 = vrot.slane %v3292, %v3298
    %s3301 = scalar_lea.vmem [#allocation3], 33
    %3302 = vst.msk [vmem:[%s3301] ss:$8 sm:$0xf] %vm865, %v3299
    %3303 = vst.msk [vmem:[%s3301] ss:$8 sm:$0x0] %vm865, %v3299
    %v3304 = vcombine.high %v3284, %v3291
    %v3306 = vunpack.c.l.s4 1966171168
    %v3307 = vunpack.c.0.s8 %v3306
    %v3308 = vlaneseq
    %v3309 = vshrl.u32 %v3308, 7
    %v3310 = vsub.s32 %v3307, %v3309
    %v3311 = vrot.slane %v3304, %v3310
    %s3313 = scalar_lea.vmem [#allocation3], 97
    %3314 = vst.msk [vmem:[%s3313] ss:$8 sm:$0xf] %vm865, %v3311
    %3315 = vst.msk [vmem:[%s3313] ss:$8 sm:$0x0] %vm865, %v3311
    %v3316 = vld [vmem:[#allocation3] sm:$0xff]
    %v3317 = vld [vmem:[#allocation3 + $0x20] sm:$0xff]
    %v3318 = vld [vmem:[#allocation3 + $0x40] sm:$0xff]
    %v3319 = vld [vmem:[#allocation3 + $0x60] sm:$0xff]
    %v3320 = vld [vmem:[#allocation3 + $0x8] sm:$0xff]
    %v3321 = vld [vmem:[#allocation3 + $0x28] sm:$0xff]
    %v3322 = vld [vmem:[#allocation3 + $0x48] sm:$0xff]
    %v3323 = vld [vmem:[#allocation3 + $0x68] sm:$0xff]
    %v3324 = vld [vmem:[#allocation3 + $0x10] sm:$0xff]
    %v3325 = vld [vmem:[#allocation3 + $0x30] sm:$0xff]
    %v3326 = vld [vmem:[#allocation3 + $0x50] sm:$0xff]
    %v3327 = vld [vmem:[#allocation3 + $0x70] sm:$0xff]
    %v3328 = vld [vmem:[#allocation3 + $0x18] sm:$0xff]
    %v3329 = vld [vmem:[#allocation3 + $0x38] sm:$0xff]
    %v3330 = vld [vmem:[#allocation3 + $0x58] sm:$0xff]
    %v3331 = vld [vmem:[#allocation3 + $0x78] sm:$0xff]
    %vm3332 = vcmp.lt.s32.totalorder %v539, 10
    %vm3333 = vmand %vm535, %vm3332
    %vm3334 = vmand %vm536, %vm3332
    %vm3335 = vmand %vm537, %vm3332
    %vm3336 = vmand %vm538, %vm3332
    %vm3337 = vmand %vm540, %vm3332
    %3338 = vmatprep.subr.mxu0 0.0
    %3339 = vmatpush1.xpose.msra.mxu0 %v3316
    %3340 = vmatprep.subr.mxu0 0.0
    %3341 = vmatpush1.xpose.msra.mxu0 %v3317
    %3342 = vmatprep.subr.mxu0 0.0
    %3343 = vmatpush1.xpose.msra.mxu0 %v3318
    %3344 = vmatprep.subr.mxu0 0.0
    %3345 = vmatpush1.xpose.msra.mxu0 %v3319
    %3346 = vmatprep.subr.mxu0 0.0
    %3347 = vmatpush1.xpose.msra.mxu0 0.0
    %3348 = vmatprep.subr.mxu0 0.0
    %3349 = vmatpush1.xpose.msra.mxu0 0.0
    %3350 = vmatprep.subr.mxu0 0.0
    %3351 = vmatpush1.xpose.msra.mxu0 0.0
    %3352 = vmatprep.subr.mxu0 0.0
    %3353 = vmatpush1.xpose.msra.mxu0 0.0
    %3354 = vmatprep.subr.mxu0 0.0
    %3355 = vmatpush1.xpose.msra.mxu0 0.0
    %3356 = vmatprep.subr.mxu0 0.0
    %3357 = vmatpush1.xpose.msra.mxu0 0.0
    %3358 = vmatprep.subr.mxu0 0.0
    %3359 = vmatpush1.xpose.msra.mxu0 0.0
    %3360 = vmatprep.subr.mxu0 0.0
    %3361 = vmatpush1.xpose.msra.mxu0 0.0
    %3362 = vmatprep.subr.mxu0 0.0
    %3363 = vmatpush1.xpose.msra.mxu0 0.0
    %3364 = vmatprep.subr.mxu0 0.0
    %3365 = vmatpush1.xpose.msra.mxu0 0.0
    %3366 = vmatprep.subr.mxu0 0.0
    %3367 = vmatpush1.xpose.msra.mxu0 0.0
    %3368 = vmatprep.subr.mxu0 0.0
    %3369 = vmatpush1.xpose.msra.mxu0 0.0
    %3370 = vmatprep.subr.mxu0 0.0
    %3371 = vmatpush1.xpose.msra.mxu0 0.0
    %3372 = vmatprep.subr.mxu0 0.0
    %3373 = vmatpush1.xpose.msra.mxu0 0.0
    %3374 = vmatprep.subr.mxu0 0.0
    %3375 = vmatpush1.xpose.msra.mxu0 0.0
    %3376 = vmatprep.subr.mxu0 0.0
    %3377 = vmatpush1.xpose.msra.mxu0 0.0
    %3378 = vmatprep.subr.mxu0 0.0
    %3379 = vmatpush1.xpose.msra.mxu0 0.0
    %3380 = vmatprep.subr.mxu0 0.0
    %3381 = vmatpush1.xpose.msra.mxu0 0.0
    %3382 = vmatprep.subr.mxu0 0.0
    %3383 = vmatpush1.xpose.msra.mxu0 0.0
    %3384 = vmatprep.subr.mxu0 0.0
    %3385 = vmatpush1.xpose.msra.mxu0 0.0
    %3386 = vmatprep.subr.mxu0 0.0
    %3387 = vmatpush1.xpose.msra.mxu0 0.0
    %3388 = vmatprep.subr.mxu0 0.0
    %3389 = vmatpush1.xpose.msra.mxu0 0.0
    %3390 = vmatprep.subr.mxu0 0.0
    %3391 = vmatpush1.xpose.msra.mxu0 0.0
    %3392 = vmatprep.subr.mxu0 0.0
    %3393 = vmatpush1.xpose.msra.mxu0 0.0
    %3394 = vmatprep.subr.mxu0 0.0
    %3395 = vmatpush1.xpose.msra.mxu0 0.0
    %3396 = vmatprep.subr.mxu0 0.0
    %3397 = vmatpush1.xpose.msra.mxu0 0.0
    %3398 = vmatprep.subr.mxu0 0.0
    %3399 = vmatpush1.xpose.msra.mxu0 0.0
    %3400 = vmatprep.subr.mxu0 0.0
    %3401 = vmatpush1.xpose.msra.mxu0 0.0
    %3402 = vmatprep.mubr.f32.mxu0 0.0
    %3403 = vmatmul.mubr.f32.gmra.mrb[0].mxu0 %v3127
    %v3404 = vpop.f32.mrb[0].mxu0
    %v3405 = vadd.f32 0.0, %v3404
    %v3406 = vpop.f32.mrb[0].mxu0
    %3407 = vdwg.mxu0
    %v3408 = vmul.f32 %v3405, 0.15811388
    %v3409 = vmul.f32 %v3408, 1.442695
    %v3410 = vpow.pop %v3409
    %v3411 = vsel %vm3337, %v3410, 0.0
    %3412 = vmatprep.subr.mxu0 0.0
    %3413 = vmatpush1.xpose.msra.mxu0 %v3320
    %3414 = vmatprep.subr.mxu0 0.0
    %3415 = vmatpush1.xpose.msra.mxu0 %v3321
    %3416 = vmatprep.subr.mxu0 0.0
    %3417 = vmatpush1.xpose.msra.mxu0 %v3322
    %3418 = vmatprep.subr.mxu0 0.0
    %3419 = vmatpush1.xpose.msra.mxu0 %v3323
    %3420 = vmatprep.subr.mxu0 0.0
    %3421 = vmatpush1.xpose.msra.mxu0 0.0
    %3422 = vmatprep.subr.mxu0 0.0
    %3423 = vmatpush1.xpose.msra.mxu0 0.0
    %3424 = vmatprep.subr.mxu0 0.0
    %3425 = vmatpush1.xpose.msra.mxu0 0.0
    %3426 = vmatprep.subr.mxu0 0.0
    %3427 = vmatpush1.xpose.msra.mxu0 0.0
    %3428 = vmatprep.subr.mxu0 0.0
    %3429 = vmatpush1.xpose.msra.mxu0 0.0
    %3430 = vmatprep.subr.mxu0 0.0
    %3431 = vmatpush1.xpose.msra.mxu0 0.0
    %3432 = vmatprep.subr.mxu0 0.0
    %3433 = vmatpush1.xpose.msra.mxu0 0.0
    %3434 = vmatprep.subr.mxu0 0.0
    %3435 = vmatpush1.xpose.msra.mxu0 0.0
    %3436 = vmatprep.subr.mxu0 0.0
    %3437 = vmatpush1.xpose.msra.mxu0 0.0
    %3438 = vmatprep.subr.mxu0 0.0
    %3439 = vmatpush1.xpose.msra.mxu0 0.0
    %3440 = vmatprep.subr.mxu0 0.0
    %3441 = vmatpush1.xpose.msra.mxu0 0.0
    %3442 = vmatprep.subr.mxu0 0.0
    %3443 = vmatpush1.xpose.msra.mxu0 0.0
    %3444 = vmatprep.subr.mxu0 0.0
    %3445 = vmatpush1.xpose.msra.mxu0 0.0
    %3446 = vmatprep.subr.mxu0 0.0
    %3447 = vmatpush1.xpose.msra.mxu0 0.0
    %3448 = vmatprep.subr.mxu0 0.0
    %3449 = vmatpush1.xpose.msra.mxu0 0.0
    %3450 = vmatprep.subr.mxu0 0.0
    %3451 = vmatpush1.xpose.msra.mxu0 0.0
    %3452 = vmatprep.subr.mxu0 0.0
    %3453 = vmatpush1.xpose.msra.mxu0 0.0
    %3454 = vmatprep.subr.mxu0 0.0
    %3455 = vmatpush1.xpose.msra.mxu0 0.0
    %3456 = vmatprep.subr.mxu0 0.0
    %3457 = vmatpush1.xpose.msra.mxu0 0.0
    %3458 = vmatprep.subr.mxu0 0.0
    %3459 = vmatpush1.xpose.msra.mxu0 0.0
    %3460 = vmatprep.subr.mxu0 0.0
    %3461 = vmatpush1.xpose.msra.mxu0 0.0
    %3462 = vmatprep.subr.mxu0 0.0
    %3463 = vmatpush1.xpose.msra.mxu0 0.0
    %3464 = vmatprep.subr.mxu0 0.0
    %3465 = vmatpush1.xpose.msra.mxu0 0.0
    %3466 = vmatprep.subr.mxu0 0.0
    %3467 = vmatpush1.xpose.msra.mxu0 0.0
    %3468 = vmatprep.subr.mxu0 0.0
    %3469 = vmatpush1.xpose.msra.mxu0 0.0
    %3470 = vmatprep.subr.mxu0 0.0
    %3471 = vmatpush1.xpose.msra.mxu0 0.0
    %3472 = vmatprep.subr.mxu0 0.0
    %3473 = vmatpush1.xpose.msra.mxu0 0.0
    %3474 = vmatprep.subr.mxu0 0.0
    %3475 = vmatpush1.xpose.msra.mxu0 0.0
    %3476 = vmatprep.mubr.f32.mxu0 0.0
    %3477 = vmatmul.mubr.f32.gmra.mrb[0].mxu0 %v3127
    %v3478 = vpop.f32.mrb[0].mxu0
    %v3479 = vadd.f32 0.0, %v3478
    %v3480 = vpop.f32.mrb[0].mxu0
    %3481 = vdwg.mxu0
    %v3482 = vmul.f32 %v3479, 0.15811388
    %v3483 = vmul.f32 %v3482, 1.442695
    %v3484 = vpow.pop %v3483
    %3485 = vmatprep.subr.mxu0 0.0
    %3486 = vmatpush1.xpose.msra.mxu0 %v3320
    %3487 = vmatprep.subr.mxu0 0.0
    %3488 = vmatpush1.xpose.msra.mxu0 %v3321
    %3489 = vmatprep.subr.mxu0 0.0
    %3490 = vmatpush1.xpose.msra.mxu0 %v3322
    %3491 = vmatprep.subr.mxu0 0.0
    %3492 = vmatpush1.xpose.msra.mxu0 %v3323
    %3493 = vmatprep.subr.mxu0 0.0
    %3494 = vmatpush1.xpose.msra.mxu0 0.0
    %3495 = vmatprep.subr.mxu0 0.0
    %3496 = vmatpush1.xpose.msra.mxu0 0.0
    %3497 = vmatprep.subr.mxu0 0.0
    %3498 = vmatpush1.xpose.msra.mxu0 0.0
    %3499 = vmatprep.subr.mxu0 0.0
    %3500 = vmatpush1.xpose.msra.mxu0 0.0
    %3501 = vmatprep.subr.mxu0 0.0
    %3502 = vmatpush1.xpose.msra.mxu0 0.0
    %3503 = vmatprep.subr.mxu0 0.0
    %3504 = vmatpush1.xpose.msra.mxu0 0.0
    %3505 = vmatprep.subr.mxu0 0.0
    %3506 = vmatpush1.xpose.msra.mxu0 0.0
    %3507 = vmatprep.subr.mxu0 0.0
    %3508 = vmatpush1.xpose.msra.mxu0 0.0
    %3509 = vmatprep.subr.mxu0 0.0
    %3510 = vmatpush1.xpose.msra.mxu0 0.0
    %3511 = vmatprep.subr.mxu0 0.0
    %3512 = vmatpush1.xpose.msra.mxu0 0.0
    %3513 = vmatprep.subr.mxu0 0.0
    %3514 = vmatpush1.xpose.msra.mxu0 0.0
    %3515 = vmatprep.subr.mxu0 0.0
    %3516 = vmatpush1.xpose.msra.mxu0 0.0
    %3517 = vmatprep.subr.mxu0 0.0
    %3518 = vmatpush1.xpose.msra.mxu0 0.0
    %3519 = vmatprep.subr.mxu0 0.0
    %3520 = vmatpush1.xpose.msra.mxu0 0.0
    %3521 = vmatprep.subr.mxu0 0.0
    %3522 = vmatpush1.xpose.msra.mxu0 0.0
    %3523 = vmatprep.subr.mxu0 0.0
    %3524 = vmatpush1.xpose.msra.mxu0 0.0
    %3525 = vmatprep.subr.mxu0 0.0
    %3526 = vmatpush1.xpose.msra.mxu0 0.0
    %3527 = vmatprep.subr.mxu0 0.0
    %3528 = vmatpush1.xpose.msra.mxu0 0.0
    %3529 = vmatprep.subr.mxu0 0.0
    %3530 = vmatpush1.xpose.msra.mxu0 0.0
    %3531 = vmatprep.subr.mxu0 0.0
    %3532 = vmatpush1.xpose.msra.mxu0 0.0
    %3533 = vmatprep.subr.mxu0 0.0
    %3534 = vmatpush1.xpose.msra.mxu0 0.0
    %3535 = vmatprep.subr.mxu0 0.0
    %3536 = vmatpush1.xpose.msra.mxu0 0.0
    %3537 = vmatprep.subr.mxu0 0.0
    %3538 = vmatpush1.xpose.msra.mxu0 0.0
    %3539 = vmatprep.subr.mxu0 0.0
    %3540 = vmatpush1.xpose.msra.mxu0 0.0
    %3541 = vmatprep.subr.mxu0 0.0
    %3542 = vmatpush1.xpose.msra.mxu0 0.0
    %3543 = vmatprep.subr.mxu0 0.0
    %3544 = vmatpush1.xpose.msra.mxu0 0.0
    %3545 = vmatprep.subr.mxu0 0.0
    %3546 = vmatpush1.xpose.msra.mxu0 0.0
    %3547 = vmatprep.subr.mxu0 0.0
    %3548 = vmatpush1.xpose.msra.mxu0 0.0
    %3549 = vmatprep.mubr.f32.mxu0 0.0
    %3550 = vmatmul.mubr.f32.gmra.mrb[0].mxu0 %v3316
    %v3551 = vpop.f32.mrb[0].mxu0
    %v3552 = vadd.f32 0.0, %v3551
    %v3553 = vpop.f32.mrb[0].mxu0
    %3554 = vmatprep.mubr.f32.mxu0 0.0
    %3555 = vmatmul.mubr.f32.gmra.mrb[0].mxu0 %v3317
    %v3556 = vpop.f32.mrb[0].mxu0
    %v3557 = vadd.f32 0.0, %v3556
    %v3558 = vpop.f32.mrb[0].mxu0
    %3559 = vmatprep.mubr.f32.mxu0 0.0
    %3560 = vmatmul.mubr.f32.gmra.mrb[0].mxu0 %v3318
    %v3561 = vpop.f32.mrb[0].mxu0
    %v3562 = vadd.f32 0.0, %v3561
    %v3563 = vpop.f32.mrb[0].mxu0
    %3564 = vmatprep.mubr.f32.mxu0 0.0
    %3565 = vmatmul.mubr.f32.gmra.mrb[0].mxu0 %v3319
    %v3566 = vpop.f32.mrb[0].mxu0
    %v3567 = vadd.f32 0.0, %v3566
    %v3568 = vpop.f32.mrb[0].mxu0
    %3569 = vdwg.mxu0
    %v3570 = vmul.f32 %v3552, 0.15811388
    %v3571 = vmul.f32 %v3557, 0.15811388
    %v3572 = vmul.f32 %v3562, 0.15811388
    %v3573 = vmul.f32 %v3567, 0.15811388
    %v3574 = vmul.f32 %v3570, 1.442695
    %v3575 = vpow.pop %v3574
    %v3576 = vmul.f32 %v3571, 1.442695
    %v3577 = vpow.pop %v3576
    %v3578 = vmul.f32 %v3572, 1.442695
    %v3579 = vpow.pop %v3578
    %v3580 = vmul.f32 %v3573, 1.442695
    %v3581 = vpow.pop %v3580
    %v3582 = vsel %vm3333, %v3575, 0.0
    %v3583 = vsel %vm3334, %v3577, 0.0
    %v3584 = vsel %vm3335, %v3579, 0.0
    %v3585 = vsel %vm3336, %v3581, 0.0
    %v3587 = vsel %vm157, %v3484, 0
    %v3590 = vsel %vm157, %v3582, 0
    %v3593 = vsel %vm157, %v3583, 0
    %v3596 = vsel %vm157, %v3584, 0
    %v3599 = vsel %vm157, %v3585, 0
    %3601 = vmatprep.subr.mxu0 0.0
    %3602 = vmatpush1.xpose.msra.mxu0 %v3590
    %3603 = vmatprep.subr.mxu0 0.0
    %3604 = vmatpush1.xpose.msra.mxu0 %v3593
    %3605 = vmatprep.subr.mxu0 0.0
    %3606 = vmatpush1.xpose.msra.mxu0 %v3596
    %3607 = vmatprep.subr.mxu0 0.0
    %3608 = vmatpush1.xpose.msra.mxu0 %v3599
    %3609 = vmatprep.subr.mxu0 0.0
    %3610 = vmatpush1.xpose.msra.mxu0 0.0
    %3611 = vmatprep.subr.mxu0 0.0
    %3612 = vmatpush1.xpose.msra.mxu0 0.0
    %3613 = vmatprep.subr.mxu0 0.0
    %3614 = vmatpush1.xpose.msra.mxu0 0.0
    %3615 = vmatprep.subr.mxu0 0.0
    %3616 = vmatpush1.xpose.msra.mxu0 0.0
    %3617 = vmatprep.subr.mxu0 0.0
    %3618 = vmatpush1.xpose.msra.mxu0 0.0
    %3619 = vmatprep.subr.mxu0 0.0
    %3620 = vmatpush1.xpose.msra.mxu0 0.0
    %3621 = vmatprep.subr.mxu0 0.0
    %3622 = vmatpush1.xpose.msra.mxu0 0.0
    %3623 = vmatprep.subr.mxu0 0.0
    %3624 = vmatpush1.xpose.msra.mxu0 0.0
    %3625 = vmatprep.subr.mxu0 0.0
    %3626 = vmatpush1.xpose.msra.mxu0 0.0
    %3627 = vmatprep.subr.mxu0 0.0
    %3628 = vmatpush1.xpose.msra.mxu0 0.0
    %3629 = vmatprep.subr.mxu0 0.0
    %3630 = vmatpush1.xpose.msra.mxu0 0.0
    %3631 = vmatprep.subr.mxu0 0.0
    %3632 = vmatpush1.xpose.msra.mxu0 0.0
    %3633 = vmatprep.subr.mxu0 0.0
    %3634 = vmatpush1.xpose.msra.mxu0 0.0
    %3635 = vmatprep.subr.mxu0 0.0
    %3636 = vmatpush1.xpose.msra.mxu0 0.0
    %3637 = vmatprep.subr.mxu0 0.0
    %3638 = vmatpush1.xpose.msra.mxu0 0.0
    %3639 = vmatprep.subr.mxu0 0.0
    %3640 = vmatpush1.xpose.msra.mxu0 0.0
    %3641 = vmatprep.subr.mxu0 0.0
    %3642 = vmatpush1.xpose.msra.mxu0 0.0
    %3643 = vmatprep.subr.mxu0 0.0
    %3644 = vmatpush1.xpose.msra.mxu0 0.0
    %3645 = vmatprep.subr.mxu0 0.0
    %3646 = vmatpush1.xpose.msra.mxu0 0.0
    %3647 = vmatprep.subr.mxu0 0.0
    %3648 = vmatpush1.xpose.msra.mxu0 0.0
    %3649 = vmatprep.subr.mxu0 0.0
    %3650 = vmatpush1.xpose.msra.mxu0 0.0
    %3651 = vmatprep.subr.mxu0 0.0
    %3652 = vmatpush1.xpose.msra.mxu0 0.0
    %3653 = vmatprep.subr.mxu0 0.0
    %3654 = vmatpush1.xpose.msra.mxu0 0.0
    %3655 = vmatprep.subr.mxu0 0.0
    %3656 = vmatpush1.xpose.msra.mxu0 0.0
    %3657 = vmatprep.subr.mxu0 0.0
    %3658 = vmatpush1.xpose.msra.mxu0 0.0
    %3659 = vmatprep.subr.mxu0 0.0
    %3660 = vmatpush1.xpose.msra.mxu0 0.0
    %3661 = vmatprep.subr.mxu0 0.0
    %3662 = vmatpush1.xpose.msra.mxu0 0.0
    %3663 = vmatprep.subr.mxu0 0.0
    %3664 = vmatpush1.xpose.msra.mxu0 0.0
    %3665 = vmatprep.mubr.f32.mxu0 0.0
    %3666 = vmatmul.mubr.f32.gmra.mrb[0].mxu0 %v3587
    %v3667 = vpop.f32.mrb[0].mxu0
    %v3668 = vadd.f32 0.0, %v3667
    %v3669 = vpop.f32.mrb[0].mxu0
    %3670 = vdwg.mxu0
    %v3671 = vmul.f32 %v3411, %v3668
    %v3673 = vsel %vm157, %v3411, 0
    %3675 = vmatprep.subr.mxu0 0.0
    %3676 = vmatpush1.msra.mxu0 %v3582
    %3677 = vmatprep.subr.mxu0 0.0
    %3678 = vmatpush1.msra.mxu0 %v3583
    %3679 = vmatprep.subr.mxu0 0.0
    %3680 = vmatpush1.msra.mxu0 %v3584
    %3681 = vmatprep.subr.mxu0 0.0
    %3682 = vmatpush1.msra.mxu0 %v3585
    %3683 = vmatprep.subr.mxu0 0.0
    %3684 = vmatpush1.msra.mxu0 0.0
    %3685 = vmatprep.subr.mxu0 0.0
    %3686 = vmatpush1.msra.mxu0 0.0
    %3687 = vmatprep.subr.mxu0 0.0
    %3688 = vmatpush1.msra.mxu0 0.0
    %3689 = vmatprep.subr.mxu0 0.0
    %3690 = vmatpush1.msra.mxu0 0.0
    %3691 = vmatprep.subr.mxu0 0.0
    %3692 = vmatpush1.msra.mxu0 0.0
    %3693 = vmatprep.subr.mxu0 0.0
    %3694 = vmatpush1.msra.mxu0 0.0
    %3695 = vmatprep.subr.mxu0 0.0
    %3696 = vmatpush1.msra.mxu0 0.0
    %3697 = vmatprep.subr.mxu0 0.0
    %3698 = vmatpush1.msra.mxu0 0.0
    %3699 = vmatprep.subr.mxu0 0.0
    %3700 = vmatpush1.msra.mxu0 0.0
    %3701 = vmatprep.subr.mxu0 0.0
    %3702 = vmatpush1.msra.mxu0 0.0
    %3703 = vmatprep.subr.mxu0 0.0
    %3704 = vmatpush1.msra.mxu0 0.0
    %3705 = vmatprep.subr.mxu0 0.0
    %3706 = vmatpush1.msra.mxu0 0.0
    %3707 = vmatprep.subr.mxu0 0.0
    %3708 = vmatpush1.msra.mxu0 0.0
    %3709 = vmatprep.subr.mxu0 0.0
    %3710 = vmatpush1.msra.mxu0 0.0
    %3711 = vmatprep.subr.mxu0 0.0
    %3712 = vmatpush1.msra.mxu0 0.0
    %3713 = vmatprep.subr.mxu0 0.0
    %3714 = vmatpush1.msra.mxu0 0.0
    %3715 = vmatprep.subr.mxu0 0.0
    %3716 = vmatpush1.msra.mxu0 0.0
    %3717 = vmatprep.subr.mxu0 0.0
    %3718 = vmatpush1.msra.mxu0 0.0
    %3719 = vmatprep.subr.mxu0 0.0
    %3720 = vmatpush1.msra.mxu0 0.0
    %3721 = vmatprep.subr.mxu0 0.0
    %3722 = vmatpush1.msra.mxu0 0.0
    %3723 = vmatprep.subr.mxu0 0.0
    %3724 = vmatpush1.msra.mxu0 0.0
    %3725 = vmatprep.subr.mxu0 0.0
    %3726 = vmatpush1.msra.mxu0 0.0
    %3727 = vmatprep.subr.mxu0 0.0
    %3728 = vmatpush1.msra.mxu0 0.0
    %3729 = vmatprep.subr.mxu0 0.0
    %3730 = vmatpush1.msra.mxu0 0.0
    %3731 = vmatprep.subr.mxu0 0.0
    %3732 = vmatpush1.msra.mxu0 0.0
    %3733 = vmatprep.subr.mxu0 0.0
    %3734 = vmatpush1.msra.mxu0 0.0
    %3735 = vmatprep.subr.mxu0 0.0
    %3736 = vmatpush1.msra.mxu0 0.0
    %3737 = vmatprep.subr.mxu0 0.0
    %3738 = vmatpush1.msra.mxu0 0.0
    %3739 = vmatprep.mubr.f32.mxu0 0.0
    %3740 = vmatmul.mubr.f32.gmra.mrb[0].mxu0 %v3673
    %v3741 = vpop.f32.mrb[0].mxu0
    %v3742 = vadd.f32 0.0, %v3741
    %v3743 = vpop.f32.mrb[0].mxu0
    %3744 = vdwg.mxu0
    %v3745 = vmul.f32 %v3742, %v3484
    %v3747 = vsel %vm157, %v3671, 0
    %3749 = vmatprep.subr.mxu0 0.0
    %3750 = vmatpush1.msra.mxu0 %v3324
    %3751 = vmatprep.subr.mxu0 0.0
    %3752 = vmatpush1.msra.mxu0 %v3325
    %3753 = vmatprep.subr.mxu0 0.0
    %3754 = vmatpush1.msra.mxu0 %v3326
    %3755 = vmatprep.subr.mxu0 0.0
    %3756 = vmatpush1.msra.mxu0 %v3327
    %3757 = vmatprep.subr.mxu0 0.0
    %3758 = vmatpush1.msra.mxu0 0.0
    %3759 = vmatprep.subr.mxu0 0.0
    %3760 = vmatpush1.msra.mxu0 0.0
    %3761 = vmatprep.subr.mxu0 0.0
    %3762 = vmatpush1.msra.mxu0 0.0
    %3763 = vmatprep.subr.mxu0 0.0
    %3764 = vmatpush1.msra.mxu0 0.0
    %3765 = vmatprep.subr.mxu0 0.0
    %3766 = vmatpush1.msra.mxu0 0.0
    %3767 = vmatprep.subr.mxu0 0.0
    %3768 = vmatpush1.msra.mxu0 0.0
    %3769 = vmatprep.subr.mxu0 0.0
    %3770 = vmatpush1.msra.mxu0 0.0
    %3771 = vmatprep.subr.mxu0 0.0
    %3772 = vmatpush1.msra.mxu0 0.0
    %3773 = vmatprep.subr.mxu0 0.0
    %3774 = vmatpush1.msra.mxu0 0.0
    %3775 = vmatprep.subr.mxu0 0.0
    %3776 = vmatpush1.msra.mxu0 0.0
    %3777 = vmatprep.subr.mxu0 0.0
    %3778 = vmatpush1.msra.mxu0 0.0
    %3779 = vmatprep.subr.mxu0 0.0
    %3780 = vmatpush1.msra.mxu0 0.0
    %3781 = vmatprep.subr.mxu0 0.0
    %3782 = vmatpush1.msra.mxu0 0.0
    %3783 = vmatprep.subr.mxu0 0.0
    %3784 = vmatpush1.msra.mxu0 0.0
    %3785 = vmatprep.subr.mxu0 0.0
    %3786 = vmatpush1.msra.mxu0 0.0
    %3787 = vmatprep.subr.mxu0 0.0
    %3788 = vmatpush1.msra.mxu0 0.0
    %3789 = vmatprep.subr.mxu0 0.0
    %3790 = vmatpush1.msra.mxu0 0.0
    %3791 = vmatprep.subr.mxu0 0.0
    %3792 = vmatpush1.msra.mxu0 0.0
    %3793 = vmatprep.subr.mxu0 0.0
    %3794 = vmatpush1.msra.mxu0 0.0
    %3795 = vmatprep.subr.mxu0 0.0
    %3796 = vmatpush1.msra.mxu0 0.0
    %3797 = vmatprep.subr.mxu0 0.0
    %3798 = vmatpush1.msra.mxu0 0.0
    %3799 = vmatprep.subr.mxu0 0.0
    %3800 = vmatpush1.msra.mxu0 0.0
    %3801 = vmatprep.subr.mxu0 0.0
    %3802 = vmatpush1.msra.mxu0 0.0
    %3803 = vmatprep.subr.mxu0 0.0
    %3804 = vmatpush1.msra.mxu0 0.0
    %3805 = vmatprep.subr.mxu0 0.0
    %3806 = vmatpush1.msra.mxu0 0.0
    %3807 = vmatprep.subr.mxu0 0.0
    %3808 = vmatpush1.msra.mxu0 0.0
    %3809 = vmatprep.subr.mxu0 0.0
    %3810 = vmatpush1.msra.mxu0 0.0
    %3811 = vmatprep.subr.mxu0 0.0
    %3812 = vmatpush1.msra.mxu0 0.0
    %3813 = vmatprep.mubr.f32.mxu0 0.0
    %3814 = vmatmul.mubr.f32.gmra.mrb[0].mxu0 %v3747
    %v3815 = vpop.f32.mrb[0].mxu0
    %v3816 = vadd.f32 0.0, %v3815
    %v3817 = vpop.f32.mrb[0].mxu0
    %3818 = vdwg.mxu0
    %v3820 = vsel %vm157, %v3745, 0
    %3822 = vmatprep.subr.mxu0 0.0
    %3823 = vmatpush1.msra.mxu0 %v3328
    %3824 = vmatprep.subr.mxu0 0.0
    %3825 = vmatpush1.msra.mxu0 %v3329
    %3826 = vmatprep.subr.mxu0 0.0
    %3827 = vmatpush1.msra.mxu0 %v3330
    %3828 = vmatprep.subr.mxu0 0.0
    %3829 = vmatpush1.msra.mxu0 %v3331
    %3830 = vmatprep.subr.mxu0 0.0
    %3831 = vmatpush1.msra.mxu0 0.0
    %3832 = vmatprep.subr.mxu0 0.0
    %3833 = vmatpush1.msra.mxu0 0.0
    %3834 = vmatprep.subr.mxu0 0.0
    %3835 = vmatpush1.msra.mxu0 0.0
    %3836 = vmatprep.subr.mxu0 0.0
    %3837 = vmatpush1.msra.mxu0 0.0
    %3838 = vmatprep.subr.mxu0 0.0
    %3839 = vmatpush1.msra.mxu0 0.0
    %3840 = vmatprep.subr.mxu0 0.0
    %3841 = vmatpush1.msra.mxu0 0.0
    %3842 = vmatprep.subr.mxu0 0.0
    %3843 = vmatpush1.msra.mxu0 0.0
    %3844 = vmatprep.subr.mxu0 0.0
    %3845 = vmatpush1.msra.mxu0 0.0
    %3846 = vmatprep.subr.mxu0 0.0
    %3847 = vmatpush1.msra.mxu0 0.0
    %3848 = vmatprep.subr.mxu0 0.0
    %3849 = vmatpush1.msra.mxu0 0.0
    %3850 = vmatprep.subr.mxu0 0.0
    %3851 = vmatpush1.msra.mxu0 0.0
    %3852 = vmatprep.subr.mxu0 0.0
    %3853 = vmatpush1.msra.mxu0 0.0
    %3854 = vmatprep.subr.mxu0 0.0
    %3855 = vmatpush1.msra.mxu0 0.0
    %3856 = vmatprep.subr.mxu0 0.0
    %3857 = vmatpush1.msra.mxu0 0.0
    %3858 = vmatprep.subr.mxu0 0.0
    %3859 = vmatpush1.msra.mxu0 0.0
    %3860 = vmatprep.subr.mxu0 0.0
    %3861 = vmatpush1.msra.mxu0 0.0
    %3862 = vmatprep.subr.mxu0 0.0
    %3863 = vmatpush1.msra.mxu0 0.0
    %3864 = vmatprep.subr.mxu0 0.0
    %3865 = vmatpush1.msra.mxu0 0.0
    %3866 = vmatprep.subr.mxu0 0.0
    %3867 = vmatpush1.msra.mxu0 0.0
    %3868 = vmatprep.subr.mxu0 0.0
    %3869 = vmatpush1.msra.mxu0 0.0
    %3870 = vmatprep.subr.mxu0 0.0
    %3871 = vmatpush1.msra.mxu0 0.0
    %3872 = vmatprep.subr.mxu0 0.0
    %3873 = vmatpush1.msra.mxu0 0.0
    %3874 = vmatprep.subr.mxu0 0.0
    %3875 = vmatpush1.msra.mxu0 0.0
    %3876 = vmatprep.subr.mxu0 0.0
    %3877 = vmatpush1.msra.mxu0 0.0
    %3878 = vmatprep.subr.mxu0 0.0
    %3879 = vmatpush1.msra.mxu0 0.0
    %3880 = vmatprep.subr.mxu0 0.0
    %3881 = vmatpush1.msra.mxu0 0.0
    %3882 = vmatprep.subr.mxu0 0.0
    %3883 = vmatpush1.msra.mxu0 0.0
    %3884 = vmatprep.subr.mxu0 0.0
    %3885 = vmatpush1.msra.mxu0 0.0
    %3886 = vmatprep.mubr.f32.mxu0 0.0
    %3887 = vmatmul.mubr.f32.gmra.mrb[0].mxu0 %v3820
    %v3888 = vpop.f32.mrb[0].mxu0
    %v3889 = vadd.f32 0.0, %v3888
    %v3890 = vpop.f32.mrb[0].mxu0
    %3891 = vdwg.mxu0
    %v3892 = vsel %vm1457, %v3745, 0.0
    %3893 = vadd.xlane.f32.xlu0 %v3892
    %v3894 = vpop.xlane.xlu0 %3893
    %v3895 = vrcp.pop %v3894
    %v3896 = vmul.f32 %v3816, %v3895
    %v3897 = vmul.f32 %v3889, %v3895
    %v3898 = vld [vmem:[#allocation9] sm:$0xff]
    %v3899 = vld [vmem:[#allocation9 + $0x8] sm:$0xff]
    %v3900 = vld [vmem:[#allocation9 + $0x10] sm:$0xff]
    %v3901 = vld [vmem:[#allocation9 + $0x18] sm:$0xff]
    %v3902 = vld [vmem:[#allocation9 + $0x20] sm:$0xff]
    %v3903 = vld [vmem:[#allocation9 + $0x28] sm:$0xff]
    %v3904 = vld [vmem:[#allocation9 + $0x30] sm:$0xff]
    %v3905 = vld [vmem:[#allocation9 + $0x38] sm:$0xff]
    %v3906 = vld [vmem:[#allocation9 + $0x40] sm:$0xff]
    %v3907 = vld [vmem:[#allocation9 + $0x48] sm:$0xff]
    %v3908 = vld [vmem:[#allocation9 + $0x50] sm:$0xff]
    %v3909 = vld [vmem:[#allocation9 + $0x58] sm:$0xff]
    %v3910 = vld [vmem:[#allocation9 + $0x60] sm:$0xff]
    %v3911 = vld [vmem:[#allocation9 + $0x68] sm:$0xff]
    %v3912 = vld [vmem:[#allocation9 + $0x70] sm:$0xff]
    %v3913 = vld [vmem:[#allocation9 + $0x78] sm:$0xff]
    %v3914 = vld [vmem:[#allocation9 + $0x80] sm:$0xff]
    %v3915 = vld [vmem:[#allocation9 + $0x88] sm:$0xff]
    %v3916 = vld [vmem:[#allocation9 + $0x90] sm:$0xff]
    %v3917 = vld [vmem:[#allocation9 + $0x98] sm:$0xff]
    %v3918 = vld [vmem:[#allocation9 + $0xa0] sm:$0xff]
    %v3919 = vld [vmem:[#allocation9 + $0xa8] sm:$0xff]
    %v3920 = vld [vmem:[#allocation9 + $0xb0] sm:$0xff]
    %v3921 = vld [vmem:[#allocation9 + $0xb8] sm:$0xff]
    %v3922 = vld [vmem:[#allocation9 + $0xc0] sm:$0xff]
    %v3923 = vld [vmem:[#allocation9 + $0xc8] sm:$0xff]
    %v3924 = vld [vmem:[#allocation9 + $0xd0] sm:$0xff]
    %v3925 = vld [vmem:[#allocation9 + $0xd8] sm:$0xff]
    %v3926 = vld [vmem:[#allocation9 + $0xe0] sm:$0xff]
    %v3927 = vld [vmem:[#allocation9 + $0xe8] sm:$0xff]
    %v3928 = vld [vmem:[#allocation9 + $0xf0] sm:$0xff]
    %v3929 = vld [vmem:[#allocation9 + $0xf8] sm:$0xff]
    %v3930 = vld [vmem:[%s5] sm:$0x1]
    %v3932 = vlaneseq
    %v3933 = vshrl.u32 %v3932, 7
    %v3934 = vsub.s32 0, %v3933
    %v3935 = vrot.slane %v3930, %v3934
    %3937 = vmatprep.subr.mxu0 0.0
    %3938 = vmatpush1.msra.mxu0 %v3898
    %3939 = vmatprep.subr.mxu0 0.0
    %3940 = vmatpush1.msra.mxu0 %v3899
    %3941 = vmatprep.subr.mxu0 0.0
    %3942 = vmatpush1.msra.mxu0 %v3900
    %3943 = vmatprep.subr.mxu0 0.0
    %3944 = vmatpush1.msra.mxu0 %v3901
    %3945 = vmatprep.subr.mxu0 0.0
    %3946 = vmatpush1.msra.mxu0 %v3902
    %3947 = vmatprep.subr.mxu0 0.0
    %3948 = vmatpush1.msra.mxu0 %v3903
    %3949 = vmatprep.subr.mxu0 0.0
    %3950 = vmatpush1.msra.mxu0 %v3904
    %3951 = vmatprep.subr.mxu0 0.0
    %3952 = vmatpush1.msra.mxu0 %v3905
    %3953 = vmatprep.subr.mxu0 0.0
    %3954 = vmatpush1.msra.mxu0 %v3906
    %3955 = vmatprep.subr.mxu0 0.0
    %3956 = vmatpush1.msra.mxu0 %v3907
    %3957 = vmatprep.subr.mxu0 0.0
    %3958 = vmatpush1.msra.mxu0 %v3908
    %3959 = vmatprep.subr.mxu0 0.0
    %3960 = vmatpush1.msra.mxu0 %v3909
    %3961 = vmatprep.subr.mxu0 0.0
    %3962 = vmatpush1.msra.mxu0 %v3910
    %3963 = vmatprep.subr.mxu0 0.0
    %3964 = vmatpush1.msra.mxu0 %v3911
    %3965 = vmatprep.subr.mxu0 0.0
    %3966 = vmatpush1.msra.mxu0 %v3912
    %3967 = vmatprep.subr.mxu0 0.0
    %3968 = vmatpush1.msra.mxu0 %v3913
    %3969 = vmatprep.subr.mxu0 0.0
    %3970 = vmatpush1.msra.mxu0 %v3914
    %3971 = vmatprep.subr.mxu0 0.0
    %3972 = vmatpush1.msra.mxu0 %v3915
    %3973 = vmatprep.subr.mxu0 0.0
    %3974 = vmatpush1.msra.mxu0 %v3916
    %3975 = vmatprep.subr.mxu0 0.0
    %3976 = vmatpush1.msra.mxu0 %v3917
    %3977 = vmatprep.subr.mxu0 0.0
    %3978 = vmatpush1.msra.mxu0 %v3918
    %3979 = vmatprep.subr.mxu0 0.0
    %3980 = vmatpush1.msra.mxu0 %v3919
    %3981 = vmatprep.subr.mxu0 0.0
    %3982 = vmatpush1.msra.mxu0 %v3920
    %3983 = vmatprep.subr.mxu0 0.0
    %3984 = vmatpush1.msra.mxu0 %v3921
    %3985 = vmatprep.subr.mxu0 0.0
    %3986 = vmatpush1.msra.mxu0 %v3922
    %3987 = vmatprep.subr.mxu0 0.0
    %3988 = vmatpush1.msra.mxu0 %v3923
    %3989 = vmatprep.subr.mxu0 0.0
    %3990 = vmatpush1.msra.mxu0 %v3924
    %3991 = vmatprep.subr.mxu0 0.0
    %3992 = vmatpush1.msra.mxu0 %v3925
    %3993 = vmatprep.subr.mxu0 0.0
    %3994 = vmatpush1.msra.mxu0 %v3926
    %3995 = vmatprep.subr.mxu0 0.0
    %3996 = vmatpush1.msra.mxu0 %v3927
    %3997 = vmatprep.subr.mxu0 0.0
    %3998 = vmatpush1.msra.mxu0 %v3928
    %3999 = vmatprep.subr.mxu0 0.0
    %4000 = vmatpush1.msra.mxu0 %v3929
    %4001 = vmatprep.mubr.f32.mxu0 %v3897
    %4002 = vmatmul.mubr.f32.gmra.mrb[0].mxu0 %v3896
    %v4003 = vpop.f32.mrb[0].mxu0
    %v4004 = vadd.f32 %v3935, %v4003
    %v4005 = vpop.f32.mrb[0].mxu0
    %4006 = vdwg.mxu0
    %v4007 = vadd.f32 %v4004, %v2975
    %v4008 = vld [vmem:[#allocation10] sm:$0xff]
    %v4009 = vld [vmem:[#allocation10 + $0x8] sm:$0xff]
    %v4010 = vld [vmem:[#allocation10 + $0x10] sm:$0xff]
    %v4011 = vld [vmem:[#allocation10 + $0x18] sm:$0xff]
    %v4012 = vld [vmem:[#allocation10 + $0x20] sm:$0xff]
    %v4013 = vld [vmem:[#allocation10 + $0x28] sm:$0xff]
    %v4014 = vld [vmem:[#allocation10 + $0x30] sm:$0xff]
    %v4015 = vld [vmem:[#allocation10 + $0x38] sm:$0xff]
    %v4016 = vld [vmem:[#allocation10 + $0x40] sm:$0xff]
    %v4017 = vld [vmem:[#allocation10 + $0x48] sm:$0xff]
    %v4018 = vld [vmem:[#allocation10 + $0x50] sm:$0xff]
    %v4019 = vld [vmem:[#allocation10 + $0x58] sm:$0xff]
    %v4020 = vld [vmem:[#allocation10 + $0x60] sm:$0xff]
    %v4021 = vld [vmem:[#allocation10 + $0x68] sm:$0xff]
    %v4022 = vld [vmem:[#allocation10 + $0x70] sm:$0xff]
    %v4023 = vld [vmem:[#allocation10 + $0x78] sm:$0xff]
    %v4024 = vld [vmem:[%s7] sm:$0x1]
    %v4026 = vlaneseq
    %v4027 = vshrl.u32 %v4026, 7
    %v4028 = vsub.s32 0, %v4027
    %v4029 = vrot.slane %v4024, %v4028
    %4031 = vmatprep.subr.mxu0 0.0
    %4032 = vmatpush1.msra.mxu0 %v4008
    %4033 = vmatprep.subr.mxu0 0.0
    %4034 = vmatpush1.msra.mxu0 %v4009
    %4035 = vmatprep.subr.mxu0 0.0
    %4036 = vmatpush1.msra.mxu0 %v4010
    %4037 = vmatprep.subr.mxu0 0.0
    %4038 = vmatpush1.msra.mxu0 %v4011
    %4039 = vmatprep.subr.mxu0 0.0
    %4040 = vmatpush1.msra.mxu0 %v4012
    %4041 = vmatprep.subr.mxu0 0.0
    %4042 = vmatpush1.msra.mxu0 %v4013
    %4043 = vmatprep.subr.mxu0 0.0
    %4044 = vmatpush1.msra.mxu0 %v4014
    %4045 = vmatprep.subr.mxu0 0.0
    %4046 = vmatpush1.msra.mxu0 %v4015
    %4047 = vmatprep.subr.mxu0 0.0
    %4048 = vmatpush1.msra.mxu0 %v4016
    %4049 = vmatprep.subr.mxu0 0.0
    %4050 = vmatpush1.msra.mxu0 %v4017
    %4051 = vmatprep.subr.mxu0 0.0
    %4052 = vmatpush1.msra.mxu0 %v4018
    %4053 = vmatprep.subr.mxu0 0.0
    %4054 = vmatpush1.msra.mxu0 %v4019
    %4055 = vmatprep.subr.mxu0 0.0
    %4056 = vmatpush1.msra.mxu0 %v4020
    %4057 = vmatprep.subr.mxu0 0.0
    %4058 = vmatpush1.msra.mxu0 %v4021
    %4059 = vmatprep.subr.mxu0 0.0
    %4060 = vmatpush1.msra.mxu0 %v4022
    %4061 = vmatprep.subr.mxu0 0.0
    %4062 = vmatpush1.msra.mxu0 %v4023
    %4063 = vmatprep.subr.mxu0 0.0
    %4064 = vmatpush1.msra.mxu0 0.0
    %4065 = vmatprep.subr.mxu0 0.0
    %4066 = vmatpush1.msra.mxu0 0.0
    %4067 = vmatprep.subr.mxu0 0.0
    %4068 = vmatpush1.msra.mxu0 0.0
    %4069 = vmatprep.subr.mxu0 0.0
    %4070 = vmatpush1.msra.mxu0 0.0
    %4071 = vmatprep.subr.mxu0 0.0
    %4072 = vmatpush1.msra.mxu0 0.0
    %4073 = vmatprep.subr.mxu0 0.0
    %4074 = vmatpush1.msra.mxu0 0.0
    %4075 = vmatprep.subr.mxu0 0.0
    %4076 = vmatpush1.msra.mxu0 0.0
    %4077 = vmatprep.subr.mxu0 0.0
    %4078 = vmatpush1.msra.mxu0 0.0
    %4079 = vmatprep.subr.mxu0 0.0
    %4080 = vmatpush1.msra.mxu0 0.0
    %4081 = vmatprep.subr.mxu0 0.0
    %4082 = vmatpush1.msra.mxu0 0.0
    %4083 = vmatprep.subr.mxu0 0.0
    %4084 = vmatpush1.msra.mxu0 0.0
    %4085 = vmatprep.subr.mxu0 0.0
    %4086 = vmatpush1.msra.mxu0 0.0
    %4087 = vmatprep.subr.mxu0 0.0
    %4088 = vmatpush1.msra.mxu0 0.0
    %4089 = vmatprep.subr.mxu0 0.0
    %4090 = vmatpush1.msra.mxu0 0.0
    %4091 = vmatprep.subr.mxu0 0.0
    %4092 = vmatpush1.msra.mxu0 0.0
    %4093 = vmatprep.subr.mxu0 0.0
    %4094 = vmatpush1.msra.mxu0 0.0
    %4095 = vmatprep.mubr.f32.mxu0 0.0
    %4096 = vmatmul.mubr.f32.gmra.mrb[0].mxu0 %v4007
    %v4097 = vpop.f32.mrb[0].mxu0
    %v4098 = vadd.f32 %v4029, %v4097
    %v4099 = vpop.f32.mrb[0].mxu0
    %4100 = vdwg.mxu0
    %v4101 = vmax.f32 %v4098, 0.0
    %v4102 = vld [vmem:[#allocation12] sm:$0xff]
    %v4103 = vld [vmem:[#allocation12 + $0x8] sm:$0xff]
    %v4104 = vld [vmem:[#allocation12 + $0x10] sm:$0xff]
    %v4105 = vld [vmem:[#allocation12 + $0x18] sm:$0xff]
    %v4106 = vld [vmem:[#allocation12 + $0x20] sm:$0xff]
    %v4107 = vld [vmem:[#allocation12 + $0x28] sm:$0xff]
    %v4108 = vld [vmem:[#allocation12 + $0x30] sm:$0xff]
    %v4109 = vld [vmem:[#allocation12 + $0x38] sm:$0xff]
    %v4110 = vld [vmem:[#allocation12 + $0x40] sm:$0xff]
    %v4111 = vld [vmem:[#allocation12 + $0x48] sm:$0xff]
    %v4112 = vld [vmem:[#allocation12 + $0x50] sm:$0xff]
    %v4113 = vld [vmem:[#allocation12 + $0x58] sm:$0xff]
    %v4114 = vld [vmem:[#allocation12 + $0x60] sm:$0xff]
    %v4115 = vld [vmem:[#allocation12 + $0x68] sm:$0xff]
    %v4116 = vld [vmem:[#allocation12 + $0x70] sm:$0xff]
    %v4117 = vld [vmem:[#allocation12 + $0x78] sm:$0xff]
    %v4118 = vld [vmem:[%s9] sm:$0x1]
    %v4120 = vlaneseq
    %v4121 = vshrl.u32 %v4120, 7
    %v4122 = vsub.s32 0, %v4121
    %v4123 = vrot.slane %v4118, %v4122
    %4125 = vmatprep.subr.mxu0 0.0
    %4126 = vmatpush1.msra.mxu0 %v4102
    %4127 = vmatprep.subr.mxu0 0.0
    %4128 = vmatpush1.msra.mxu0 %v4103
    %4129 = vmatprep.subr.mxu0 0.0
    %4130 = vmatpush1.msra.mxu0 %v4104
    %4131 = vmatprep.subr.mxu0 0.0
    %4132 = vmatpush1.msra.mxu0 %v4105
    %4133 = vmatprep.subr.mxu0 0.0
    %4134 = vmatpush1.msra.mxu0 %v4106
    %4135 = vmatprep.subr.mxu0 0.0
    %4136 = vmatpush1.msra.mxu0 %v4107
    %4137 = vmatprep.subr.mxu0 0.0
    %4138 = vmatpush1.msra.mxu0 %v4108
    %4139 = vmatprep.subr.mxu0 0.0
    %4140 = vmatpush1.msra.mxu0 %v4109
    %4141 = vmatprep.subr.mxu0 0.0
    %4142 = vmatpush1.msra.mxu0 %v4110
    %4143 = vmatprep.subr.mxu0 0.0
    %4144 = vmatpush1.msra.mxu0 %v4111
    %4145 = vmatprep.subr.mxu0 0.0
    %4146 = vmatpush1.msra.mxu0 %v4112
    %4147 = vmatprep.subr.mxu0 0.0
    %4148 = vmatpush1.msra.mxu0 %v4113
    %4149 = vmatprep.subr.mxu0 0.0
    %4150 = vmatpush1.msra.mxu0 %v4114
    %4151 = vmatprep.subr.mxu0 0.0
    %4152 = vmatpush1.msra.mxu0 %v4115
    %4153 = vmatprep.subr.mxu0 0.0
    %4154 = vmatpush1.msra.mxu0 %v4116
    %4155 = vmatprep.subr.mxu0 0.0
    %4156 = vmatpush1.msra.mxu0 %v4117
    %4157 = vmatprep.subr.mxu0 0.0
    %4158 = vmatpush1.msra.mxu0 0.0
    %4159 = vmatprep.subr.mxu0 0.0
    %4160 = vmatpush1.msra.mxu0 0.0
    %4161 = vmatprep.subr.mxu0 0.0
    %4162 = vmatpush1.msra.mxu0 0.0
    %4163 = vmatprep.subr.mxu0 0.0
    %4164 = vmatpush1.msra.mxu0 0.0
    %4165 = vmatprep.subr.mxu0 0.0
    %4166 = vmatpush1.msra.mxu0 0.0
    %4167 = vmatprep.subr.mxu0 0.0
    %4168 = vmatpush1.msra.mxu0 0.0
    %4169 = vmatprep.subr.mxu0 0.0
    %4170 = vmatpush1.msra.mxu0 0.0
    %4171 = vmatprep.subr.mxu0 0.0
    %4172 = vmatpush1.msra.mxu0 0.0
    %4173 = vmatprep.subr.mxu0 0.0
    %4174 = vmatpush1.msra.mxu0 0.0
    %4175 = vmatprep.subr.mxu0 0.0
    %4176 = vmatpush1.msra.mxu0 0.0
    %4177 = vmatprep.subr.mxu0 0.0
    %4178 = vmatpush1.msra.mxu0 0.0
    %4179 = vmatprep.subr.mxu0 0.0
    %4180 = vmatpush1.msra.mxu0 0.0
    %4181 = vmatprep.subr.mxu0 0.0
    %4182 = vmatpush1.msra.mxu0 0.0
    %4183 = vmatprep.subr.mxu0 0.0
    %4184 = vmatpush1.msra.mxu0 0.0
    %4185 = vmatprep.subr.mxu0 0.0
    %4186 = vmatpush1.msra.mxu0 0.0
    %4187 = vmatprep.subr.mxu0 0.0
    %4188 = vmatpush1.msra.mxu0 0.0
    %4189 = vmatprep.mubr.f32.mxu0 0.0
    %4190 = vmatmul.mubr.f32.gmra.mrb[0].mxu0 %v4101
    %v4191 = vpop.f32.mrb[0].mxu0
    %v4192 = vadd.f32 %v4123, %v4191
    %v4193 = vpop.f32.mrb[0].mxu0
    %4194 = vdwg.mxu0
    %4195 = vst [vmem:[#allocation2 + $0xa] sm:$0x1] %v4192
    %4196 = vst [vmem:[#allocation2 + $0x19] sm:$0x2] %v4192
    %v4197 = vld [vmem:[#allocation2] sm:$0xff]
    %v4198 = vld [vmem:[#allocation2 + $0x8] sm:$0xff]
    %v4199 = vld [vmem:[#allocation2 + $0x10] sm:$0xff]
    %v4200 = vld [vmem:[#allocation2 + $0x18] sm:$0xff]
    %v4201 = vld [vmem:[#allocation13] sm:$0xff]
    %v4202 = vld [vmem:[#allocation13 + $0x8] sm:$0xff]
    %v4203 = vld [vmem:[#allocation13 + $0x10] sm:$0xff]
    %v4204 = vld [vmem:[#allocation13 + $0x18] sm:$0xff]
    %v4205 = vld [vmem:[#allocation13 + $0x20] sm:$0xff]
    %v4206 = vld [vmem:[#allocation13 + $0x28] sm:$0xff]
    %v4207 = vld [vmem:[#allocation13 + $0x30] sm:$0xff]
    %v4208 = vld [vmem:[#allocation13 + $0x38] sm:$0xff]
    %v4209 = vld [vmem:[#allocation13 + $0x40] sm:$0xff]
    %v4210 = vld [vmem:[#allocation13 + $0x48] sm:$0xff]
    %v4211 = vld [vmem:[#allocation13 + $0x50] sm:$0xff]
    %v4212 = vld [vmem:[#allocation13 + $0x58] sm:$0xff]
    %v4213 = vld [vmem:[#allocation13 + $0x60] sm:$0xff]
    %v4214 = vld [vmem:[#allocation13 + $0x68] sm:$0xff]
    %v4215 = vld [vmem:[#allocation13 + $0x70] sm:$0xff]
    %v4216 = vld [vmem:[#allocation13 + $0x78] sm:$0xff]
    %4217 = vmatprep.subr.mxu0 0.0
    %4218 = vmatpush1.msra.mxu0 %v4201
    %4219 = vmatprep.subr.mxu0 0.0
    %4220 = vmatpush1.msra.mxu0 %v4202
    %4221 = vmatprep.subr.mxu0 0.0
    %4222 = vmatpush1.msra.mxu0 %v4203
    %4223 = vmatprep.subr.mxu0 0.0
    %4224 = vmatpush1.msra.mxu0 %v4204
    %4225 = vmatprep.subr.mxu0 0.0
    %4226 = vmatpush1.msra.mxu0 %v4205
    %4227 = vmatprep.subr.mxu0 0.0
    %4228 = vmatpush1.msra.mxu0 %v4206
    %4229 = vmatprep.subr.mxu0 0.0
    %4230 = vmatpush1.msra.mxu0 %v4207
    %4231 = vmatprep.subr.mxu0 0.0
    %4232 = vmatpush1.msra.mxu0 %v4208
    %4233 = vmatprep.subr.mxu0 0.0
    %4234 = vmatpush1.msra.mxu0 %v4209
    %4235 = vmatprep.subr.mxu0 0.0
    %4236 = vmatpush1.msra.mxu0 %v4210
    %4237 = vmatprep.subr.mxu0 0.0
    %4238 = vmatpush1.msra.mxu0 %v4211
    %4239 = vmatprep.subr.mxu0 0.0
    %4240 = vmatpush1.msra.mxu0 %v4212
    %4241 = vmatprep.subr.mxu0 0.0
    %4242 = vmatpush1.msra.mxu0 %v4213
    %4243 = vmatprep.subr.mxu0 0.0
    %4244 = vmatpush1.msra.mxu0 %v4214
    %4245 = vmatprep.subr.mxu0 0.0
    %4246 = vmatpush1.msra.mxu0 %v4215
    %4247 = vmatprep.subr.mxu0 0.0
    %4248 = vmatpush1.msra.mxu0 %v4216
    %4249 = vmatprep.subr.mxu0 0.0
    %4250 = vmatpush1.msra.mxu0 0.0
    %4251 = vmatprep.subr.mxu0 0.0
    %4252 = vmatpush1.msra.mxu0 0.0
    %4253 = vmatprep.subr.mxu0 0.0
    %4254 = vmatpush1.msra.mxu0 0.0
    %4255 = vmatprep.subr.mxu0 0.0
    %4256 = vmatpush1.msra.mxu0 0.0
    %4257 = vmatprep.subr.mxu0 0.0
    %4258 = vmatpush1.msra.mxu0 0.0
    %4259 = vmatprep.subr.mxu0 0.0
    %4260 = vmatpush1.msra.mxu0 0.0
    %4261 = vmatprep.subr.mxu0 0.0
    %4262 = vmatpush1.msra.mxu0 0.0
    %4263 = vmatprep.subr.mxu0 0.0
    %4264 = vmatpush1.msra.mxu0 0.0
    %4265 = vmatprep.subr.mxu0 0.0
    %4266 = vmatpush1.msra.mxu0 0.0
    %4267 = vmatprep.subr.mxu0 0.0
    %4268 = vmatpush1.msra.mxu0 0.0
    %4269 = vmatprep.subr.mxu0 0.0
    %4270 = vmatpush1.msra.mxu0 0.0
    %4271 = vmatprep.subr.mxu0 0.0
    %4272 = vmatpush1.msra.mxu0 0.0
    %4273 = vmatprep.subr.mxu0 0.0
    %4274 = vmatpush1.msra.mxu0 0.0
    %4275 = vmatprep.subr.mxu0 0.0
    %4276 = vmatpush1.msra.mxu0 0.0
    %4277 = vmatprep.subr.mxu0 0.0
    %4278 = vmatpush1.msra.mxu0 0.0
    %4279 = vmatprep.subr.mxu0 0.0
    %4280 = vmatpush1.msra.mxu0 0.0
    %4281 = vmatprep.mubr.f32.mxu0 0.0
    %4282 = vmatmul.mubr.f32.gmra.mrb[0].mxu0 %v4197
    %v4283 = vpop.f32.mrb[0].mxu0
    %v4284 = vadd.f32 0.0, %v4283
    %v4285 = vpop.f32.mrb[0].mxu0
    %4286 = vmatprep.mubr.f32.mxu0 0.0
    %4287 = vmatmul.mubr.f32.gmra.mrb[0].mxu0 %v4198
    %v4288 = vpop.f32.mrb[0].mxu0
    %v4289 = vadd.f32 0.0, %v4288
    %v4290 = vpop.f32.mrb[0].mxu0
    %4291 = vmatprep.mubr.f32.mxu0 0.0
    %4292 = vmatmul.mubr.f32.gmra.mrb[0].mxu0 %v4199
    %v4293 = vpop.f32.mrb[0].mxu0
    %v4294 = vadd.f32 0.0, %v4293
    %v4295 = vpop.f32.mrb[0].mxu0
    %4296 = vmatprep.mubr.f32.mxu0 0.0
    %4297 = vmatmul.mubr.f32.gmra.mrb[0].mxu0 %v4200
    %v4298 = vpop.f32.mrb[0].mxu0
    %v4299 = vadd.f32 0.0, %v4298
    %v4300 = vpop.f32.mrb[0].mxu0
    %4301 = vdwg.mxu0
    %4302 = vst [vmem:[#allocation15] sm:$0xff] %v4284
    %4303 = vst [vmem:[#allocation15 + $0x8] sm:$0xff] %v4289
    %4304 = vst [vmem:[#allocation15 + $0x10] sm:$0xff] %v4294
    %4305 = vst [vmem:[#allocation15 + $0x18] sm:$0xff] %v4299
    // Predicated region
    $region70: #{tpu_custom_call.1} parent=1 // pred_check
      _
    $region71: #{tpu_custom_call.1} parent=1 // pred_check_branch
      %4307 = sbr.rel (0) target = $region73
    $region72: #{tpu_custom_call.1} parent=1 // pred_region
      %s4309 = ssub.s32 512, 512
      %4310 = vsyncadd [#allocation6], %s4309
      %s4311 = sshll.u32 [#allocation15], 4
      %s4312 = int_to_ptr.vmem [resolvable:$true] %s4311
      %4317 = dma.vmem_to_hbm [thread:$0]  %s4312, 512, %s11, [#allocation6], 128, 128, 8
    $region73: #{tpu_custom_call.1} parent=1 // pred_fallthru
      _
    // Predicated region
    $region74: #{tpu_custom_call.1} parent=1 // pred_check
      _
    $region75: #{tpu_custom_call.1} parent=1 // pred_check_branch
      %4319 = sbr.rel (0) target = $region77
    $region76: #{tpu_custom_call.1} parent=1 // pred_region
      %4320 = dma.done [#allocation6], 512
    $region77: #{tpu_custom_call.1} parent=1 // pred_fallthru
      _
    %4321 = vsyncpa [#allocation5], 1
    %4322 = vsyncpa [#allocation8], 1
    %4323 = vsyncpa [#allocation11], 1
    %4324 = vsyncpa [#allocation14], 1
    %4325 = vsyncpa [#allocation6], 1

</llo_original>
